<compile_context>
chip_gen: v7x
topology: tpu7x:2x2x1
jax: 0.10.0
libtpu: 0.0.40
codegen_flags: <defaults>
</compile_context>

<pallas_src>
import functools

import jax
import jax.numpy as jnp
from jax import lax
from jax.experimental import pallas as pl
from jax.experimental.pallas import tpu as pltpu

# ---- model hyper-parameters (small, consistent with the module) ----
S = 8            # sequence length
B = 2            # batch
E = 32           # d_model
H = 4            # nhead (even, as the fast-path check expects)
FF = 64          # dim_feedforward
NUM_LAYERS = 2
EPS = 1e-5       # LayerNorm eps (PyTorch default)


def _layer_norm(x, w, b):
    # x: (R, E), w/b: (1, E); PyTorch LayerNorm uses biased variance.
    mean = jnp.mean(x, axis=-1, keepdims=True)
    var = jnp.mean((x - mean) ** 2, axis=-1, keepdims=True)
    return (x - mean) * lax.rsqrt(var + EPS) * w + b


def encoder_kernel(x_ref,
                   wq_ref, wk_ref, wv_ref,      # (1,H,E,Dh) each, scale folded into wq
                   bq_ref, bk_ref, bv_ref,      # (1,H,1,Dh) each, scale folded into bq
                   ow_ref, ob_ref,              # (1,H,Dh,E), (1,1,E)
                   n1w_ref, n1b_ref,            # (1,1,E)
                   n2w_ref, n2b_ref,            # (1,1,E)
                   l1w_ref, l1b_ref,            # (1,E,FF), (1,1,FF)
                   l2w_ref, l2b_ref,            # (1,FF,E), (1,1,E)
                   o_ref, act_ref,
                   *, num_heads, seq_len, batch):
    layer = pl.program_id(0)

    # Load input into the resident activation slab only once (layer 0).
    @pl.when(layer == 0)
    def _():
        act_ref[...] = x_ref[...]

    x = act_ref[...]                                            # (B*S, E) f32

    # ---- multi-head self attention ----
    # Start from the out-projection bias; accumulate per-head contributions
    # (no lane-axis concatenation needed).
    attn = jnp.broadcast_to(ob_ref[0], x.shape)                 # (B*S, E)
    for h in range(num_heads):
        # Per-head projections over the full (B*S, E) slab; no weight transpose in-kernel.
        qh = jnp.dot(x, wq_ref[0, h], preferred_element_type=jnp.float32) + bq_ref[0, h]
        kh = jnp.dot(x, wk_ref[0, h], preferred_element_type=jnp.float32) + bk_ref[0, h]
        vh = jnp.dot(x, wv_ref[0, h], preferred_element_type=jnp.float32) + bv_ref[0, h]
        parts = []
        for b in range(batch):
            lo = b * seq_len                                    # sublane-aligned row slice
            qb = qh[lo:lo + seq_len]
            kb = kh[lo:lo + seq_len]
            vb = vh[lo:lo + seq_len]
            # scores: (S, S); 1/sqrt(Dh) already folded into wq/bq
            s = lax.dot_general(qb, kb, (((1,), (1,)), ((), ())),
                                preferred_element_type=jnp.float32)
            s = s - jnp.max(s, axis=-1, keepdims=True)
            p = jnp.exp(s)
            p = p * pl.reciprocal(jnp.sum(p, axis=-1, keepdims=True), approx=True)
            parts.append(jnp.dot(p, vb, preferred_element_type=jnp.float32))  # (S, Dh)
        hv = jnp.concatenate(parts, axis=0)                     # (B*S, Dh), sublane concat
        attn = attn + jnp.dot(hv, ow_ref[0, h], preferred_element_type=jnp.float32)

    # residual + norm1 (post-norm)
    y = _layer_norm(x + attn, n1w_ref[0], n1b_ref[0])

    # ---- feed forward ----
    h1 = jnp.dot(y, l1w_ref[0], preferred_element_type=jnp.float32) + l1b_ref[0]
    h1 = jnp.maximum(h1, 0.0)                                   # ReLU
    h2 = jnp.dot(h1, l2w_ref[0], preferred_element_type=jnp.float32) + l2b_ref[0]

    # residual + norm2
    out = _layer_norm(y + h2, n2w_ref[0], n2b_ref[0])

    act_ref[...] = out                                          # stays resident in VMEM

    @pl.when(layer == pl.num_programs(0) - 1)
    def _():
        o_ref[...] = out.astype(o_ref.dtype)                    # single HBM writeback


def _pack_layer(p, d_model=E, n_heads=H):
    """Convert PyTorch-layout params of one encoder layer to the kernel layout."""
    d_head = d_model // n_heads
    scale = 1.0 / float(d_head) ** 0.5
    in_w = p["in_w"]                                  # (3E, E)
    in_b = p["in_b"].reshape(3 * d_model)             # (3E,)

    def split_heads(w):                               # (E, E) rows -> (H, E, Dh)
        return w.reshape(n_heads, d_head, d_model).transpose(0, 2, 1)

    wq = split_heads(in_w[:d_model] * scale)
    wk = split_heads(in_w[d_model:2 * d_model])
    wv = split_heads(in_w[2 * d_model:])
    bq = (in_b[:d_model] * scale).reshape(n_heads, 1, d_head)
    bk = in_b[d_model:2 * d_model].reshape(n_heads, 1, d_head)
    bv = in_b[2 * d_model:].reshape(n_heads, 1, d_head)
    ow = p["out_w"].T.reshape(n_heads, d_head, d_model)   # (H, Dh, E)
    ob = p["out_b"].reshape(1, d_model)
    return (wq, wk, wv, bq, bk, bv, ow, ob,
            p["n1_w"].reshape(1, d_model), p["n1_b"].reshape(1, d_model),
            p["n2_w"].reshape(1, d_model), p["n2_b"].reshape(1, d_model),
            p["l1_w"].T,                    # (E, FF), pre-transposed
            p["l1_b"].reshape(1, -1),
            p["l2_w"].T,                    # (FF, E), pre-transposed
            p["l2_b"].reshape(1, d_model))


def transformer_encoder_pallas(src, layer_params):
    """src: (S, B, E) float32 like PyTorch seq-first default. Returns (S, B, E)."""
    s, b, e = src.shape
    num_layers = len(layer_params)

    # batch-major rows, batch folded into sublanes: (B*S, E)
    x = jnp.transpose(src, (1, 0, 2)).reshape(b * s, e)

    packed = [_pack_layer(p) for p in layer_params]
    stacked = [jnp.stack(ws, axis=0) for ws in zip(*packed)]   # each (L, ...)

    def _wspec(w):
        nd = w.ndim
        return pl.BlockSpec((1,) + w.shape[1:],
                            lambda l, _nd=nd: (l,) + (0,) * (_nd - 1))

    act_spec = pl.BlockSpec((b * s, e), lambda l: (0, 0))
    in_specs = [act_spec] + [_wspec(w) for w in stacked]

    out = pl.pallas_call(
        functools.partial(encoder_kernel, num_heads=H, seq_len=s, batch=b),
        out_shape=jax.ShapeDtypeStruct((b * s, e), jnp.float32),
        grid_spec=pltpu.PrefetchScalarGridSpec(
            num_scalar_prefetch=0,
            grid=(num_layers,),                # one grid axis: layers (sequential)
            in_specs=in_specs,
            out_specs=act_spec,
            scratch_shapes=[pltpu.VMEM((b * s, e), jnp.float32)],
        ),
        compiler_params=pltpu.CompilerParams(
            dimension_semantics=("arbitrary",)),
    )(x, *stacked)

    # Final TransformerEncoder `norm` is None in this instantiation -> nothing to apply.
    return jnp.transpose(out.reshape(b, s, e), (1, 0, 2))      # back to (S, B, E)


# ---- pure-JAX reference (PyTorch-layout math) for a correctness check ----
def _ref_layer(x, p):
    qkv = x @ p["in_w"].T + p["in_b"]
    q, k, v = qkv[..., :E], qkv[..., E:2 * E], qkv[..., 2 * E:]
    d_head = E // H
    outs = []
    for h in range(H):
        lo, hi = h * d_head, (h + 1) * d_head
        s = jnp.einsum("bqd,bkd->bqk", q[..., lo:hi], k[..., lo:hi]) / (d_head ** 0.5)
        pa = jax.nn.softmax(s, axis=-1)
        outs.append(jnp.einsum("bqk,bkd->bqd", pa, v[..., lo:hi]))
    attn = jnp.concatenate(outs, axis=-1) @ p["out_w"].T + p["out_b"]

    def ln(z, w, b):
        m = jnp.mean(z, -1, keepdims=True)
        var = jnp.mean((z - m) ** 2, -1, keepdims=True)
        return (z - m) / jnp.sqrt(var + EPS) * w + b

    y = ln(x + attn, p["n1_w"], p["n1_b"])
    h1 = jnp.maximum(y @ p["l1_w"].T + p["l1_b"], 0.0)
    return ln(y + h1 @ p["l2_w"].T + p["l2_b"], p["n2_w"], p["n2_b"])


def _ref_encoder(src, layer_params):
    x = jnp.transpose(src, (1, 0, 2))
    for p in layer_params:
        x = _ref_layer(x, p)
    return jnp.transpose(x, (1, 0, 2))


def _init_layer_params(key):
    ks = jax.random.split(key, 6)
    sc = 0.05
    return {
        "in_w": sc * jax.random.normal(ks[0], (3 * E, E), jnp.float32),
        "in_b": sc * jax.random.normal(ks[1], (1, 3 * E), jnp.float32),
        "out_w": sc * jax.random.normal(ks[2], (E, E), jnp.float32),
        "out_b": jnp.zeros((1, E), jnp.float32),
        "n1_w": jnp.ones((1, E), jnp.float32),
        "n1_b": jnp.zeros((1, E), jnp.float32),
        "n2_w": jnp.ones((1, E), jnp.float32),
        "n2_b": jnp.zeros((1, E), jnp.float32),
        "l1_w": sc * jax.random.normal(ks[3], (FF, E), jnp.float32),
        "l1_b": sc * jax.random.normal(ks[4], (1, FF), jnp.float32),
        "l2_w": sc * jax.random.normal(ks[5], (E, FF), jnp.float32),
        "l2_b": jnp.zeros((1, E), jnp.float32),
    }


if __name__ == "__main__":
    key = jax.random.PRNGKey(0)
    k_src, *k_layers = jax.random.split(key, NUM_LAYERS + 1)

    src = jax.random.normal(k_src, (S, B, E), jnp.float32)   # (seq, batch, d_model)
    layer_params = [_init_layer_params(k) for k in k_layers]

    out = transformer_encoder_pallas(src, layer_params)
    out = jax.block_until_ready(out)

    ref = _ref_encoder(src, layer_params)
    assert out.shape == (S, B, E)
    # slightly looser than before because the softmax denom uses pl.reciprocal(approx=True)
    assert jnp.allclose(out, ref, rtol=2e-3, atol=2e-3), "mismatch vs reference"

    print("KERNEL_OK")
</pallas_src>

<mosaic_0001>
module attributes {stable_mosaic.version = 11 : i64} {
  func.func @encoder_kernel(%arg0: i32, %arg1: memref<16x32xf32, #tpu.memory_space<vmem>>, %arg2: memref<1x4x32x8xf32, #tpu.memory_space<vmem>>, %arg3: memref<1x4x32x8xf32, #tpu.memory_space<vmem>>, %arg4: memref<1x4x32x8xf32, #tpu.memory_space<vmem>>, %arg5: memref<1x4x1x8xf32, #tpu.memory_space<vmem>>, %arg6: memref<1x4x1x8xf32, #tpu.memory_space<vmem>>, %arg7: memref<1x4x1x8xf32, #tpu.memory_space<vmem>>, %arg8: memref<1x4x8x32xf32, #tpu.memory_space<vmem>>, %arg9: memref<1x1x32xf32, #tpu.memory_space<vmem>>, %arg10: memref<1x1x32xf32, #tpu.memory_space<vmem>>, %arg11: memref<1x1x32xf32, #tpu.memory_space<vmem>>, %arg12: memref<1x1x32xf32, #tpu.memory_space<vmem>>, %arg13: memref<1x1x32xf32, #tpu.memory_space<vmem>>, %arg14: memref<1x32x64xf32, #tpu.memory_space<vmem>>, %arg15: memref<1x1x64xf32, #tpu.memory_space<vmem>>, %arg16: memref<1x64x32xf32, #tpu.memory_space<vmem>>, %arg17: memref<1x1x32xf32, #tpu.memory_space<vmem>>, %arg18: memref<16x32xf32, #tpu.memory_space<vmem>>, %arg19: memref<16x32xf32, #tpu.memory_space<vmem>>) attributes {dimension_semantics = [#tpu.dimension_semantics<arbitrary>], iteration_bounds = array<i64: 2>, scalar_prefetch = 0 : i64, scratch_operands = 1 : i64, tpu.core_type = #tpu.core_type<tc>, window_params = [{pipeline_mode = #tpu.pipeline_mode<synchronous>, transform_indices = @transform_0, window_bounds = array<i64: 16, 32>}, {transform_indices = @transform_1, window_bounds = array<i64: 1, 4, 32, 8>}, {transform_indices = @transform_2, window_bounds = array<i64: 1, 4, 32, 8>}, {transform_indices = @transform_3, window_bounds = array<i64: 1, 4, 32, 8>}, {transform_indices = @transform_4, window_bounds = array<i64: 1, 4, 1, 8>}, {transform_indices = @transform_5, window_bounds = array<i64: 1, 4, 1, 8>}, {transform_indices = @transform_6, window_bounds = array<i64: 1, 4, 1, 8>}, {transform_indices = @transform_7, window_bounds = array<i64: 1, 4, 8, 32>}, {transform_indices = @transform_8, window_bounds = array<i64: 1, 1, 32>}, {transform_indices = @transform_9, window_bounds = array<i64: 1, 1, 32>}, {transform_indices = @transform_10, window_bounds = array<i64: 1, 1, 32>}, {transform_indices = @transform_11, window_bounds = array<i64: 1, 1, 32>}, {transform_indices = @transform_12, window_bounds = array<i64: 1, 1, 32>}, {transform_indices = @transform_13, window_bounds = array<i64: 1, 32, 64>}, {transform_indices = @transform_14, window_bounds = array<i64: 1, 1, 64>}, {transform_indices = @transform_15, window_bounds = array<i64: 1, 64, 32>}, {transform_indices = @transform_16, window_bounds = array<i64: 1, 1, 32>}, {pipeline_mode = #tpu.pipeline_mode<synchronous>, transform_indices = @transform_17, window_bounds = array<i64: 16, 32>}]} {
    %c0_i32 = arith.constant 0 : i32
    %0 = arith.cmpi eq, %arg0, %c0_i32 : i32
    %1 = arith.extui %0 : i1 to i32
    %c0_i32_0 = arith.constant 0 : i32
    %2 = arith.cmpi ne, %1, %c0_i32_0 : i32
    scf.if %2 {
      %c0_201 = arith.constant 0 : index
      %c0_202 = arith.constant 0 : index
      %306 = vector.load %arg1[%c0_201, %c0_202] : memref<16x32xf32, #tpu.memory_space<vmem>>, vector<16x32xf32>
      %c0_203 = arith.constant 0 : index
      %c0_204 = arith.constant 0 : index
      %307 = vector.load %arg19[%c0_203, %c0_204] : memref<16x32xf32, #tpu.memory_space<vmem>>, vector<16x32xf32>
      tpu.vector_store %arg19[%c0_203, %c0_204], %306 {strides = array<i32>} : memref<16x32xf32, #tpu.memory_space<vmem>>, vector<16x32xf32>,
    } else {
    }
    %c0 = arith.constant 0 : index
    %c0_1 = arith.constant 0 : index
    %3 = vector.load %arg19[%c0, %c0_1] : memref<16x32xf32, #tpu.memory_space<vmem>>, vector<16x32xf32>
    %c0_2 = arith.constant 0 : index
    %c0_3 = arith.constant 0 : index
    %c0_4 = arith.constant 0 : index
    %4 = vector.load %arg9[%c0_2, %c0_3, %c0_4] : memref<1x1x32xf32, #tpu.memory_space<vmem>>, vector<1x1x32xf32>
    %5 = vector.shape_cast %4 : vector<1x1x32xf32> to vector<1x32xf32>
    %6 = vector.shape_cast %5 : vector<1x32xf32> to vector<1x32xf32>
    %7 = vector.broadcast %6 : vector<1x32xf32> to vector<16x32xf32>
    %c0_5 = arith.constant 0 : index
    %c0_6 = arith.constant 0 : index
    %c0_7 = arith.constant 0 : index
    %c0_8 = arith.constant 0 : index
    %8 = vector.load %arg2[%c0_5, %c0_6, %c0_7, %c0_8] : memref<1x4x32x8xf32, #tpu.memory_space<vmem>>, vector<1x1x32x8xf32>
    %9 = vector.shape_cast %8 : vector<1x1x32x8xf32> to vector<32x8xf32>
    %cst = arith.constant dense<0.000000e+00> : vector<16x8xf32>
    %10 = tpu.matmul %3, %9, %cst {dimension_numbers = #tpu.dot_dimension_numbers<[1], [0], [0], [1], [0, 0, 1, 1], [], []>} : vector<16x32xf32>, vector<32x8xf32>, vector<16x8xf32> -> vector<16x8xf32>
    %c0_9 = arith.constant 0 : index
    %c0_10 = arith.constant 0 : index
    %c0_11 = arith.constant 0 : index
    %c0_12 = arith.constant 0 : index
    %11 = vector.load %arg5[%c0_9, %c0_10, %c0_11, %c0_12] : memref<1x4x1x8xf32, #tpu.memory_space<vmem>>, vector<1x1x1x8xf32>
    %12 = vector.shape_cast %11 : vector<1x1x1x8xf32> to vector<1x8xf32>
    %13 = vector.broadcast %12 : vector<1x8xf32> to vector<16x8xf32>
    %14 = arith.addf %10, %13 : vector<16x8xf32>
    %c0_13 = arith.constant 0 : index
    %c0_14 = arith.constant 0 : index
    %c0_15 = arith.constant 0 : index
    %c0_16 = arith.constant 0 : index
    %15 = vector.load %arg3[%c0_13, %c0_14, %c0_15, %c0_16] : memref<1x4x32x8xf32, #tpu.memory_space<vmem>>, vector<1x1x32x8xf32>
    %16 = vector.shape_cast %15 : vector<1x1x32x8xf32> to vector<32x8xf32>
    %cst_17 = arith.constant dense<0.000000e+00> : vector<16x8xf32>
    %17 = tpu.matmul %3, %16, %cst_17 {dimension_numbers = #tpu.dot_dimension_numbers<[1], [0], [0], [1], [0, 0, 1, 1], [], []>} : vector<16x32xf32>, vector<32x8xf32>, vector<16x8xf32> -> vector<16x8xf32>
    %c0_18 = arith.constant 0 : index
    %c0_19 = arith.constant 0 : index
    %c0_20 = arith.constant 0 : index
    %c0_21 = arith.constant 0 : index
    %18 = vector.load %arg6[%c0_18, %c0_19, %c0_20, %c0_21] : memref<1x4x1x8xf32, #tpu.memory_space<vmem>>, vector<1x1x1x8xf32>
    %19 = vector.shape_cast %18 : vector<1x1x1x8xf32> to vector<1x8xf32>
    %20 = vector.broadcast %19 : vector<1x8xf32> to vector<16x8xf32>
    %21 = arith.addf %17, %20 : vector<16x8xf32>
    %c0_22 = arith.constant 0 : index
    %c0_23 = arith.constant 0 : index
    %c0_24 = arith.constant 0 : index
    %c0_25 = arith.constant 0 : index
    %22 = vector.load %arg4[%c0_22, %c0_23, %c0_24, %c0_25] : memref<1x4x32x8xf32, #tpu.memory_space<vmem>>, vector<1x1x32x8xf32>
    %23 = vector.shape_cast %22 : vector<1x1x32x8xf32> to vector<32x8xf32>
    %cst_26 = arith.constant dense<0.000000e+00> : vector<16x8xf32>
    %24 = tpu.matmul %3, %23, %cst_26 {dimension_numbers = #tpu.dot_dimension_numbers<[1], [0], [0], [1], [0, 0, 1, 1], [], []>} : vector<16x32xf32>, vector<32x8xf32>, vector<16x8xf32> -> vector<16x8xf32>
    %c0_27 = arith.constant 0 : index
    %c0_28 = arith.constant 0 : index
    %c0_29 = arith.constant 0 : index
    %c0_30 = arith.constant 0 : index
    %25 = vector.load %arg7[%c0_27, %c0_28, %c0_29, %c0_30] : memref<1x4x1x8xf32, #tpu.memory_space<vmem>>, vector<1x1x1x8xf32>
    %26 = vector.shape_cast %25 : vector<1x1x1x8xf32> to vector<1x8xf32>
    %27 = vector.broadcast %26 : vector<1x8xf32> to vector<16x8xf32>
    %28 = arith.addf %24, %27 : vector<16x8xf32>
    %29 = vector.extract_strided_slice %14 {offsets = [0, 0], sizes = [8, 8], strides = [1, 1]} : vector<16x8xf32> to vector<8x8xf32>
    %30 = vector.extract_strided_slice %21 {offsets = [0, 0], sizes = [8, 8], strides = [1, 1]} : vector<16x8xf32> to vector<8x8xf32>
    %31 = vector.extract_strided_slice %28 {offsets = [0, 0], sizes = [8, 8], strides = [1, 1]} : vector<16x8xf32> to vector<8x8xf32>
    %cst_31 = arith.constant dense<0.000000e+00> : vector<8x8xf32>
    %32 = tpu.matmul %29, %30, %cst_31 {dimension_numbers = #tpu.dot_dimension_numbers<[1], [1], [0], [0], [0, 0, 1, 0], [], []>} : vector<8x8xf32>, vector<8x8xf32>, vector<8x8xf32> -> vector<8x8xf32>
    %cst_32 = arith.constant dense<0xFF800000> : vector<8xf32>
    %33 = vector.multi_reduction <maximumf>, %32, %cst_32 [1] : vector<8x8xf32> to vector<8xf32>
    %34 = vector.shape_cast %33 : vector<8xf32> to vector<8x1xf32>
    %35 = vector.broadcast %34 : vector<8x1xf32> to vector<8x8xf32>
    %36 = arith.subf %32, %35 : vector<8x8xf32>
    %37 = math.exp %36 : vector<8x8xf32>
    %cst_33 = arith.constant dense<0.000000e+00> : vector<8xf32>
    %38 = vector.multi_reduction <add>, %37, %cst_33 [1] : vector<8x8xf32> to vector<8xf32>
    %39 = vector.shape_cast %38 : vector<8xf32> to vector<8x1xf32>
    %40 = tpu.reciprocal %39 {approx = true} : vector<8x1xf32> -> vector<8x1xf32>
    %41 = vector.broadcast %40 : vector<8x1xf32> to vector<8x8xf32>
    %42 = arith.mulf %37, %41 : vector<8x8xf32>
    %cst_34 = arith.constant dense<0.000000e+00> : vector<8x8xf32>
    %43 = tpu.matmul %42, %31, %cst_34 {dimension_numbers = #tpu.dot_dimension_numbers<[1], [0], [0], [1], [0, 0, 1, 1], [], []>} : vector<8x8xf32>, vector<8x8xf32>, vector<8x8xf32> -> vector<8x8xf32>
    %44 = vector.extract_strided_slice %14 {offsets = [8, 0], sizes = [8, 8], strides = [1, 1]} : vector<16x8xf32> to vector<8x8xf32>
    %45 = vector.extract_strided_slice %21 {offsets = [8, 0], sizes = [8, 8], strides = [1, 1]} : vector<16x8xf32> to vector<8x8xf32>
    %46 = vector.extract_strided_slice %28 {offsets = [8, 0], sizes = [8, 8], strides = [1, 1]} : vector<16x8xf32> to vector<8x8xf32>
    %cst_35 = arith.constant dense<0.000000e+00> : vector<8x8xf32>
    %47 = tpu.matmul %44, %45, %cst_35 {dimension_numbers = #tpu.dot_dimension_numbers<[1], [1], [0], [0], [0, 0, 1, 0], [], []>} : vector<8x8xf32>, vector<8x8xf32>, vector<8x8xf32> -> vector<8x8xf32>
    %cst_36 = arith.constant dense<0xFF800000> : vector<8xf32>
    %48 = vector.multi_reduction <maximumf>, %47, %cst_36 [1] : vector<8x8xf32> to vector<8xf32>
    %49 = vector.shape_cast %48 : vector<8xf32> to vector<8x1xf32>
    %50 = vector.broadcast %49 : vector<8x1xf32> to vector<8x8xf32>
    %51 = arith.subf %47, %50 : vector<8x8xf32>
    %52 = math.exp %51 : vector<8x8xf32>
    %cst_37 = arith.constant dense<0.000000e+00> : vector<8xf32>
    %53 = vector.multi_reduction <add>, %52, %cst_37 [1] : vector<8x8xf32> to vector<8xf32>
    %54 = vector.shape_cast %53 : vector<8xf32> to vector<8x1xf32>
    %55 = tpu.reciprocal %54 {approx = true} : vector<8x1xf32> -> vector<8x1xf32>
    %56 = vector.broadcast %55 : vector<8x1xf32> to vector<8x8xf32>
    %57 = arith.mulf %52, %56 : vector<8x8xf32>
    %cst_38 = arith.constant dense<0.000000e+00> : vector<8x8xf32>
    %58 = tpu.matmul %57, %46, %cst_38 {dimension_numbers = #tpu.dot_dimension_numbers<[1], [0], [0], [1], [0, 0, 1, 1], [], []>} : vector<8x8xf32>, vector<8x8xf32>, vector<8x8xf32> -> vector<8x8xf32>
    %59 = tpu.concatenate %43, %58 in 0 : vector<8x8xf32>, vector<8x8xf32> -> vector<16x8xf32>
    %c0_39 = arith.constant 0 : index
    %c0_40 = arith.constant 0 : index
    %c0_41 = arith.constant 0 : index
    %c0_42 = arith.constant 0 : index
    %60 = vector.load %arg8[%c0_39, %c0_40, %c0_41, %c0_42] : memref<1x4x8x32xf32, #tpu.memory_space<vmem>>, vector<1x1x8x32xf32>
    %61 = vector.shape_cast %60 : vector<1x1x8x32xf32> to vector<8x32xf32>
    %cst_43 = arith.constant dense<0.000000e+00> : vector<16x32xf32>
    %62 = tpu.matmul %59, %61, %cst_43 {dimension_numbers = #tpu.dot_dimension_numbers<[1], [0], [0], [1], [0, 0, 1, 1], [], []>} : vector<16x8xf32>, vector<8x32xf32>, vector<16x32xf32> -> vector<16x32xf32>
    %63 = arith.addf %7, %62 : vector<16x32xf32>
    %c0_44 = arith.constant 0 : index
    %c1 = arith.constant 1 : index
    %c0_45 = arith.constant 0 : index
    %c0_46 = arith.constant 0 : index
    %64 = vector.load %arg2[%c0_44, %c1, %c0_45, %c0_46] : memref<1x4x32x8xf32, #tpu.memory_space<vmem>>, vector<1x1x32x8xf32>
    %65 = vector.shape_cast %64 : vector<1x1x32x8xf32> to vector<32x8xf32>
    %cst_47 = arith.constant dense<0.000000e+00> : vector<16x8xf32>
    %66 = tpu.matmul %3, %65, %cst_47 {dimension_numbers = #tpu.dot_dimension_numbers<[1], [0], [0], [1], [0, 0, 1, 1], [], []>} : vector<16x32xf32>, vector<32x8xf32>, vector<16x8xf32> -> vector<16x8xf32>
    %c0_48 = arith.constant 0 : index
    %c1_49 = arith.constant 1 : index
    %c0_50 = arith.constant 0 : index
    %c0_51 = arith.constant 0 : index
    %67 = vector.load %arg5[%c0_48, %c1_49, %c0_50, %c0_51] : memref<1x4x1x8xf32, #tpu.memory_space<vmem>>, vector<1x1x1x8xf32>
    %68 = vector.shape_cast %67 : vector<1x1x1x8xf32> to vector<1x8xf32>
    %69 = vector.broadcast %68 : vector<1x8xf32> to vector<16x8xf32>
    %70 = arith.addf %66, %69 : vector<16x8xf32>
    %c0_52 = arith.constant 0 : index
    %c1_53 = arith.constant 1 : index
    %c0_54 = arith.constant 0 : index
    %c0_55 = arith.constant 0 : index
    %71 = vector.load %arg3[%c0_52, %c1_53, %c0_54, %c0_55] : memref<1x4x32x8xf32, #tpu.memory_space<vmem>>, vector<1x1x32x8xf32>
    %72 = vector.shape_cast %71 : vector<1x1x32x8xf32> to vector<32x8xf32>
    %cst_56 = arith.constant dense<0.000000e+00> : vector<16x8xf32>
    %73 = tpu.matmul %3, %72, %cst_56 {dimension_numbers = #tpu.dot_dimension_numbers<[1], [0], [0], [1], [0, 0, 1, 1], [], []>} : vector<16x32xf32>, vector<32x8xf32>, vector<16x8xf32> -> vector<16x8xf32>
    %c0_57 = arith.constant 0 : index
    %c1_58 = arith.constant 1 : index
    %c0_59 = arith.constant 0 : index
    %c0_60 = arith.constant 0 : index
    %74 = vector.load %arg6[%c0_57, %c1_58, %c0_59, %c0_60] : memref<1x4x1x8xf32, #tpu.memory_space<vmem>>, vector<1x1x1x8xf32>
    %75 = vector.shape_cast %74 : vector<1x1x1x8xf32> to vector<1x8xf32>
    %76 = vector.broadcast %75 : vector<1x8xf32> to vector<16x8xf32>
    %77 = arith.addf %73, %76 : vector<16x8xf32>
    %c0_61 = arith.constant 0 : index
    %c1_62 = arith.constant 1 : index
    %c0_63 = arith.constant 0 : index
    %c0_64 = arith.constant 0 : index
    %78 = vector.load %arg4[%c0_61, %c1_62, %c0_63, %c0_64] : memref<1x4x32x8xf32, #tpu.memory_space<vmem>>, vector<1x1x32x8xf32>
    %79 = vector.shape_cast %78 : vector<1x1x32x8xf32> to vector<32x8xf32>
    %cst_65 = arith.constant dense<0.000000e+00> : vector<16x8xf32>
    %80 = tpu.matmul %3, %79, %cst_65 {dimension_numbers = #tpu.dot_dimension_numbers<[1], [0], [0], [1], [0, 0, 1, 1], [], []>} : vector<16x32xf32>, vector<32x8xf32>, vector<16x8xf32> -> vector<16x8xf32>
    %c0_66 = arith.constant 0 : index
    %c1_67 = arith.constant 1 : index
    %c0_68 = arith.constant 0 : index
    %c0_69 = arith.constant 0 : index
    %81 = vector.load %arg7[%c0_66, %c1_67, %c0_68, %c0_69] : memref<1x4x1x8xf32, #tpu.memory_space<vmem>>, vector<1x1x1x8xf32>
    %82 = vector.shape_cast %81 : vector<1x1x1x8xf32> to vector<1x8xf32>
    %83 = vector.broadcast %82 : vector<1x8xf32> to vector<16x8xf32>
    %84 = arith.addf %80, %83 : vector<16x8xf32>
    %85 = vector.extract_strided_slice %70 {offsets = [0, 0], sizes = [8, 8], strides = [1, 1]} : vector<16x8xf32> to vector<8x8xf32>
    %86 = vector.extract_strided_slice %77 {offsets = [0, 0], sizes = [8, 8], strides = [1, 1]} : vector<16x8xf32> to vector<8x8xf32>
    %87 = vector.extract_strided_slice %84 {offsets = [0, 0], sizes = [8, 8], strides = [1, 1]} : vector<16x8xf32> to vector<8x8xf32>
    %cst_70 = arith.constant dense<0.000000e+00> : vector<8x8xf32>
    %88 = tpu.matmul %85, %86, %cst_70 {dimension_numbers = #tpu.dot_dimension_numbers<[1], [1], [0], [0], [0, 0, 1, 0], [], []>} : vector<8x8xf32>, vector<8x8xf32>, vector<8x8xf32> -> vector<8x8xf32>
    %cst_71 = arith.constant dense<0xFF800000> : vector<8xf32>
    %89 = vector.multi_reduction <maximumf>, %88, %cst_71 [1] : vector<8x8xf32> to vector<8xf32>
    %90 = vector.shape_cast %89 : vector<8xf32> to vector<8x1xf32>
    %91 = vector.broadcast %90 : vector<8x1xf32> to vector<8x8xf32>
    %92 = arith.subf %88, %91 : vector<8x8xf32>
    %93 = math.exp %92 : vector<8x8xf32>
    %cst_72 = arith.constant dense<0.000000e+00> : vector<8xf32>
    %94 = vector.multi_reduction <add>, %93, %cst_72 [1] : vector<8x8xf32> to vector<8xf32>
    %95 = vector.shape_cast %94 : vector<8xf32> to vector<8x1xf32>
    %96 = tpu.reciprocal %95 {approx = true} : vector<8x1xf32> -> vector<8x1xf32>
    %97 = vector.broadcast %96 : vector<8x1xf32> to vector<8x8xf32>
    %98 = arith.mulf %93, %97 : vector<8x8xf32>
    %cst_73 = arith.constant dense<0.000000e+00> : vector<8x8xf32>
    %99 = tpu.matmul %98, %87, %cst_73 {dimension_numbers = #tpu.dot_dimension_numbers<[1], [0], [0], [1], [0, 0, 1, 1], [], []>} : vector<8x8xf32>, vector<8x8xf32>, vector<8x8xf32> -> vector<8x8xf32>
    %100 = vector.extract_strided_slice %70 {offsets = [8, 0], sizes = [8, 8], strides = [1, 1]} : vector<16x8xf32> to vector<8x8xf32>
    %101 = vector.extract_strided_slice %77 {offsets = [8, 0], sizes = [8, 8], strides = [1, 1]} : vector<16x8xf32> to vector<8x8xf32>
    %102 = vector.extract_strided_slice %84 {offsets = [8, 0], sizes = [8, 8], strides = [1, 1]} : vector<16x8xf32> to vector<8x8xf32>
    %cst_74 = arith.constant dense<0.000000e+00> : vector<8x8xf32>
    %103 = tpu.matmul %100, %101, %cst_74 {dimension_numbers = #tpu.dot_dimension_numbers<[1], [1], [0], [0], [0, 0, 1, 0], [], []>} : vector<8x8xf32>, vector<8x8xf32>, vector<8x8xf32> -> vector<8x8xf32>
    %cst_75 = arith.constant dense<0xFF800000> : vector<8xf32>
    %104 = vector.multi_reduction <maximumf>, %103, %cst_75 [1] : vector<8x8xf32> to vector<8xf32>
    %105 = vector.shape_cast %104 : vector<8xf32> to vector<8x1xf32>
    %106 = vector.broadcast %105 : vector<8x1xf32> to vector<8x8xf32>
    %107 = arith.subf %103, %106 : vector<8x8xf32>
    %108 = math.exp %107 : vector<8x8xf32>
    %cst_76 = arith.constant dense<0.000000e+00> : vector<8xf32>
    %109 = vector.multi_reduction <add>, %108, %cst_76 [1] : vector<8x8xf32> to vector<8xf32>
    %110 = vector.shape_cast %109 : vector<8xf32> to vector<8x1xf32>
    %111 = tpu.reciprocal %110 {approx = true} : vector<8x1xf32> -> vector<8x1xf32>
    %112 = vector.broadcast %111 : vector<8x1xf32> to vector<8x8xf32>
    %113 = arith.mulf %108, %112 : vector<8x8xf32>
    %cst_77 = arith.constant dense<0.000000e+00> : vector<8x8xf32>
    %114 = tpu.matmul %113, %102, %cst_77 {dimension_numbers = #tpu.dot_dimension_numbers<[1], [0], [0], [1], [0, 0, 1, 1], [], []>} : vector<8x8xf32>, vector<8x8xf32>, vector<8x8xf32> -> vector<8x8xf32>
    %115 = tpu.concatenate %99, %114 in 0 : vector<8x8xf32>, vector<8x8xf32> -> vector<16x8xf32>
    %c0_78 = arith.constant 0 : index
    %c1_79 = arith.constant 1 : index
    %c0_80 = arith.constant 0 : index
    %c0_81 = arith.constant 0 : index
    %116 = vector.load %arg8[%c0_78, %c1_79, %c0_80, %c0_81] : memref<1x4x8x32xf32, #tpu.memory_space<vmem>>, vector<1x1x8x32xf32>
    %117 = vector.shape_cast %116 : vector<1x1x8x32xf32> to vector<8x32xf32>
    %cst_82 = arith.constant dense<0.000000e+00> : vector<16x32xf32>
    %118 = tpu.matmul %115, %117, %cst_82 {dimension_numbers = #tpu.dot_dimension_numbers<[1], [0], [0], [1], [0, 0, 1, 1], [], []>} : vector<16x8xf32>, vector<8x32xf32>, vector<16x32xf32> -> vector<16x32xf32>
    %119 = arith.addf %63, %118 : vector<16x32xf32>
    %c0_83 = arith.constant 0 : index
    %c2 = arith.constant 2 : index
    %c0_84 = arith.constant 0 : index
    %c0_85 = arith.constant 0 : index
    %120 = vector.load %arg2[%c0_83, %c2, %c0_84, %c0_85] : memref<1x4x32x8xf32, #tpu.memory_space<vmem>>, vector<1x1x32x8xf32>
    %121 = vector.shape_cast %120 : vector<1x1x32x8xf32> to vector<32x8xf32>
    %cst_86 = arith.constant dense<0.000000e+00> : vector<16x8xf32>
    %122 = tpu.matmul %3, %121, %cst_86 {dimension_numbers = #tpu.dot_dimension_numbers<[1], [0], [0], [1], [0, 0, 1, 1], [], []>} : vector<16x32xf32>, vector<32x8xf32>, vector<16x8xf32> -> vector<16x8xf32>
    %c0_87 = arith.constant 0 : index
    %c2_88 = arith.constant 2 : index
    %c0_89 = arith.constant 0 : index
    %c0_90 = arith.constant 0 : index
    %123 = vector.load %arg5[%c0_87, %c2_88, %c0_89, %c0_90] : memref<1x4x1x8xf32, #tpu.memory_space<vmem>>, vector<1x1x1x8xf32>
    %124 = vector.shape_cast %123 : vector<1x1x1x8xf32> to vector<1x8xf32>
    %125 = vector.broadcast %124 : vector<1x8xf32> to vector<16x8xf32>
    %126 = arith.addf %122, %125 : vector<16x8xf32>
    %c0_91 = arith.constant 0 : index
    %c2_92 = arith.constant 2 : index
    %c0_93 = arith.constant 0 : index
    %c0_94 = arith.constant 0 : index
    %127 = vector.load %arg3[%c0_91, %c2_92, %c0_93, %c0_94] : memref<1x4x32x8xf32, #tpu.memory_space<vmem>>, vector<1x1x32x8xf32>
    %128 = vector.shape_cast %127 : vector<1x1x32x8xf32> to vector<32x8xf32>
    %cst_95 = arith.constant dense<0.000000e+00> : vector<16x8xf32>
    %129 = tpu.matmul %3, %128, %cst_95 {dimension_numbers = #tpu.dot_dimension_numbers<[1], [0], [0], [1], [0, 0, 1, 1], [], []>} : vector<16x32xf32>, vector<32x8xf32>, vector<16x8xf32> -> vector<16x8xf32>
    %c0_96 = arith.constant 0 : index
    %c2_97 = arith.constant 2 : index
    %c0_98 = arith.constant 0 : index
    %c0_99 = arith.constant 0 : index
    %130 = vector.load %arg6[%c0_96, %c2_97, %c0_98, %c0_99] : memref<1x4x1x8xf32, #tpu.memory_space<vmem>>, vector<1x1x1x8xf32>
    %131 = vector.shape_cast %130 : vector<1x1x1x8xf32> to vector<1x8xf32>
    %132 = vector.broadcast %131 : vector<1x8xf32> to vector<16x8xf32>
    %133 = arith.addf %129, %132 : vector<16x8xf32>
    %c0_100 = arith.constant 0 : index
    %c2_101 = arith.constant 2 : index
    %c0_102 = arith.constant 0 : index
    %c0_103 = arith.constant 0 : index
    %134 = vector.load %arg4[%c0_100, %c2_101, %c0_102, %c0_103] : memref<1x4x32x8xf32, #tpu.memory_space<vmem>>, vector<1x1x32x8xf32>
    %135 = vector.shape_cast %134 : vector<1x1x32x8xf32> to vector<32x8xf32>
    %cst_104 = arith.constant dense<0.000000e+00> : vector<16x8xf32>
    %136 = tpu.matmul %3, %135, %cst_104 {dimension_numbers = #tpu.dot_dimension_numbers<[1], [0], [0], [1], [0, 0, 1, 1], [], []>} : vector<16x32xf32>, vector<32x8xf32>, vector<16x8xf32> -> vector<16x8xf32>
    %c0_105 = arith.constant 0 : index
    %c2_106 = arith.constant 2 : index
    %c0_107 = arith.constant 0 : index
    %c0_108 = arith.constant 0 : index
    %137 = vector.load %arg7[%c0_105, %c2_106, %c0_107, %c0_108] : memref<1x4x1x8xf32, #tpu.memory_space<vmem>>, vector<1x1x1x8xf32>
    %138 = vector.shape_cast %137 : vector<1x1x1x8xf32> to vector<1x8xf32>
    %139 = vector.broadcast %138 : vector<1x8xf32> to vector<16x8xf32>
    %140 = arith.addf %136, %139 : vector<16x8xf32>
    %141 = vector.extract_strided_slice %126 {offsets = [0, 0], sizes = [8, 8], strides = [1, 1]} : vector<16x8xf32> to vector<8x8xf32>
    %142 = vector.extract_strided_slice %133 {offsets = [0, 0], sizes = [8, 8], strides = [1, 1]} : vector<16x8xf32> to vector<8x8xf32>
    %143 = vector.extract_strided_slice %140 {offsets = [0, 0], sizes = [8, 8], strides = [1, 1]} : vector<16x8xf32> to vector<8x8xf32>
    %cst_109 = arith.constant dense<0.000000e+00> : vector<8x8xf32>
    %144 = tpu.matmul %141, %142, %cst_109 {dimension_numbers = #tpu.dot_dimension_numbers<[1], [1], [0], [0], [0, 0, 1, 0], [], []>} : vector<8x8xf32>, vector<8x8xf32>, vector<8x8xf32> -> vector<8x8xf32>
    %cst_110 = arith.constant dense<0xFF800000> : vector<8xf32>
    %145 = vector.multi_reduction <maximumf>, %144, %cst_110 [1] : vector<8x8xf32> to vector<8xf32>
    %146 = vector.shape_cast %145 : vector<8xf32> to vector<8x1xf32>
    %147 = vector.broadcast %146 : vector<8x1xf32> to vector<8x8xf32>
    %148 = arith.subf %144, %147 : vector<8x8xf32>
    %149 = math.exp %148 : vector<8x8xf32>
    %cst_111 = arith.constant dense<0.000000e+00> : vector<8xf32>
    %150 = vector.multi_reduction <add>, %149, %cst_111 [1] : vector<8x8xf32> to vector<8xf32>
    %151 = vector.shape_cast %150 : vector<8xf32> to vector<8x1xf32>
    %152 = tpu.reciprocal %151 {approx = true} : vector<8x1xf32> -> vector<8x1xf32>
    %153 = vector.broadcast %152 : vector<8x1xf32> to vector<8x8xf32>
    %154 = arith.mulf %149, %153 : vector<8x8xf32>
    %cst_112 = arith.constant dense<0.000000e+00> : vector<8x8xf32>
    %155 = tpu.matmul %154, %143, %cst_112 {dimension_numbers = #tpu.dot_dimension_numbers<[1], [0], [0], [1], [0, 0, 1, 1], [], []>} : vector<8x8xf32>, vector<8x8xf32>, vector<8x8xf32> -> vector<8x8xf32>
    %156 = vector.extract_strided_slice %126 {offsets = [8, 0], sizes = [8, 8], strides = [1, 1]} : vector<16x8xf32> to vector<8x8xf32>
    %157 = vector.extract_strided_slice %133 {offsets = [8, 0], sizes = [8, 8], strides = [1, 1]} : vector<16x8xf32> to vector<8x8xf32>
    %158 = vector.extract_strided_slice %140 {offsets = [8, 0], sizes = [8, 8], strides = [1, 1]} : vector<16x8xf32> to vector<8x8xf32>
    %cst_113 = arith.constant dense<0.000000e+00> : vector<8x8xf32>
    %159 = tpu.matmul %156, %157, %cst_113 {dimension_numbers = #tpu.dot_dimension_numbers<[1], [1], [0], [0], [0, 0, 1, 0], [], []>} : vector<8x8xf32>, vector<8x8xf32>, vector<8x8xf32> -> vector<8x8xf32>
    %cst_114 = arith.constant dense<0xFF800000> : vector<8xf32>
    %160 = vector.multi_reduction <maximumf>, %159, %cst_114 [1] : vector<8x8xf32> to vector<8xf32>
    %161 = vector.shape_cast %160 : vector<8xf32> to vector<8x1xf32>
    %162 = vector.broadcast %161 : vector<8x1xf32> to vector<8x8xf32>
    %163 = arith.subf %159, %162 : vector<8x8xf32>
    %164 = math.exp %163 : vector<8x8xf32>
    %cst_115 = arith.constant dense<0.000000e+00> : vector<8xf32>
    %165 = vector.multi_reduction <add>, %164, %cst_115 [1] : vector<8x8xf32> to vector<8xf32>
    %166 = vector.shape_cast %165 : vector<8xf32> to vector<8x1xf32>
    %167 = tpu.reciprocal %166 {approx = true} : vector<8x1xf32> -> vector<8x1xf32>
    %168 = vector.broadcast %167 : vector<8x1xf32> to vector<8x8xf32>
    %169 = arith.mulf %164, %168 : vector<8x8xf32>
    %cst_116 = arith.constant dense<0.000000e+00> : vector<8x8xf32>
    %170 = tpu.matmul %169, %158, %cst_116 {dimension_numbers = #tpu.dot_dimension_numbers<[1], [0], [0], [1], [0, 0, 1, 1], [], []>} : vector<8x8xf32>, vector<8x8xf32>, vector<8x8xf32> -> vector<8x8xf32>
    %171 = tpu.concatenate %155, %170 in 0 : vector<8x8xf32>, vector<8x8xf32> -> vector<16x8xf32>
    %c0_117 = arith.constant 0 : index
    %c2_118 = arith.constant 2 : index
    %c0_119 = arith.constant 0 : index
    %c0_120 = arith.constant 0 : index
    %172 = vector.load %arg8[%c0_117, %c2_118, %c0_119, %c0_120] : memref<1x4x8x32xf32, #tpu.memory_space<vmem>>, vector<1x1x8x32xf32>
    %173 = vector.shape_cast %172 : vector<1x1x8x32xf32> to vector<8x32xf32>
    %cst_121 = arith.constant dense<0.000000e+00> : vector<16x32xf32>
    %174 = tpu.matmul %171, %173, %cst_121 {dimension_numbers = #tpu.dot_dimension_numbers<[1], [0], [0], [1], [0, 0, 1, 1], [], []>} : vector<16x8xf32>, vector<8x32xf32>, vector<16x32xf32> -> vector<16x32xf32>
    %175 = arith.addf %119, %174 : vector<16x32xf32>
    %c0_122 = arith.constant 0 : index
    %c3 = arith.constant 3 : index
    %c0_123 = arith.constant 0 : index
    %c0_124 = arith.constant 0 : index
    %176 = vector.load %arg2[%c0_122, %c3, %c0_123, %c0_124] : memref<1x4x32x8xf32, #tpu.memory_space<vmem>>, vector<1x1x32x8xf32>
    %177 = vector.shape_cast %176 : vector<1x1x32x8xf32> to vector<32x8xf32>
    %cst_125 = arith.constant dense<0.000000e+00> : vector<16x8xf32>
    %178 = tpu.matmul %3, %177, %cst_125 {dimension_numbers = #tpu.dot_dimension_numbers<[1], [0], [0], [1], [0, 0, 1, 1], [], []>} : vector<16x32xf32>, vector<32x8xf32>, vector<16x8xf32> -> vector<16x8xf32>
    %c0_126 = arith.constant 0 : index
    %c3_127 = arith.constant 3 : index
    %c0_128 = arith.constant 0 : index
    %c0_129 = arith.constant 0 : index
    %179 = vector.load %arg5[%c0_126, %c3_127, %c0_128, %c0_129] : memref<1x4x1x8xf32, #tpu.memory_space<vmem>>, vector<1x1x1x8xf32>
    %180 = vector.shape_cast %179 : vector<1x1x1x8xf32> to vector<1x8xf32>
    %181 = vector.broadcast %180 : vector<1x8xf32> to vector<16x8xf32>
    %182 = arith.addf %178, %181 : vector<16x8xf32>
    %c0_130 = arith.constant 0 : index
    %c3_131 = arith.constant 3 : index
    %c0_132 = arith.constant 0 : index
    %c0_133 = arith.constant 0 : index
    %183 = vector.load %arg3[%c0_130, %c3_131, %c0_132, %c0_133] : memref<1x4x32x8xf32, #tpu.memory_space<vmem>>, vector<1x1x32x8xf32>
    %184 = vector.shape_cast %183 : vector<1x1x32x8xf32> to vector<32x8xf32>
    %cst_134 = arith.constant dense<0.000000e+00> : vector<16x8xf32>
    %185 = tpu.matmul %3, %184, %cst_134 {dimension_numbers = #tpu.dot_dimension_numbers<[1], [0], [0], [1], [0, 0, 1, 1], [], []>} : vector<16x32xf32>, vector<32x8xf32>, vector<16x8xf32> -> vector<16x8xf32>
    %c0_135 = arith.constant 0 : index
    %c3_136 = arith.constant 3 : index
    %c0_137 = arith.constant 0 : index
    %c0_138 = arith.constant 0 : index
    %186 = vector.load %arg6[%c0_135, %c3_136, %c0_137, %c0_138] : memref<1x4x1x8xf32, #tpu.memory_space<vmem>>, vector<1x1x1x8xf32>
    %187 = vector.shape_cast %186 : vector<1x1x1x8xf32> to vector<1x8xf32>
    %188 = vector.broadcast %187 : vector<1x8xf32> to vector<16x8xf32>
    %189 = arith.addf %185, %188 : vector<16x8xf32>
    %c0_139 = arith.constant 0 : index
    %c3_140 = arith.constant 3 : index
    %c0_141 = arith.constant 0 : index
    %c0_142 = arith.constant 0 : index
    %190 = vector.load %arg4[%c0_139, %c3_140, %c0_141, %c0_142] : memref<1x4x32x8xf32, #tpu.memory_space<vmem>>, vector<1x1x32x8xf32>
    %191 = vector.shape_cast %190 : vector<1x1x32x8xf32> to vector<32x8xf32>
    %cst_143 = arith.constant dense<0.000000e+00> : vector<16x8xf32>
    %192 = tpu.matmul %3, %191, %cst_143 {dimension_numbers = #tpu.dot_dimension_numbers<[1], [0], [0], [1], [0, 0, 1, 1], [], []>} : vector<16x32xf32>, vector<32x8xf32>, vector<16x8xf32> -> vector<16x8xf32>
    %c0_144 = arith.constant 0 : index
    %c3_145 = arith.constant 3 : index
    %c0_146 = arith.constant 0 : index
    %c0_147 = arith.constant 0 : index
    %193 = vector.load %arg7[%c0_144, %c3_145, %c0_146, %c0_147] : memref<1x4x1x8xf32, #tpu.memory_space<vmem>>, vector<1x1x1x8xf32>
    %194 = vector.shape_cast %193 : vector<1x1x1x8xf32> to vector<1x8xf32>
    %195 = vector.broadcast %194 : vector<1x8xf32> to vector<16x8xf32>
    %196 = arith.addf %192, %195 : vector<16x8xf32>
    %197 = vector.extract_strided_slice %182 {offsets = [0, 0], sizes = [8, 8], strides = [1, 1]} : vector<16x8xf32> to vector<8x8xf32>
    %198 = vector.extract_strided_slice %189 {offsets = [0, 0], sizes = [8, 8], strides = [1, 1]} : vector<16x8xf32> to vector<8x8xf32>
    %199 = vector.extract_strided_slice %196 {offsets = [0, 0], sizes = [8, 8], strides = [1, 1]} : vector<16x8xf32> to vector<8x8xf32>
    %cst_148 = arith.constant dense<0.000000e+00> : vector<8x8xf32>
    %200 = tpu.matmul %197, %198, %cst_148 {dimension_numbers = #tpu.dot_dimension_numbers<[1], [1], [0], [0], [0, 0, 1, 0], [], []>} : vector<8x8xf32>, vector<8x8xf32>, vector<8x8xf32> -> vector<8x8xf32>
    %cst_149 = arith.constant dense<0xFF800000> : vector<8xf32>
    %201 = vector.multi_reduction <maximumf>, %200, %cst_149 [1] : vector<8x8xf32> to vector<8xf32>
    %202 = vector.shape_cast %201 : vector<8xf32> to vector<8x1xf32>
    %203 = vector.broadcast %202 : vector<8x1xf32> to vector<8x8xf32>
    %204 = arith.subf %200, %203 : vector<8x8xf32>
    %205 = math.exp %204 : vector<8x8xf32>
    %cst_150 = arith.constant dense<0.000000e+00> : vector<8xf32>
    %206 = vector.multi_reduction <add>, %205, %cst_150 [1] : vector<8x8xf32> to vector<8xf32>
    %207 = vector.shape_cast %206 : vector<8xf32> to vector<8x1xf32>
    %208 = tpu.reciprocal %207 {approx = true} : vector<8x1xf32> -> vector<8x1xf32>
    %209 = vector.broadcast %208 : vector<8x1xf32> to vector<8x8xf32>
    %210 = arith.mulf %205, %209 : vector<8x8xf32>
    %cst_151 = arith.constant dense<0.000000e+00> : vector<8x8xf32>
    %211 = tpu.matmul %210, %199, %cst_151 {dimension_numbers = #tpu.dot_dimension_numbers<[1], [0], [0], [1], [0, 0, 1, 1], [], []>} : vector<8x8xf32>, vector<8x8xf32>, vector<8x8xf32> -> vector<8x8xf32>
    %212 = vector.extract_strided_slice %182 {offsets = [8, 0], sizes = [8, 8], strides = [1, 1]} : vector<16x8xf32> to vector<8x8xf32>
    %213 = vector.extract_strided_slice %189 {offsets = [8, 0], sizes = [8, 8], strides = [1, 1]} : vector<16x8xf32> to vector<8x8xf32>
    %214 = vector.extract_strided_slice %196 {offsets = [8, 0], sizes = [8, 8], strides = [1, 1]} : vector<16x8xf32> to vector<8x8xf32>
    %cst_152 = arith.constant dense<0.000000e+00> : vector<8x8xf32>
    %215 = tpu.matmul %212, %213, %cst_152 {dimension_numbers = #tpu.dot_dimension_numbers<[1], [1], [0], [0], [0, 0, 1, 0], [], []>} : vector<8x8xf32>, vector<8x8xf32>, vector<8x8xf32> -> vector<8x8xf32>
    %cst_153 = arith.constant dense<0xFF800000> : vector<8xf32>
    %216 = vector.multi_reduction <maximumf>, %215, %cst_153 [1] : vector<8x8xf32> to vector<8xf32>
    %217 = vector.shape_cast %216 : vector<8xf32> to vector<8x1xf32>
    %218 = vector.broadcast %217 : vector<8x1xf32> to vector<8x8xf32>
    %219 = arith.subf %215, %218 : vector<8x8xf32>
    %220 = math.exp %219 : vector<8x8xf32>
    %cst_154 = arith.constant dense<0.000000e+00> : vector<8xf32>
    %221 = vector.multi_reduction <add>, %220, %cst_154 [1] : vector<8x8xf32> to vector<8xf32>
    %222 = vector.shape_cast %221 : vector<8xf32> to vector<8x1xf32>
    %223 = tpu.reciprocal %222 {approx = true} : vector<8x1xf32> -> vector<8x1xf32>
    %224 = vector.broadcast %223 : vector<8x1xf32> to vector<8x8xf32>
    %225 = arith.mulf %220, %224 : vector<8x8xf32>
    %cst_155 = arith.constant dense<0.000000e+00> : vector<8x8xf32>
    %226 = tpu.matmul %225, %214, %cst_155 {dimension_numbers = #tpu.dot_dimension_numbers<[1], [0], [0], [1], [0, 0, 1, 1], [], []>} : vector<8x8xf32>, vector<8x8xf32>, vector<8x8xf32> -> vector<8x8xf32>
    %227 = tpu.concatenate %211, %226 in 0 : vector<8x8xf32>, vector<8x8xf32> -> vector<16x8xf32>
    %c0_156 = arith.constant 0 : index
    %c3_157 = arith.constant 3 : index
    %c0_158 = arith.constant 0 : index
    %c0_159 = arith.constant 0 : index
    %228 = vector.load %arg8[%c0_156, %c3_157, %c0_158, %c0_159] : memref<1x4x8x32xf32, #tpu.memory_space<vmem>>, vector<1x1x8x32xf32>
    %229 = vector.shape_cast %228 : vector<1x1x8x32xf32> to vector<8x32xf32>
    %cst_160 = arith.constant dense<0.000000e+00> : vector<16x32xf32>
    %230 = tpu.matmul %227, %229, %cst_160 {dimension_numbers = #tpu.dot_dimension_numbers<[1], [0], [0], [1], [0, 0, 1, 1], [], []>} : vector<16x8xf32>, vector<8x32xf32>, vector<16x32xf32> -> vector<16x32xf32>
    %231 = arith.addf %175, %230 : vector<16x32xf32>
    %232 = arith.addf %3, %231 : vector<16x32xf32>
    %c0_161 = arith.constant 0 : index
    %c0_162 = arith.constant 0 : index
    %c0_163 = arith.constant 0 : index
    %233 = vector.load %arg10[%c0_161, %c0_162, %c0_163] : memref<1x1x32xf32, #tpu.memory_space<vmem>>, vector<1x1x32xf32>
    %234 = vector.shape_cast %233 : vector<1x1x32xf32> to vector<1x32xf32>
    %c0_164 = arith.constant 0 : index
    %c0_165 = arith.constant 0 : index
    %c0_166 = arith.constant 0 : index
    %235 = vector.load %arg11[%c0_164, %c0_165, %c0_166] : memref<1x1x32xf32, #tpu.memory_space<vmem>>, vector<1x1x32xf32>
    %236 = vector.shape_cast %235 : vector<1x1x32xf32> to vector<1x32xf32>
    %cst_167 = arith.constant dense<0.000000e+00> : vector<16xf32>
    %237 = vector.multi_reduction <add>, %232, %cst_167 [1] : vector<16x32xf32> to vector<16xf32>
    %238 = vector.shape_cast %237 : vector<16xf32> to vector<16x1xf32>
    %cst_168 = arith.constant 3.200000e+01 : f32
    %239 = vector.broadcast %cst_168 : f32 to vector<16x1xf32>
    %240 = arith.divf %238, %239 : vector<16x1xf32>
    %241 = vector.broadcast %240 : vector<16x1xf32> to vector<16x32xf32>
    %242 = arith.subf %232, %241 : vector<16x32xf32>
    %243 = arith.mulf %242, %242 : vector<16x32xf32>
    %cst_169 = arith.constant dense<0.000000e+00> : vector<16xf32>
    %244 = vector.multi_reduction <add>, %243, %cst_169 [1] : vector<16x32xf32> to vector<16xf32>
    %245 = vector.shape_cast %244 : vector<16xf32> to vector<16x1xf32>
    %cst_170 = arith.constant 3.200000e+01 : f32
    %246 = vector.broadcast %cst_170 : f32 to vector<16x1xf32>
    %247 = arith.divf %245, %246 : vector<16x1xf32>
    %248 = vector.broadcast %240 : vector<16x1xf32> to vector<16x32xf32>
    %249 = arith.subf %232, %248 : vector<16x32xf32>
    %cst_171 = arith.constant 9.99999974E-6 : f32
    %250 = vector.broadcast %cst_171 : f32 to vector<16x1xf32>
    %251 = arith.addf %247, %250 : vector<16x1xf32>
    %252 = math.rsqrt %251 : vector<16x1xf32>
    %253 = vector.broadcast %252 : vector<16x1xf32> to vector<16x32xf32>
    %254 = arith.mulf %249, %253 : vector<16x32xf32>
    %255 = vector.broadcast %234 : vector<1x32xf32> to vector<16x32xf32>
    %256 = arith.mulf %254, %255 : vector<16x32xf32>
    %257 = vector.broadcast %236 : vector<1x32xf32> to vector<16x32xf32>
    %258 = arith.addf %256, %257 : vector<16x32xf32>
    %c0_172 = arith.constant 0 : index
    %c0_173 = arith.constant 0 : index
    %c0_174 = arith.constant 0 : index
    %259 = vector.load %arg14[%c0_172, %c0_173, %c0_174] : memref<1x32x64xf32, #tpu.memory_space<vmem>>, vector<1x32x64xf32>
    %260 = vector.shape_cast %259 : vector<1x32x64xf32> to vector<32x64xf32>
    %cst_175 = arith.constant dense<0.000000e+00> : vector<16x64xf32>
    %261 = tpu.matmul %258, %260, %cst_175 {dimension_numbers = #tpu.dot_dimension_numbers<[1], [0], [0], [1], [0, 0, 1, 1], [], []>} : vector<16x32xf32>, vector<32x64xf32>, vector<16x64xf32> -> vector<16x64xf32>
    %c0_176 = arith.constant 0 : index
    %c0_177 = arith.constant 0 : index
    %c0_178 = arith.constant 0 : index
    %262 = vector.load %arg15[%c0_176, %c0_177, %c0_178] : memref<1x1x64xf32, #tpu.memory_space<vmem>>, vector<1x1x64xf32>
    %263 = vector.shape_cast %262 : vector<1x1x64xf32> to vector<1x64xf32>
    %264 = vector.broadcast %263 : vector<1x64xf32> to vector<16x64xf32>
    %265 = arith.addf %261, %264 : vector<16x64xf32>
    %cst_179 = arith.constant 0.000000e+00 : f32
    %266 = vector.broadcast %cst_179 : f32 to vector<16x64xf32>
    %267 = arith.maximumf %265, %266 : vector<16x64xf32>
    %c0_180 = arith.constant 0 : index
    %c0_181 = arith.constant 0 : index
    %c0_182 = arith.constant 0 : index
    %268 = vector.load %arg16[%c0_180, %c0_181, %c0_182] : memref<1x64x32xf32, #tpu.memory_space<vmem>>, vector<1x64x32xf32>
    %269 = vector.shape_cast %268 : vector<1x64x32xf32> to vector<64x32xf32>
    %cst_183 = arith.constant dense<0.000000e+00> : vector<16x32xf32>
    %270 = tpu.matmul %267, %269, %cst_183 {dimension_numbers = #tpu.dot_dimension_numbers<[1], [0], [0], [1], [0, 0, 1, 1], [], []>} : vector<16x64xf32>, vector<64x32xf32>, vector<16x32xf32> -> vector<16x32xf32>
    %c0_184 = arith.constant 0 : index
    %c0_185 = arith.constant 0 : index
    %c0_186 = arith.constant 0 : index
    %271 = vector.load %arg17[%c0_184, %c0_185, %c0_186] : memref<1x1x32xf32, #tpu.memory_space<vmem>>, vector<1x1x32xf32>
    %272 = vector.shape_cast %271 : vector<1x1x32xf32> to vector<1x32xf32>
    %273 = vector.broadcast %272 : vector<1x32xf32> to vector<16x32xf32>
    %274 = arith.addf %270, %273 : vector<16x32xf32>
    %275 = arith.addf %258, %274 : vector<16x32xf32>
    %c0_187 = arith.constant 0 : index
    %c0_188 = arith.constant 0 : index
    %c0_189 = arith.constant 0 : index
    %276 = vector.load %arg12[%c0_187, %c0_188, %c0_189] : memref<1x1x32xf32, #tpu.memory_space<vmem>>, vector<1x1x32xf32>
    %277 = vector.shape_cast %276 : vector<1x1x32xf32> to vector<1x32xf32>
    %c0_190 = arith.constant 0 : index
    %c0_191 = arith.constant 0 : index
    %c0_192 = arith.constant 0 : index
    %278 = vector.load %arg13[%c0_190, %c0_191, %c0_192] : memref<1x1x32xf32, #tpu.memory_space<vmem>>, vector<1x1x32xf32>
    %279 = vector.shape_cast %278 : vector<1x1x32xf32> to vector<1x32xf32>
    %cst_193 = arith.constant dense<0.000000e+00> : vector<16xf32>
    %280 = vector.multi_reduction <add>, %275, %cst_193 [1] : vector<16x32xf32> to vector<16xf32>
    %281 = vector.shape_cast %280 : vector<16xf32> to vector<16x1xf32>
    %cst_194 = arith.constant 3.200000e+01 : f32
    %282 = vector.broadcast %cst_194 : f32 to vector<16x1xf32>
    %283 = arith.divf %281, %282 : vector<16x1xf32>
    %284 = vector.broadcast %283 : vector<16x1xf32> to vector<16x32xf32>
    %285 = arith.subf %275, %284 : vector<16x32xf32>
    %286 = arith.mulf %285, %285 : vector<16x32xf32>
    %cst_195 = arith.constant dense<0.000000e+00> : vector<16xf32>
    %287 = vector.multi_reduction <add>, %286, %cst_195 [1] : vector<16x32xf32> to vector<16xf32>
    %288 = vector.shape_cast %287 : vector<16xf32> to vector<16x1xf32>
    %cst_196 = arith.constant 3.200000e+01 : f32
    %289 = vector.broadcast %cst_196 : f32 to vector<16x1xf32>
    %290 = arith.divf %288, %289 : vector<16x1xf32>
    %291 = vector.broadcast %283 : vector<16x1xf32> to vector<16x32xf32>
    %292 = arith.subf %275, %291 : vector<16x32xf32>
    %cst_197 = arith.constant 9.99999974E-6 : f32
    %293 = vector.broadcast %cst_197 : f32 to vector<16x1xf32>
    %294 = arith.addf %290, %293 : vector<16x1xf32>
    %295 = math.rsqrt %294 : vector<16x1xf32>
    %296 = vector.broadcast %295 : vector<16x1xf32> to vector<16x32xf32>
    %297 = arith.mulf %292, %296 : vector<16x32xf32>
    %298 = vector.broadcast %277 : vector<1x32xf32> to vector<16x32xf32>
    %299 = arith.mulf %297, %298 : vector<16x32xf32>
    %300 = vector.broadcast %279 : vector<1x32xf32> to vector<16x32xf32>
    %301 = arith.addf %299, %300 : vector<16x32xf32>
    %c0_198 = arith.constant 0 : index
    %c0_199 = arith.constant 0 : index
    %302 = vector.load %arg19[%c0_198, %c0_199] : memref<16x32xf32, #tpu.memory_space<vmem>>, vector<16x32xf32>
    tpu.vector_store %arg19[%c0_198, %c0_199], %301 {strides = array<i32>} : memref<16x32xf32, #tpu.memory_space<vmem>>, vector<16x32xf32>,
    %c1_i32 = arith.constant 1 : i32
    %303 = arith.cmpi eq, %arg0, %c1_i32 : i32
    %304 = arith.extui %303 : i1 to i32
    %c0_i32_200 = arith.constant 0 : i32
    %305 = arith.cmpi ne, %304, %c0_i32_200 : i32
    scf.if %305 {
      %c0_201 = arith.constant 0 : index
      %c0_202 = arith.constant 0 : index
      %306 = vector.load %arg18[%c0_201, %c0_202] : memref<16x32xf32, #tpu.memory_space<vmem>>, vector<16x32xf32>
      tpu.vector_store %arg18[%c0_201, %c0_202], %301 {strides = array<i32>} : memref<16x32xf32, #tpu.memory_space<vmem>>, vector<16x32xf32>,
    } else {
    }
    return
  }
  func.func @transform_0(%arg0: i32) -> (i32, i32) {
    %c0_i32 = arith.constant 0 : i32
    %c0_i32_0 = arith.constant 0 : i32
    %c0_i32_1 = arith.constant 0 : i32
    return %c0_i32, %c0_i32_0 : i32, i32
  }
  func.func @transform_1(%arg0: i32) -> (i32, i32, i32, i32) {
    %c0_i32 = arith.constant 0 : i32
    %c0_i32_0 = arith.constant 0 : i32
    %c0_i32_1 = arith.constant 0 : i32
    %c0_i32_2 = arith.constant 0 : i32
    return %arg0, %c0_i32, %c0_i32_0, %c0_i32_1 : i32, i32, i32, i32
  }
  func.func @transform_2(%arg0: i32) -> (i32, i32, i32, i32) {
    %c0_i32 = arith.constant 0 : i32
    %c0_i32_0 = arith.constant 0 : i32
    %c0_i32_1 = arith.constant 0 : i32
    %c0_i32_2 = arith.constant 0 : i32
    return %arg0, %c0_i32, %c0_i32_0, %c0_i32_1 : i32, i32, i32, i32
  }
  func.func @transform_3(%arg0: i32) -> (i32, i32, i32, i32) {
    %c0_i32 = arith.constant 0 : i32
    %c0_i32_0 = arith.constant 0 : i32
    %c0_i32_1 = arith.constant 0 : i32
    %c0_i32_2 = arith.constant 0 : i32
    return %arg0, %c0_i32, %c0_i32_0, %c0_i32_1 : i32, i32, i32, i32
  }
  func.func @transform_4(%arg0: i32) -> (i32, i32, i32, i32) {
    %c0_i32 = arith.constant 0 : i32
    %c0_i32_0 = arith.constant 0 : i32
    %c0_i32_1 = arith.constant 0 : i32
    %c0_i32_2 = arith.constant 0 : i32
    return %arg0, %c0_i32, %c0_i32_0, %c0_i32_1 : i32, i32, i32, i32
  }
  func.func @transform_5(%arg0: i32) -> (i32, i32, i32, i32) {
    %c0_i32 = arith.constant 0 : i32
    %c0_i32_0 = arith.constant 0 : i32
    %c0_i32_1 = arith.constant 0 : i32
    %c0_i32_2 = arith.constant 0 : i32
    return %arg0, %c0_i32, %c0_i32_0, %c0_i32_1 : i32, i32, i32, i32
  }
  func.func @transform_6(%arg0: i32) -> (i32, i32, i32, i32) {
    %c0_i32 = arith.constant 0 : i32
    %c0_i32_0 = arith.constant 0 : i32
    %c0_i32_1 = arith.constant 0 : i32
    %c0_i32_2 = arith.constant 0 : i32
    return %arg0, %c0_i32, %c0_i32_0, %c0_i32_1 : i32, i32, i32, i32
  }
  func.func @transform_7(%arg0: i32) -> (i32, i32, i32, i32) {
    %c0_i32 = arith.constant 0 : i32
    %c0_i32_0 = arith.constant 0 : i32
    %c0_i32_1 = arith.constant 0 : i32
    %c0_i32_2 = arith.constant 0 : i32
    return %arg0, %c0_i32, %c0_i32_0, %c0_i32_1 : i32, i32, i32, i32
  }
  func.func @transform_8(%arg0: i32) -> (i32, i32, i32) {
    %c0_i32 = arith.constant 0 : i32
    %c0_i32_0 = arith.constant 0 : i32
    %c0_i32_1 = arith.constant 0 : i32
    return %arg0, %c0_i32, %c0_i32_0 : i32, i32, i32
  }
  func.func @transform_9(%arg0: i32) -> (i32, i32, i32) {
    %c0_i32 = arith.constant 0 : i32
    %c0_i32_0 = arith.constant 0 : i32
    %c0_i32_1 = arith.constant 0 : i32
    return %arg0, %c0_i32, %c0_i32_0 : i32, i32, i32
  }
  func.func @transform_10(%arg0: i32) -> (i32, i32, i32) {
    %c0_i32 = arith.constant 0 : i32
    %c0_i32_0 = arith.constant 0 : i32
    %c0_i32_1 = arith.constant 0 : i32
    return %arg0, %c0_i32, %c0_i32_0 : i32, i32, i32
  }
  func.func @transform_11(%arg0: i32) -> (i32, i32, i32) {
    %c0_i32 = arith.constant 0 : i32
    %c0_i32_0 = arith.constant 0 : i32
    %c0_i32_1 = arith.constant 0 : i32
    return %arg0, %c0_i32, %c0_i32_0 : i32, i32, i32
  }
  func.func @transform_12(%arg0: i32) -> (i32, i32, i32) {
    %c0_i32 = arith.constant 0 : i32
    %c0_i32_0 = arith.constant 0 : i32
    %c0_i32_1 = arith.constant 0 : i32
    return %arg0, %c0_i32, %c0_i32_0 : i32, i32, i32
  }
  func.func @transform_13(%arg0: i32) -> (i32, i32, i32) {
    %c0_i32 = arith.constant 0 : i32
    %c0_i32_0 = arith.constant 0 : i32
    %c0_i32_1 = arith.constant 0 : i32
    return %arg0, %c0_i32, %c0_i32_0 : i32, i32, i32
  }
  func.func @transform_14(%arg0: i32) -> (i32, i32, i32) {
    %c0_i32 = arith.constant 0 : i32
    %c0_i32_0 = arith.constant 0 : i32
    %c0_i32_1 = arith.constant 0 : i32
    return %arg0, %c0_i32, %c0_i32_0 : i32, i32, i32
  }
  func.func @transform_15(%arg0: i32) -> (i32, i32, i32) {
    %c0_i32 = arith.constant 0 : i32
    %c0_i32_0 = arith.constant 0 : i32
    %c0_i32_1 = arith.constant 0 : i32
    return %arg0, %c0_i32, %c0_i32_0 : i32, i32, i32
  }
  func.func @transform_16(%arg0: i32) -> (i32, i32, i32) {
    %c0_i32 = arith.constant 0 : i32
    %c0_i32_0 = arith.constant 0 : i32
    %c0_i32_1 = arith.constant 0 : i32
    return %arg0, %c0_i32, %c0_i32_0 : i32, i32, i32
  }
  func.func @transform_17(%arg0: i32) -> (i32, i32) {
    %c0_i32 = arith.constant 0 : i32
    %c0_i32_0 = arith.constant 0 : i32
    %c0_i32_1 = arith.constant 0 : i32
    return %c0_i32, %c0_i32_0 : i32, i32
  }
}

</mosaic_0001>

<llo_original>
// kernel: tpu_custom_call.1
$region0: #{tpu_custom_call.1}
  #allocation0 [shape = 'u32[]', space=smem, size = 0x4, offset = 0x4, fixed_abs, tag = 'smem constant byte address 0x4 - core index']
  #allocation1 [shape = 'u32[144,128]{1,0:T(1,128)}', space=vmem, size = 0x12000, scoped, tag = 'internal scratch']
  #allocation2 [shape = 'f32[16,32]{1,0:T(8,128)}', space=vmem, size = 0x2000, scoped, tag = 'scratch operand']
  %s0 = inlined_call_operand.vmem [shape: f32[16,32], index: 0, kind: input, shape index: {}]
  %s1 = inlined_call_operand.vmem [shape: f32[2,4,32,8], index: 1, kind: input, shape index: {}]
  %s2 = inlined_call_operand.vmem [shape: f32[2,4,32,8], index: 2, kind: input, shape index: {}]
  %s3 = inlined_call_operand.vmem [shape: f32[2,4,32,8], index: 3, kind: input, shape index: {}]
  %s4 = inlined_call_operand.vmem [shape: f32[2,4,1,8], index: 4, kind: input, shape index: {}]
  %s5 = inlined_call_operand.vmem [shape: f32[2,4,1,8], index: 5, kind: input, shape index: {}]
  %s6 = inlined_call_operand.vmem [shape: f32[2,4,1,8], index: 6, kind: input, shape index: {}]
  %s7 = inlined_call_operand.vmem [shape: f32[2,4,8,32], index: 7, kind: input, shape index: {}]
  %s8 = inlined_call_operand.vmem [shape: f32[2,1,32], index: 8, kind: input, shape index: {}]
  %s9 = inlined_call_operand.vmem [shape: f32[2,1,32], index: 9, kind: input, shape index: {}]
  %s10 = inlined_call_operand.vmem [shape: f32[2,1,32], index: 10, kind: input, shape index: {}]
  %s11 = inlined_call_operand.vmem [shape: f32[2,1,32], index: 11, kind: input, shape index: {}]
  %s12 = inlined_call_operand.vmem [shape: f32[2,1,32], index: 12, kind: input, shape index: {}]
  %s13 = inlined_call_operand.vmem [shape: f32[2,32,64], index: 13, kind: input, shape index: {}]
  %s14 = inlined_call_operand.vmem [shape: f32[2,1,64], index: 14, kind: input, shape index: {}]
  %s15 = inlined_call_operand.vmem [shape: f32[2,64,32], index: 15, kind: input, shape index: {}]
  %s16 = inlined_call_operand.vmem [shape: f32[2,1,32], index: 16, kind: input, shape index: {}]
  %s17 = inlined_call_operand.hbm [shape: f32[16,32], index: 17, kind: output, shape index: {}]
  %s18 = sld [smem:[#allocation0]]
  $region109: #{tpu_custom_call.1} parent=0
    _
  %s20 = ssub.s32 1, %s18
  %s21 = scalar_select 0, %s20, %s18
  $region1: #{tpu_custom_call.1} parent=0
    #allocation3 [shape = 'u8[8192]{0}', space=vmem, size = 0x2000, scoped, tag = 'output window, operand 0, single buffered']
    #allocation4 [shape = 's32[2]{0}', space=sflag, size = 0x8, scoped, tag = 'scoped memory for tpu_custom_call.1']
    %22 = vsyncpa [#allocation4], 0
    loop: start=0, step=1, limit=4
    $region2: #{tpu_custom_call.1} parent=1 // loop_pre_header
      _
    $region3: #{tpu_custom_call.1} parent=1 // loop_header
      %s24 = sphi 0, %s28
      %p25 = scmp.ge.s32.totalorder %s24, 4
      %s32 = sphi 0, %s32
      %s34 = sphi 0, %s32
      %s35 = sphi 0, %s34
      %s49 = sphi 0, %s35
      %s55 = sphi 0, %s57
      %s58 = sphi 0, %s55
      %s59 = sphi 0, %s58
      %s75 = sphi 0, %s59
      %s81 = sphi 0, %s83
      %s84 = sphi 0, %s81
      %s85 = sphi 0, %s84
      %s101 = sphi 0, %s85
      %s107 = sphi 0, %s109
      %s110 = sphi 0, %s107
      %s111 = sphi 0, %s110
      %s127 = sphi 0, %s111
      %s133 = sphi 0, %s135
      %s136 = sphi 0, %s133
      %s137 = sphi 0, %s136
      %s153 = sphi 0, %s137
      %s159 = sphi 0, %s161
      %s162 = sphi 0, %s159
      %s163 = sphi 0, %s162
      %s179 = sphi 0, %s163
      %s185 = sphi 0, %s187
      %s188 = sphi 0, %s185
      %s189 = sphi 0, %s188
      %s205 = sphi 0, %s189
      %s211 = sphi 0, %s213
      %s214 = sphi 0, %s211
      %s215 = sphi 0, %s214
      %s231 = sphi 0, %s215
      %s237 = sphi 0, %s239
      %s240 = sphi 0, %s237
      %s241 = sphi 0, %s240
      %s257 = sphi 0, %s241
      %s263 = sphi 0, %s265
      %s266 = sphi 0, %s263
      %s267 = sphi 0, %s266
      %s283 = sphi 0, %s267
      %s289 = sphi 0, %s291
      %s292 = sphi 0, %s289
      %s293 = sphi 0, %s292
      %s309 = sphi 0, %s293
      %s315 = sphi 0, %s317
      %s318 = sphi 0, %s315
      %s319 = sphi 0, %s318
      %s335 = sphi 0, %s319
      %s341 = sphi 0, %s343
      %s344 = sphi 0, %s341
      %s345 = sphi 0, %s344
      %s361 = sphi 0, %s345
      %s367 = sphi 0, %s369
      %s370 = sphi 0, %s367
      %s371 = sphi 0, %s370
      %s387 = sphi 0, %s371
      %s393 = sphi 0, %s395
      %s396 = sphi 0, %s393
      %s397 = sphi 0, %s396
      %s413 = sphi 0, %s397
      %s419 = sphi 0, %s421
      %s422 = sphi 0, %s419
      %s423 = sphi 0, %s422
      %s439 = sphi 0, %s423
      %s445 = sphi 0, %s447
      %s448 = sphi 0, %s445
      %s449 = sphi 0, %s448
      %s465 = sphi 0, %s449
      %s469 = sphi 0, %s469
      %s471 = sphi 0, %s469
      %s472 = sphi 0, %s471
      %s486 = sphi 0, %s472
    $region4: #{tpu_custom_call.1} parent=1 // loop_header_branch
      %27 = sbr.rel (%p25) target = $region8
    $region5: #{tpu_custom_call.1} parent=1 // loop_body
      %s29 = ssub.s32 %s24, 1
      %s30 = ssub.s32 %s24, 2
      %s31 = sadd.s32 %s24, 1
      %s33 = sadd.s32 %s32, 1
      %p36 = scmp.eq.s32.totalorder %s24, 1
      %p37 = scmp.ne.s32.totalorder %s32, %s34
      %p38 = scmp.eq.s32.totalorder %s24, 0
      %p39 = por %p37, %p38
      %p40 = scmp.ne.s32.totalorder %s32, %s34
      %p41 = scmp.eq.s32.totalorder %s29, 1
      %p42 = por %p40, %p41
      %p43 = scmp.ne.s32.totalorder %s34, %s35
      %p44 = scmp.eq.s32.totalorder %s29, 0
      %p45 = por %p43, %p44
      %p46 = scmp.ne.s32.totalorder %s34, %s35
      %p47 = scmp.eq.s32.totalorder %s30, 1
      %p48 = por %p46, %p47
      %p50 = scmp.ne.s32.totalorder %s35, %s49
      %p51 = scmp.eq.s32.totalorder %s30, 0
      %p52 = por %p50, %p51
      %s53 = ssub.s32 %s24, %s31
      %p54 = scmp.eq.s32.totalorder %s53, 0
      %s56 = sadd.s32 %s55, 1
      %s57 = scalar_select %p54, %s55, %s56
      %p60 = pneg %p54
      %p61 = scmp.eq.s32.totalorder %s24, 1
      %p62 = por %p60, %p61
      %p63 = scmp.ne.s32.totalorder %s55, %s58
      %p64 = scmp.eq.s32.totalorder %s24, 0
      %p65 = por %p63, %p64
      %p66 = scmp.ne.s32.totalorder %s55, %s58
      %p67 = scmp.eq.s32.totalorder %s29, 1
      %p68 = por %p66, %p67
      %p69 = scmp.ne.s32.totalorder %s58, %s59
      %p70 = scmp.eq.s32.totalorder %s29, 0
      %p71 = por %p69, %p70
      %p72 = scmp.ne.s32.totalorder %s58, %s59
      %p73 = scmp.eq.s32.totalorder %s30, 1
      %p74 = por %p72, %p73
      %p76 = scmp.ne.s32.totalorder %s59, %s75
      %p77 = scmp.eq.s32.totalorder %s30, 0
      %p78 = por %p76, %p77
      %s79 = ssub.s32 %s24, %s31
      %p80 = scmp.eq.s32.totalorder %s79, 0
      %s82 = sadd.s32 %s81, 1
      %s83 = scalar_select %p80, %s81, %s82
      %p86 = pneg %p80
      %p87 = scmp.eq.s32.totalorder %s24, 1
      %p88 = por %p86, %p87
      %p89 = scmp.ne.s32.totalorder %s81, %s84
      %p90 = scmp.eq.s32.totalorder %s24, 0
      %p91 = por %p89, %p90
      %p92 = scmp.ne.s32.totalorder %s81, %s84
      %p93 = scmp.eq.s32.totalorder %s29, 1
      %p94 = por %p92, %p93
      %p95 = scmp.ne.s32.totalorder %s84, %s85
      %p96 = scmp.eq.s32.totalorder %s29, 0
      %p97 = por %p95, %p96
      %p98 = scmp.ne.s32.totalorder %s84, %s85
      %p99 = scmp.eq.s32.totalorder %s30, 1
      %p100 = por %p98, %p99
      %p102 = scmp.ne.s32.totalorder %s85, %s101
      %p103 = scmp.eq.s32.totalorder %s30, 0
      %p104 = por %p102, %p103
      %s105 = ssub.s32 %s24, %s31
      %p106 = scmp.eq.s32.totalorder %s105, 0
      %s108 = sadd.s32 %s107, 1
      %s109 = scalar_select %p106, %s107, %s108
      %p112 = pneg %p106
      %p113 = scmp.eq.s32.totalorder %s24, 1
      %p114 = por %p112, %p113
      %p115 = scmp.ne.s32.totalorder %s107, %s110
      %p116 = scmp.eq.s32.totalorder %s24, 0
      %p117 = por %p115, %p116
      %p118 = scmp.ne.s32.totalorder %s107, %s110
      %p119 = scmp.eq.s32.totalorder %s29, 1
      %p120 = por %p118, %p119
      %p121 = scmp.ne.s32.totalorder %s110, %s111
      %p122 = scmp.eq.s32.totalorder %s29, 0
      %p123 = por %p121, %p122
      %p124 = scmp.ne.s32.totalorder %s110, %s111
      %p125 = scmp.eq.s32.totalorder %s30, 1
      %p126 = por %p124, %p125
      %p128 = scmp.ne.s32.totalorder %s111, %s127
      %p129 = scmp.eq.s32.totalorder %s30, 0
      %p130 = por %p128, %p129
      %s131 = ssub.s32 %s24, %s31
      %p132 = scmp.eq.s32.totalorder %s131, 0
      %s134 = sadd.s32 %s133, 1
      %s135 = scalar_select %p132, %s133, %s134
      %p138 = pneg %p132
      %p139 = scmp.eq.s32.totalorder %s24, 1
      %p140 = por %p138, %p139
      %p141 = scmp.ne.s32.totalorder %s133, %s136
      %p142 = scmp.eq.s32.totalorder %s24, 0
      %p143 = por %p141, %p142
      %p144 = scmp.ne.s32.totalorder %s133, %s136
      %p145 = scmp.eq.s32.totalorder %s29, 1
      %p146 = por %p144, %p145
      %p147 = scmp.ne.s32.totalorder %s136, %s137
      %p148 = scmp.eq.s32.totalorder %s29, 0
      %p149 = por %p147, %p148
      %p150 = scmp.ne.s32.totalorder %s136, %s137
      %p151 = scmp.eq.s32.totalorder %s30, 1
      %p152 = por %p150, %p151
      %p154 = scmp.ne.s32.totalorder %s137, %s153
      %p155 = scmp.eq.s32.totalorder %s30, 0
      %p156 = por %p154, %p155
      %s157 = ssub.s32 %s24, %s31
      %p158 = scmp.eq.s32.totalorder %s157, 0
      %s160 = sadd.s32 %s159, 1
      %s161 = scalar_select %p158, %s159, %s160
      %p164 = pneg %p158
      %p165 = scmp.eq.s32.totalorder %s24, 1
      %p166 = por %p164, %p165
      %p167 = scmp.ne.s32.totalorder %s159, %s162
      %p168 = scmp.eq.s32.totalorder %s24, 0
      %p169 = por %p167, %p168
      %p170 = scmp.ne.s32.totalorder %s159, %s162
      %p171 = scmp.eq.s32.totalorder %s29, 1
      %p172 = por %p170, %p171
      %p173 = scmp.ne.s32.totalorder %s162, %s163
      %p174 = scmp.eq.s32.totalorder %s29, 0
      %p175 = por %p173, %p174
      %p176 = scmp.ne.s32.totalorder %s162, %s163
      %p177 = scmp.eq.s32.totalorder %s30, 1
      %p178 = por %p176, %p177
      %p180 = scmp.ne.s32.totalorder %s163, %s179
      %p181 = scmp.eq.s32.totalorder %s30, 0
      %p182 = por %p180, %p181
      %s183 = ssub.s32 %s24, %s31
      %p184 = scmp.eq.s32.totalorder %s183, 0
      %s186 = sadd.s32 %s185, 1
      %s187 = scalar_select %p184, %s185, %s186
      %p190 = pneg %p184
      %p191 = scmp.eq.s32.totalorder %s24, 1
      %p192 = por %p190, %p191
      %p193 = scmp.ne.s32.totalorder %s185, %s188
      %p194 = scmp.eq.s32.totalorder %s24, 0
      %p195 = por %p193, %p194
      %p196 = scmp.ne.s32.totalorder %s185, %s188
      %p197 = scmp.eq.s32.totalorder %s29, 1
      %p198 = por %p196, %p197
      %p199 = scmp.ne.s32.totalorder %s188, %s189
      %p200 = scmp.eq.s32.totalorder %s29, 0
      %p201 = por %p199, %p200
      %p202 = scmp.ne.s32.totalorder %s188, %s189
      %p203 = scmp.eq.s32.totalorder %s30, 1
      %p204 = por %p202, %p203
      %p206 = scmp.ne.s32.totalorder %s189, %s205
      %p207 = scmp.eq.s32.totalorder %s30, 0
      %p208 = por %p206, %p207
      %s209 = ssub.s32 %s24, %s31
      %p210 = scmp.eq.s32.totalorder %s209, 0
      %s212 = sadd.s32 %s211, 1
      %s213 = scalar_select %p210, %s211, %s212
      %p216 = pneg %p210
      %p217 = scmp.eq.s32.totalorder %s24, 1
      %p218 = por %p216, %p217
      %p219 = scmp.ne.s32.totalorder %s211, %s214
      %p220 = scmp.eq.s32.totalorder %s24, 0
      %p221 = por %p219, %p220
      %p222 = scmp.ne.s32.totalorder %s211, %s214
      %p223 = scmp.eq.s32.totalorder %s29, 1
      %p224 = por %p222, %p223
      %p225 = scmp.ne.s32.totalorder %s214, %s215
      %p226 = scmp.eq.s32.totalorder %s29, 0
      %p227 = por %p225, %p226
      %p228 = scmp.ne.s32.totalorder %s214, %s215
      %p229 = scmp.eq.s32.totalorder %s30, 1
      %p230 = por %p228, %p229
      %p232 = scmp.ne.s32.totalorder %s215, %s231
      %p233 = scmp.eq.s32.totalorder %s30, 0
      %p234 = por %p232, %p233
      %s235 = ssub.s32 %s24, %s31
      %p236 = scmp.eq.s32.totalorder %s235, 0
      %s238 = sadd.s32 %s237, 1
      %s239 = scalar_select %p236, %s237, %s238
      %p242 = pneg %p236
      %p243 = scmp.eq.s32.totalorder %s24, 1
      %p244 = por %p242, %p243
      %p245 = scmp.ne.s32.totalorder %s237, %s240
      %p246 = scmp.eq.s32.totalorder %s24, 0
      %p247 = por %p245, %p246
      %p248 = scmp.ne.s32.totalorder %s237, %s240
      %p249 = scmp.eq.s32.totalorder %s29, 1
      %p250 = por %p248, %p249
      %p251 = scmp.ne.s32.totalorder %s240, %s241
      %p252 = scmp.eq.s32.totalorder %s29, 0
      %p253 = por %p251, %p252
      %p254 = scmp.ne.s32.totalorder %s240, %s241
      %p255 = scmp.eq.s32.totalorder %s30, 1
      %p256 = por %p254, %p255
      %p258 = scmp.ne.s32.totalorder %s241, %s257
      %p259 = scmp.eq.s32.totalorder %s30, 0
      %p260 = por %p258, %p259
      %s261 = ssub.s32 %s24, %s31
      %p262 = scmp.eq.s32.totalorder %s261, 0
      %s264 = sadd.s32 %s263, 1
      %s265 = scalar_select %p262, %s263, %s264
      %p268 = pneg %p262
      %p269 = scmp.eq.s32.totalorder %s24, 1
      %p270 = por %p268, %p269
      %p271 = scmp.ne.s32.totalorder %s263, %s266
      %p272 = scmp.eq.s32.totalorder %s24, 0
      %p273 = por %p271, %p272
      %p274 = scmp.ne.s32.totalorder %s263, %s266
      %p275 = scmp.eq.s32.totalorder %s29, 1
      %p276 = por %p274, %p275
      %p277 = scmp.ne.s32.totalorder %s266, %s267
      %p278 = scmp.eq.s32.totalorder %s29, 0
      %p279 = por %p277, %p278
      %p280 = scmp.ne.s32.totalorder %s266, %s267
      %p281 = scmp.eq.s32.totalorder %s30, 1
      %p282 = por %p280, %p281
      %p284 = scmp.ne.s32.totalorder %s267, %s283
      %p285 = scmp.eq.s32.totalorder %s30, 0
      %p286 = por %p284, %p285
      %s287 = ssub.s32 %s24, %s31
      %p288 = scmp.eq.s32.totalorder %s287, 0
      %s290 = sadd.s32 %s289, 1
      %s291 = scalar_select %p288, %s289, %s290
      %p294 = pneg %p288
      %p295 = scmp.eq.s32.totalorder %s24, 1
      %p296 = por %p294, %p295
      %p297 = scmp.ne.s32.totalorder %s289, %s292
      %p298 = scmp.eq.s32.totalorder %s24, 0
      %p299 = por %p297, %p298
      %p300 = scmp.ne.s32.totalorder %s289, %s292
      %p301 = scmp.eq.s32.totalorder %s29, 1
      %p302 = por %p300, %p301
      %p303 = scmp.ne.s32.totalorder %s292, %s293
      %p304 = scmp.eq.s32.totalorder %s29, 0
      %p305 = por %p303, %p304
      %p306 = scmp.ne.s32.totalorder %s292, %s293
      %p307 = scmp.eq.s32.totalorder %s30, 1
      %p308 = por %p306, %p307
      %p310 = scmp.ne.s32.totalorder %s293, %s309
      %p311 = scmp.eq.s32.totalorder %s30, 0
      %p312 = por %p310, %p311
      %s313 = ssub.s32 %s24, %s31
      %p314 = scmp.eq.s32.totalorder %s313, 0
      %s316 = sadd.s32 %s315, 1
      %s317 = scalar_select %p314, %s315, %s316
      %p320 = pneg %p314
      %p321 = scmp.eq.s32.totalorder %s24, 1
      %p322 = por %p320, %p321
      %p323 = scmp.ne.s32.totalorder %s315, %s318
      %p324 = scmp.eq.s32.totalorder %s24, 0
      %p325 = por %p323, %p324
      %p326 = scmp.ne.s32.totalorder %s315, %s318
      %p327 = scmp.eq.s32.totalorder %s29, 1
      %p328 = por %p326, %p327
      %p329 = scmp.ne.s32.totalorder %s318, %s319
      %p330 = scmp.eq.s32.totalorder %s29, 0
      %p331 = por %p329, %p330
      %p332 = scmp.ne.s32.totalorder %s318, %s319
      %p333 = scmp.eq.s32.totalorder %s30, 1
      %p334 = por %p332, %p333
      %p336 = scmp.ne.s32.totalorder %s319, %s335
      %p337 = scmp.eq.s32.totalorder %s30, 0
      %p338 = por %p336, %p337
      %s339 = ssub.s32 %s24, %s31
      %p340 = scmp.eq.s32.totalorder %s339, 0
      %s342 = sadd.s32 %s341, 1
      %s343 = scalar_select %p340, %s341, %s342
      %p346 = pneg %p340
      %p347 = scmp.eq.s32.totalorder %s24, 1
      %p348 = por %p346, %p347
      %p349 = scmp.ne.s32.totalorder %s341, %s344
      %p350 = scmp.eq.s32.totalorder %s24, 0
      %p351 = por %p349, %p350
      %p352 = scmp.ne.s32.totalorder %s341, %s344
      %p353 = scmp.eq.s32.totalorder %s29, 1
      %p354 = por %p352, %p353
      %p355 = scmp.ne.s32.totalorder %s344, %s345
      %p356 = scmp.eq.s32.totalorder %s29, 0
      %p357 = por %p355, %p356
      %p358 = scmp.ne.s32.totalorder %s344, %s345
      %p359 = scmp.eq.s32.totalorder %s30, 1
      %p360 = por %p358, %p359
      %p362 = scmp.ne.s32.totalorder %s345, %s361
      %p363 = scmp.eq.s32.totalorder %s30, 0
      %p364 = por %p362, %p363
      %s365 = ssub.s32 %s24, %s31
      %p366 = scmp.eq.s32.totalorder %s365, 0
      %s368 = sadd.s32 %s367, 1
      %s369 = scalar_select %p366, %s367, %s368
      %p372 = pneg %p366
      %p373 = scmp.eq.s32.totalorder %s24, 1
      %p374 = por %p372, %p373
      %p375 = scmp.ne.s32.totalorder %s367, %s370
      %p376 = scmp.eq.s32.totalorder %s24, 0
      %p377 = por %p375, %p376
      %p378 = scmp.ne.s32.totalorder %s367, %s370
      %p379 = scmp.eq.s32.totalorder %s29, 1
      %p380 = por %p378, %p379
      %p381 = scmp.ne.s32.totalorder %s370, %s371
      %p382 = scmp.eq.s32.totalorder %s29, 0
      %p383 = por %p381, %p382
      %p384 = scmp.ne.s32.totalorder %s370, %s371
      %p385 = scmp.eq.s32.totalorder %s30, 1
      %p386 = por %p384, %p385
      %p388 = scmp.ne.s32.totalorder %s371, %s387
      %p389 = scmp.eq.s32.totalorder %s30, 0
      %p390 = por %p388, %p389
      %s391 = ssub.s32 %s24, %s31
      %p392 = scmp.eq.s32.totalorder %s391, 0
      %s394 = sadd.s32 %s393, 1
      %s395 = scalar_select %p392, %s393, %s394
      %p398 = pneg %p392
      %p399 = scmp.eq.s32.totalorder %s24, 1
      %p400 = por %p398, %p399
      %p401 = scmp.ne.s32.totalorder %s393, %s396
      %p402 = scmp.eq.s32.totalorder %s24, 0
      %p403 = por %p401, %p402
      %p404 = scmp.ne.s32.totalorder %s393, %s396
      %p405 = scmp.eq.s32.totalorder %s29, 1
      %p406 = por %p404, %p405
      %p407 = scmp.ne.s32.totalorder %s396, %s397
      %p408 = scmp.eq.s32.totalorder %s29, 0
      %p409 = por %p407, %p408
      %p410 = scmp.ne.s32.totalorder %s396, %s397
      %p411 = scmp.eq.s32.totalorder %s30, 1
      %p412 = por %p410, %p411
      %p414 = scmp.ne.s32.totalorder %s397, %s413
      %p415 = scmp.eq.s32.totalorder %s30, 0
      %p416 = por %p414, %p415
      %s417 = ssub.s32 %s24, %s31
      %p418 = scmp.eq.s32.totalorder %s417, 0
      %s420 = sadd.s32 %s419, 1
      %s421 = scalar_select %p418, %s419, %s420
      %p424 = pneg %p418
      %p425 = scmp.eq.s32.totalorder %s24, 1
      %p426 = por %p424, %p425
      %p427 = scmp.ne.s32.totalorder %s419, %s422
      %p428 = scmp.eq.s32.totalorder %s24, 0
      %p429 = por %p427, %p428
      %p430 = scmp.ne.s32.totalorder %s419, %s422
      %p431 = scmp.eq.s32.totalorder %s29, 1
      %p432 = por %p430, %p431
      %p433 = scmp.ne.s32.totalorder %s422, %s423
      %p434 = scmp.eq.s32.totalorder %s29, 0
      %p435 = por %p433, %p434
      %p436 = scmp.ne.s32.totalorder %s422, %s423
      %p437 = scmp.eq.s32.totalorder %s30, 1
      %p438 = por %p436, %p437
      %p440 = scmp.ne.s32.totalorder %s423, %s439
      %p441 = scmp.eq.s32.totalorder %s30, 0
      %p442 = por %p440, %p441
      %s443 = ssub.s32 %s24, %s31
      %p444 = scmp.eq.s32.totalorder %s443, 0
      %s446 = sadd.s32 %s445, 1
      %s447 = scalar_select %p444, %s445, %s446
      %p450 = pneg %p444
      %p451 = scmp.eq.s32.totalorder %s24, 1
      %p452 = por %p450, %p451
      %p453 = scmp.ne.s32.totalorder %s445, %s448
      %p454 = scmp.eq.s32.totalorder %s24, 0
      %p455 = por %p453, %p454
      %p456 = scmp.ne.s32.totalorder %s445, %s448
      %p457 = scmp.eq.s32.totalorder %s29, 1
      %p458 = por %p456, %p457
      %p459 = scmp.ne.s32.totalorder %s448, %s449
      %p460 = scmp.eq.s32.totalorder %s29, 0
      %p461 = por %p459, %p460
      %p462 = scmp.ne.s32.totalorder %s448, %s449
      %p463 = scmp.eq.s32.totalorder %s30, 1
      %p464 = por %p462, %p463
      %p466 = scmp.ne.s32.totalorder %s449, %s465
      %p467 = scmp.eq.s32.totalorder %s30, 0
      %p468 = por %p466, %p467
      %s470 = sadd.s32 %s469, 1
      %p473 = scmp.eq.s32.totalorder %s24, 1
      %p474 = scmp.ne.s32.totalorder %s469, %s471
      %p475 = scmp.eq.s32.totalorder %s24, 0
      %p476 = por %p474, %p475
      %p477 = scmp.ne.s32.totalorder %s469, %s471
      %p478 = scmp.eq.s32.totalorder %s29, 1
      %p479 = por %p477, %p478
      %p480 = scmp.ne.s32.totalorder %s471, %s472
      %p481 = scmp.eq.s32.totalorder %s29, 0
      %p482 = por %p480, %p481
      %p483 = scmp.ne.s32.totalorder %s471, %s472
      %p484 = scmp.eq.s32.totalorder %s30, 1
      %p485 = por %p483, %p484
      %p487 = scmp.ne.s32.totalorder %s472, %s486
      %p488 = scmp.eq.s32.totalorder %s30, 0
      %p489 = por %p487, %p488
      %p490 = scmp.le.s32.totalorder 1, %s24
      %p491 = scmp.lt.s32.totalorder %s24, 3
      %p492 = pnand %p490, %p491
      %p493 = pneg %p492
      // Predicated region
      $region9: #{tpu_custom_call.1} parent=5 // pred_check
        _
      $region10: #{tpu_custom_call.1} parent=5 // pred_check_branch
        %495 = sbr.rel (%p492) target = $region12
      $region11: #{tpu_custom_call.1} parent=5 // pred_region
        %s496 = ssub.s32 %s24, 1
        // Predicated region
        $region13: #{tpu_custom_call.1} parent=11 // pred_check
          %p497 = pneg %p45
        $region14: #{tpu_custom_call.1} parent=11 // pred_check_branch
          %499 = sbr.rel (%p497) target = $region16
        $region15: #{tpu_custom_call.1} parent=11 // pred_region
          _
        $region16: #{tpu_custom_call.1} parent=11 // pred_fallthru
          _
      $region12: #{tpu_custom_call.1} parent=5 // pred_fallthru
        _
      %p500 = scmp.lt.s32.totalorder %s24, 2
      // Predicated region
      $region17: #{tpu_custom_call.1} parent=5 // pred_check
        %p501 = pneg %p500
      $region18: #{tpu_custom_call.1} parent=5 // pred_check_branch
        %503 = sbr.rel (%p501) target = $region20
      $region19: #{tpu_custom_call.1} parent=5 // pred_region
        // Predicated region
        $region21: #{tpu_custom_call.1} parent=19 // pred_check
          %p504 = pneg %p65
        $region22: #{tpu_custom_call.1} parent=19 // pred_check_branch
          %506 = sbr.rel (%p504) target = $region24
        $region23: #{tpu_custom_call.1} parent=19 // pred_region
          %p507 = scmp.lt.s32.totalorder %s24, 1
          %s508 = scalar_select %p507, %s24, 1
          %s509 = smul.addr %s508, 16
          %s510 = smul.addr %s509, 8
          %s511 = scalar_lea.vmem %s1, %s510
        $region24: #{tpu_custom_call.1} parent=19 // pred_fallthru
          _
        // Predicated region
        $region25: #{tpu_custom_call.1} parent=19 // pred_check
          %p512 = pneg %p91
        $region26: #{tpu_custom_call.1} parent=19 // pred_check_branch
          %514 = sbr.rel (%p512) target = $region28
        $region27: #{tpu_custom_call.1} parent=19 // pred_region
          %p515 = scmp.lt.s32.totalorder %s24, 1
          %s516 = scalar_select %p515, %s24, 1
          %s517 = smul.addr %s516, 16
          %s518 = smul.addr %s517, 8
          %s519 = scalar_lea.vmem %s2, %s518
        $region28: #{tpu_custom_call.1} parent=19 // pred_fallthru
          _
        // Predicated region
        $region29: #{tpu_custom_call.1} parent=19 // pred_check
          %p520 = pneg %p117
        $region30: #{tpu_custom_call.1} parent=19 // pred_check_branch
          %522 = sbr.rel (%p520) target = $region32
        $region31: #{tpu_custom_call.1} parent=19 // pred_region
          %p523 = scmp.lt.s32.totalorder %s24, 1
          %s524 = scalar_select %p523, %s24, 1
          %s525 = smul.addr %s524, 16
          %s526 = smul.addr %s525, 8
          %s527 = scalar_lea.vmem %s3, %s526
        $region32: #{tpu_custom_call.1} parent=19 // pred_fallthru
          _
        // Predicated region
        $region33: #{tpu_custom_call.1} parent=19 // pred_check
          %p528 = pneg %p143
        $region34: #{tpu_custom_call.1} parent=19 // pred_check_branch
          %530 = sbr.rel (%p528) target = $region36
        $region35: #{tpu_custom_call.1} parent=19 // pred_region
          %p531 = scmp.lt.s32.totalorder %s24, 1
          %s532 = scalar_select %p531, %s24, 1
          %s533 = smul.addr %s532, 4
          %s534 = scalar_lea.vmem %s4, %s533
        $region36: #{tpu_custom_call.1} parent=19 // pred_fallthru
          _
        // Predicated region
        $region37: #{tpu_custom_call.1} parent=19 // pred_check
          %p535 = pneg %p169
        $region38: #{tpu_custom_call.1} parent=19 // pred_check_branch
          %537 = sbr.rel (%p535) target = $region40
        $region39: #{tpu_custom_call.1} parent=19 // pred_region
          %p538 = scmp.lt.s32.totalorder %s24, 1
          %s539 = scalar_select %p538, %s24, 1
          %s540 = smul.addr %s539, 4
          %s541 = scalar_lea.vmem %s5, %s540
        $region40: #{tpu_custom_call.1} parent=19 // pred_fallthru
          _
        // Predicated region
        $region41: #{tpu_custom_call.1} parent=19 // pred_check
          %p542 = pneg %p195
        $region42: #{tpu_custom_call.1} parent=19 // pred_check_branch
          %544 = sbr.rel (%p542) target = $region44
        $region43: #{tpu_custom_call.1} parent=19 // pred_region
          %p545 = scmp.lt.s32.totalorder %s24, 1
          %s546 = scalar_select %p545, %s24, 1
          %s547 = smul.addr %s546, 4
          %s548 = scalar_lea.vmem %s6, %s547
        $region44: #{tpu_custom_call.1} parent=19 // pred_fallthru
          _
        // Predicated region
        $region45: #{tpu_custom_call.1} parent=19 // pred_check
          %p549 = pneg %p221
        $region46: #{tpu_custom_call.1} parent=19 // pred_check_branch
          %551 = sbr.rel (%p549) target = $region48
        $region47: #{tpu_custom_call.1} parent=19 // pred_region
          %p552 = scmp.lt.s32.totalorder %s24, 1
          %s553 = scalar_select %p552, %s24, 1
          %s554 = smul.addr %s553, 4
          %s555 = smul.addr %s554, 8
          %s556 = scalar_lea.vmem %s7, %s555
        $region48: #{tpu_custom_call.1} parent=19 // pred_fallthru
          _
        // Predicated region
        $region49: #{tpu_custom_call.1} parent=19 // pred_check
          %p557 = pneg %p247
        $region50: #{tpu_custom_call.1} parent=19 // pred_check_branch
          %559 = sbr.rel (%p557) target = $region52
        $region51: #{tpu_custom_call.1} parent=19 // pred_region
          %p560 = scmp.lt.s32.totalorder %s24, 1
          %s561 = scalar_select %p560, %s24, 1
          %s562 = scalar_lea.vmem %s8, %s561
        $region52: #{tpu_custom_call.1} parent=19 // pred_fallthru
          _
        // Predicated region
        $region53: #{tpu_custom_call.1} parent=19 // pred_check
          %p563 = pneg %p273
        $region54: #{tpu_custom_call.1} parent=19 // pred_check_branch
          %565 = sbr.rel (%p563) target = $region56
        $region55: #{tpu_custom_call.1} parent=19 // pred_region
          %p566 = scmp.lt.s32.totalorder %s24, 1
          %s567 = scalar_select %p566, %s24, 1
          %s568 = scalar_lea.vmem %s9, %s567
        $region56: #{tpu_custom_call.1} parent=19 // pred_fallthru
          _
        // Predicated region
        $region57: #{tpu_custom_call.1} parent=19 // pred_check
          %p569 = pneg %p299
        $region58: #{tpu_custom_call.1} parent=19 // pred_check_branch
          %571 = sbr.rel (%p569) target = $region60
        $region59: #{tpu_custom_call.1} parent=19 // pred_region
          %p572 = scmp.lt.s32.totalorder %s24, 1
          %s573 = scalar_select %p572, %s24, 1
          %s574 = scalar_lea.vmem %s10, %s573
        $region60: #{tpu_custom_call.1} parent=19 // pred_fallthru
          _
        // Predicated region
        $region61: #{tpu_custom_call.1} parent=19 // pred_check
          %p575 = pneg %p325
        $region62: #{tpu_custom_call.1} parent=19 // pred_check_branch
          %577 = sbr.rel (%p575) target = $region64
        $region63: #{tpu_custom_call.1} parent=19 // pred_region
          %p578 = scmp.lt.s32.totalorder %s24, 1
          %s579 = scalar_select %p578, %s24, 1
          %s580 = scalar_lea.vmem %s11, %s579
        $region64: #{tpu_custom_call.1} parent=19 // pred_fallthru
          _
        // Predicated region
        $region65: #{tpu_custom_call.1} parent=19 // pred_check
          %p581 = pneg %p351
        $region66: #{tpu_custom_call.1} parent=19 // pred_check_branch
          %583 = sbr.rel (%p581) target = $region68
        $region67: #{tpu_custom_call.1} parent=19 // pred_region
          %p584 = scmp.lt.s32.totalorder %s24, 1
          %s585 = scalar_select %p584, %s24, 1
          %s586 = scalar_lea.vmem %s12, %s585
        $region68: #{tpu_custom_call.1} parent=19 // pred_fallthru
          _
        // Predicated region
        $region69: #{tpu_custom_call.1} parent=19 // pred_check
          %p587 = pneg %p377
        $region70: #{tpu_custom_call.1} parent=19 // pred_check_branch
          %589 = sbr.rel (%p587) target = $region72
        $region71: #{tpu_custom_call.1} parent=19 // pred_region
          %p590 = scmp.lt.s32.totalorder %s24, 1
          %s591 = scalar_select %p590, %s24, 1
          %s592 = smul.addr %s591, 4
          %s593 = smul.addr %s592, 8
          %s594 = scalar_lea.vmem %s13, %s593
        $region72: #{tpu_custom_call.1} parent=19 // pred_fallthru
          _
        // Predicated region
        $region73: #{tpu_custom_call.1} parent=19 // pred_check
          %p595 = pneg %p403
        $region74: #{tpu_custom_call.1} parent=19 // pred_check_branch
          %597 = sbr.rel (%p595) target = $region76
        $region75: #{tpu_custom_call.1} parent=19 // pred_region
          %p598 = scmp.lt.s32.totalorder %s24, 1
          %s599 = scalar_select %p598, %s24, 1
          %s600 = scalar_lea.vmem %s14, %s599
        $region76: #{tpu_custom_call.1} parent=19 // pred_fallthru
          _
        // Predicated region
        $region77: #{tpu_custom_call.1} parent=19 // pred_check
          %p601 = pneg %p429
        $region78: #{tpu_custom_call.1} parent=19 // pred_check_branch
          %603 = sbr.rel (%p601) target = $region80
        $region79: #{tpu_custom_call.1} parent=19 // pred_region
          %p604 = scmp.lt.s32.totalorder %s24, 1
          %s605 = scalar_select %p604, %s24, 1
          %s606 = smul.addr %s605, 8
          %s607 = smul.addr %s606, 8
          %s608 = scalar_lea.vmem %s15, %s607
        $region80: #{tpu_custom_call.1} parent=19 // pred_fallthru
          _
        // Predicated region
        $region81: #{tpu_custom_call.1} parent=19 // pred_check
          %p609 = pneg %p455
        $region82: #{tpu_custom_call.1} parent=19 // pred_check_branch
          %611 = sbr.rel (%p609) target = $region84
        $region83: #{tpu_custom_call.1} parent=19 // pred_region
          %p612 = scmp.lt.s32.totalorder %s24, 1
          %s613 = scalar_select %p612, %s24, 1
          %s614 = scalar_lea.vmem %s16, %s613
        $region84: #{tpu_custom_call.1} parent=19 // pred_fallthru
          _
      $region20: #{tpu_custom_call.1} parent=5 // pred_fallthru
        _
      %p615 = scmp.le.s32.totalorder 1, %s24
      %p616 = scmp.lt.s32.totalorder %s24, 3
      %p617 = pnand %p615, %p616
      %p618 = pneg %p617
      // Predicated region
      $region85: #{tpu_custom_call.1} parent=5 // pred_check
        _
      $region86: #{tpu_custom_call.1} parent=5 // pred_check_branch
        %620 = sbr.rel (%p617) target = $region88
      $region87: #{tpu_custom_call.1} parent=5 // pred_region
        %s621 = ssub.s32 %s24, 1
        %p622 = pneg %p45
        %p623 = pneg %p42
        %p624 = scmp.lt.s32.totalorder %s29, 1
        %s625 = scalar_select %p624, %s29, 1
        %s626 = smul.addr %s625, 16
        %s627 = smul.addr %s626, 8
        %s628 = scalar_lea.vmem %s1, %s627
        %p629 = pneg %p71
        %p630 = pneg %p68
        %p631 = scmp.lt.s32.totalorder %s29, 1
        %s632 = scalar_select %p631, %s29, 1
        %s633 = smul.addr %s632, 16
        %s634 = smul.addr %s633, 8
        %s635 = scalar_lea.vmem %s2, %s634
        %p636 = pneg %p97
        %p637 = pneg %p94
        %p638 = scmp.lt.s32.totalorder %s29, 1
        %s639 = scalar_select %p638, %s29, 1
        %s640 = smul.addr %s639, 16
        %s641 = smul.addr %s640, 8
        %s642 = scalar_lea.vmem %s3, %s641
        %p643 = pneg %p123
        %p644 = pneg %p120
        %p645 = scmp.lt.s32.totalorder %s29, 1
        %s646 = scalar_select %p645, %s29, 1
        %s647 = smul.addr %s646, 4
        %s648 = scalar_lea.vmem %s4, %s647
        %p649 = pneg %p149
        %p650 = pneg %p146
        %p651 = scmp.lt.s32.totalorder %s29, 1
        %s652 = scalar_select %p651, %s29, 1
        %s653 = smul.addr %s652, 4
        %s654 = scalar_lea.vmem %s5, %s653
        %p655 = pneg %p175
        %p656 = pneg %p172
        %p657 = scmp.lt.s32.totalorder %s29, 1
        %s658 = scalar_select %p657, %s29, 1
        %s659 = smul.addr %s658, 4
        %s660 = scalar_lea.vmem %s6, %s659
        %p661 = pneg %p201
        %p662 = pneg %p198
        %p663 = scmp.lt.s32.totalorder %s29, 1
        %s664 = scalar_select %p663, %s29, 1
        %s665 = smul.addr %s664, 4
        %s666 = smul.addr %s665, 8
        %s667 = scalar_lea.vmem %s7, %s666
        %p668 = pneg %p227
        %p669 = pneg %p224
        %p670 = scmp.lt.s32.totalorder %s29, 1
        %s671 = scalar_select %p670, %s29, 1
        %s672 = scalar_lea.vmem %s8, %s671
        %p673 = pneg %p253
        %p674 = pneg %p250
        %p675 = scmp.lt.s32.totalorder %s29, 1
        %s676 = scalar_select %p675, %s29, 1
        %s677 = scalar_lea.vmem %s9, %s676
        %p678 = pneg %p279
        %p679 = pneg %p276
        %p680 = scmp.lt.s32.totalorder %s29, 1
        %s681 = scalar_select %p680, %s29, 1
        %s682 = scalar_lea.vmem %s10, %s681
        %p683 = pneg %p305
        %p684 = pneg %p302
        %p685 = scmp.lt.s32.totalorder %s29, 1
        %s686 = scalar_select %p685, %s29, 1
        %s687 = scalar_lea.vmem %s11, %s686
        %p688 = pneg %p331
        %p689 = pneg %p328
        %p690 = scmp.lt.s32.totalorder %s29, 1
        %s691 = scalar_select %p690, %s29, 1
        %s692 = scalar_lea.vmem %s12, %s691
        %p693 = pneg %p357
        %p694 = pneg %p354
        %p695 = scmp.lt.s32.totalorder %s29, 1
        %s696 = scalar_select %p695, %s29, 1
        %s697 = smul.addr %s696, 4
        %s698 = smul.addr %s697, 8
        %s699 = scalar_lea.vmem %s13, %s698
        %p700 = pneg %p383
        %p701 = pneg %p380
        %p702 = scmp.lt.s32.totalorder %s29, 1
        %s703 = scalar_select %p702, %s29, 1
        %s704 = scalar_lea.vmem %s14, %s703
        %p705 = pneg %p409
        %p706 = pneg %p406
        %p707 = scmp.lt.s32.totalorder %s29, 1
        %s708 = scalar_select %p707, %s29, 1
        %s709 = smul.addr %s708, 8
        %s710 = smul.addr %s709, 8
        %s711 = scalar_lea.vmem %s15, %s710
        %p712 = pneg %p435
        %p713 = pneg %p432
        %p714 = scmp.lt.s32.totalorder %s29, 1
        %s715 = scalar_select %p714, %s29, 1
        %s716 = scalar_lea.vmem %s16, %s715
        %p717 = pneg %p461
        %p718 = pneg %p458
        %p719 = pneg %p482
        %p720 = pneg %p479
        %p721 = scmp.lt.s32.totalorder %s29, 1
        %s722 = scalar_select %p721, %s29, 1
        %s723 = smul.addr %s722, 16
        %s724 = smul.addr %s723, 8
        %s725 = scalar_lea.vmem %s1, %s724
        %p726 = scmp.lt.s32.totalorder %s29, 1
        %s727 = scalar_select %p726, %s29, 1
        %s728 = smul.addr %s727, 16
        %s729 = smul.addr %s728, 8
        %s730 = scalar_lea.vmem %s2, %s729
        %p731 = scmp.lt.s32.totalorder %s29, 1
        %s732 = scalar_select %p731, %s29, 1
        %s733 = smul.addr %s732, 16
        %s734 = smul.addr %s733, 8
        %s735 = scalar_lea.vmem %s3, %s734
        %p736 = scmp.lt.s32.totalorder %s29, 1
        %s737 = scalar_select %p736, %s29, 1
        %s738 = smul.addr %s737, 4
        %s739 = scalar_lea.vmem %s4, %s738
        %p740 = scmp.lt.s32.totalorder %s29, 1
        %s741 = scalar_select %p740, %s29, 1
        %s742 = smul.addr %s741, 4
        %s743 = scalar_lea.vmem %s5, %s742
        %p744 = scmp.lt.s32.totalorder %s29, 1
        %s745 = scalar_select %p744, %s29, 1
        %s746 = smul.addr %s745, 4
        %s747 = scalar_lea.vmem %s6, %s746
        %p748 = scmp.lt.s32.totalorder %s29, 1
        %s749 = scalar_select %p748, %s29, 1
        %s750 = smul.addr %s749, 4
        %s751 = smul.addr %s750, 8
        %s752 = scalar_lea.vmem %s7, %s751
        %p753 = scmp.lt.s32.totalorder %s29, 1
        %s754 = scalar_select %p753, %s29, 1
        %s755 = scalar_lea.vmem %s8, %s754
        %p756 = scmp.lt.s32.totalorder %s29, 1
        %s757 = scalar_select %p756, %s29, 1
        %s758 = scalar_lea.vmem %s9, %s757
        %p759 = scmp.lt.s32.totalorder %s29, 1
        %s760 = scalar_select %p759, %s29, 1
        %s761 = scalar_lea.vmem %s10, %s760
        %p762 = scmp.lt.s32.totalorder %s29, 1
        %s763 = scalar_select %p762, %s29, 1
        %s764 = scalar_lea.vmem %s11, %s763
        %p765 = scmp.lt.s32.totalorder %s29, 1
        %s766 = scalar_select %p765, %s29, 1
        %s767 = scalar_lea.vmem %s12, %s766
        %p768 = scmp.lt.s32.totalorder %s29, 1
        %s769 = scalar_select %p768, %s29, 1
        %s770 = smul.addr %s769, 4
        %s771 = smul.addr %s770, 8
        %s772 = scalar_lea.vmem %s13, %s771
        %p773 = scmp.lt.s32.totalorder %s29, 1
        %s774 = scalar_select %p773, %s29, 1
        %s775 = scalar_lea.vmem %s14, %s774
        %p776 = scmp.lt.s32.totalorder %s29, 1
        %s777 = scalar_select %p776, %s29, 1
        %s778 = smul.addr %s777, 8
        %s779 = smul.addr %s778, 8
        %s780 = scalar_lea.vmem %s15, %s779
        %p781 = scmp.lt.s32.totalorder %s29, 1
        %s782 = scalar_select %p781, %s29, 1
        %s783 = scalar_lea.vmem %s16, %s782
        %p784 = scmp.eq.s32.totalorder %s29, 0
        // Predicated region
        $region89: #{tpu_custom_call.1} parent=87 // pred_check
          %p785 = pneg %p784
        $region90: #{tpu_custom_call.1} parent=87 // pred_check_branch
          %787 = sbr.rel (%p785) target = $region92
        $region91: #{tpu_custom_call.1} parent=87 // pred_region
          %v788 = vld [vmem:[%s0] sm:$0xff]
          %v789 = vld [vmem:[%s0 + $0x8] sm:$0xff]
          %vm790 = vcmask 261120
          %791 = vst.msk [vmem:[#allocation2] sm:$0xff] %vm790, %v788
          %792 = vst.msk [vmem:[#allocation2 + $0x8] sm:$0xff] %vm790, %v789
        $region92: #{tpu_custom_call.1} parent=87 // pred_fallthru
          _
        %v793 = vld [vmem:[#allocation2] sm:$0xff]
        %v794 = vld [vmem:[#allocation2 + $0x8] sm:$0xff]
        %v795 = vld [vmem:[%s755] sm:$0x1]
        %v797 = vlaneseq
        %v798 = vshrl.u32 %v797, 7
        %v799 = vsub.s32 0, %v798
        %v800 = vrot.slane %v795, %v799
        %v802 = vld [vmem:[%s725] sm:$0xff]
        %v803 = vld [vmem:[%s725 + $0x8] sm:$0xff]
        %v804 = vld [vmem:[%s725 + $0x10] sm:$0xff]
        %v805 = vld [vmem:[%s725 + $0x18] sm:$0xff]
        %v806 = vld [vmem:[%s739] sm:$0x1]
        %v808 = vlaneseq
        %v809 = vshrl.u32 %v808, 7
        %v810 = vsub.s32 0, %v809
        %v811 = vrot.slane %v806, %v810
        %vm813 = vcmask 261120
        %v815 = vsel %vm813, %v793, 0
        %v818 = vsel %vm813, %v794, 0
        %820 = vmatprep.subr.mxu0 0.0
        %821 = vmatpush1.msra.mxu0 %v802
        %822 = vmatprep.subr.mxu0 0.0
        %823 = vmatpush1.msra.mxu0 %v803
        %824 = vmatprep.subr.mxu0 0.0
        %825 = vmatpush1.msra.mxu0 %v804
        %826 = vmatprep.subr.mxu0 0.0
        %827 = vmatpush1.msra.mxu0 %v805
        %828 = vmatprep.subr.mxu0 0.0
        %829 = vmatpush1.msra.mxu0 0.0
        %830 = vmatprep.subr.mxu0 0.0
        %831 = vmatpush1.msra.mxu0 0.0
        %832 = vmatprep.subr.mxu0 0.0
        %833 = vmatpush1.msra.mxu0 0.0
        %834 = vmatprep.subr.mxu0 0.0
        %835 = vmatpush1.msra.mxu0 0.0
        %836 = vmatprep.subr.mxu0 0.0
        %837 = vmatpush1.msra.mxu0 0.0
        %838 = vmatprep.subr.mxu0 0.0
        %839 = vmatpush1.msra.mxu0 0.0
        %840 = vmatprep.subr.mxu0 0.0
        %841 = vmatpush1.msra.mxu0 0.0
        %842 = vmatprep.subr.mxu0 0.0
        %843 = vmatpush1.msra.mxu0 0.0
        %844 = vmatprep.subr.mxu0 0.0
        %845 = vmatpush1.msra.mxu0 0.0
        %846 = vmatprep.subr.mxu0 0.0
        %847 = vmatpush1.msra.mxu0 0.0
        %848 = vmatprep.subr.mxu0 0.0
        %849 = vmatpush1.msra.mxu0 0.0
        %850 = vmatprep.subr.mxu0 0.0
        %851 = vmatpush1.msra.mxu0 0.0
        %852 = vmatprep.subr.mxu0 0.0
        %853 = vmatpush1.msra.mxu0 0.0
        %854 = vmatprep.subr.mxu0 0.0
        %855 = vmatpush1.msra.mxu0 0.0
        %856 = vmatprep.subr.mxu0 0.0
        %857 = vmatpush1.msra.mxu0 0.0
        %858 = vmatprep.subr.mxu0 0.0
        %859 = vmatpush1.msra.mxu0 0.0
        %860 = vmatprep.subr.mxu0 0.0
        %861 = vmatpush1.msra.mxu0 0.0
        %862 = vmatprep.subr.mxu0 0.0
        %863 = vmatpush1.msra.mxu0 0.0
        %864 = vmatprep.subr.mxu0 0.0
        %865 = vmatpush1.msra.mxu0 0.0
        %866 = vmatprep.subr.mxu0 0.0
        %867 = vmatpush1.msra.mxu0 0.0
        %868 = vmatprep.subr.mxu0 0.0
        %869 = vmatpush1.msra.mxu0 0.0
        %870 = vmatprep.subr.mxu0 0.0
        %871 = vmatpush1.msra.mxu0 0.0
        %872 = vmatprep.subr.mxu0 0.0
        %873 = vmatpush1.msra.mxu0 0.0
        %874 = vmatprep.subr.mxu0 0.0
        %875 = vmatpush1.msra.mxu0 0.0
        %876 = vmatprep.subr.mxu0 0.0
        %877 = vmatpush1.msra.mxu0 0.0
        %878 = vmatprep.subr.mxu0 0.0
        %879 = vmatpush1.msra.mxu0 0.0
        %880 = vmatprep.subr.mxu0 0.0
        %881 = vmatpush1.msra.mxu0 0.0
        %882 = vmatprep.subr.mxu0 0.0
        %883 = vmatpush1.msra.mxu0 0.0
        %884 = vmatprep.mubr.f32.mxu0 0.0
        %885 = vmatmul.mubr.f32.gmra.mrb[0].mxu0 %v815
        %v886 = vpop.f32.mrb[0].mxu0
        %v887 = vadd.f32 %v811, %v886
        %v888 = vpop.f32.mrb[0].mxu0
        %889 = vmatprep.mubr.f32.mxu0 0.0
        %890 = vmatmul.mubr.f32.gmra.mrb[0].mxu0 %v818
        %v891 = vpop.f32.mrb[0].mxu0
        %v892 = vadd.f32 %v811, %v891
        %v893 = vpop.f32.mrb[0].mxu0
        %894 = vdwg.mxu0
        %v895 = vld [vmem:[%s730] sm:$0xff]
        %v896 = vld [vmem:[%s730 + $0x8] sm:$0xff]
        %v897 = vld [vmem:[%s730 + $0x10] sm:$0xff]
        %v898 = vld [vmem:[%s730 + $0x18] sm:$0xff]
        %v899 = vld [vmem:[%s743] sm:$0x1]
        %v901 = vlaneseq
        %v902 = vshrl.u32 %v901, 7
        %v903 = vsub.s32 0, %v902
        %v904 = vrot.slane %v899, %v903
        %906 = vmatprep.subr.mxu0 0.0
        %907 = vmatpush1.msra.mxu0 %v895
        %908 = vmatprep.subr.mxu0 0.0
        %909 = vmatpush1.msra.mxu0 %v896
        %910 = vmatprep.subr.mxu0 0.0
        %911 = vmatpush1.msra.mxu0 %v897
        %912 = vmatprep.subr.mxu0 0.0
        %913 = vmatpush1.msra.mxu0 %v898
        %914 = vmatprep.subr.mxu0 0.0
        %915 = vmatpush1.msra.mxu0 0.0
        %916 = vmatprep.subr.mxu0 0.0
        %917 = vmatpush1.msra.mxu0 0.0
        %918 = vmatprep.subr.mxu0 0.0
        %919 = vmatpush1.msra.mxu0 0.0
        %920 = vmatprep.subr.mxu0 0.0
        %921 = vmatpush1.msra.mxu0 0.0
        %922 = vmatprep.subr.mxu0 0.0
        %923 = vmatpush1.msra.mxu0 0.0
        %924 = vmatprep.subr.mxu0 0.0
        %925 = vmatpush1.msra.mxu0 0.0
        %926 = vmatprep.subr.mxu0 0.0
        %927 = vmatpush1.msra.mxu0 0.0
        %928 = vmatprep.subr.mxu0 0.0
        %929 = vmatpush1.msra.mxu0 0.0
        %930 = vmatprep.subr.mxu0 0.0
        %931 = vmatpush1.msra.mxu0 0.0
        %932 = vmatprep.subr.mxu0 0.0
        %933 = vmatpush1.msra.mxu0 0.0
        %934 = vmatprep.subr.mxu0 0.0
        %935 = vmatpush1.msra.mxu0 0.0
        %936 = vmatprep.subr.mxu0 0.0
        %937 = vmatpush1.msra.mxu0 0.0
        %938 = vmatprep.subr.mxu0 0.0
        %939 = vmatpush1.msra.mxu0 0.0
        %940 = vmatprep.subr.mxu0 0.0
        %941 = vmatpush1.msra.mxu0 0.0
        %942 = vmatprep.subr.mxu0 0.0
        %943 = vmatpush1.msra.mxu0 0.0
        %944 = vmatprep.subr.mxu0 0.0
        %945 = vmatpush1.msra.mxu0 0.0
        %946 = vmatprep.subr.mxu0 0.0
        %947 = vmatpush1.msra.mxu0 0.0
        %948 = vmatprep.subr.mxu0 0.0
        %949 = vmatpush1.msra.mxu0 0.0
        %950 = vmatprep.subr.mxu0 0.0
        %951 = vmatpush1.msra.mxu0 0.0
        %952 = vmatprep.subr.mxu0 0.0
        %953 = vmatpush1.msra.mxu0 0.0
        %954 = vmatprep.subr.mxu0 0.0
        %955 = vmatpush1.msra.mxu0 0.0
        %956 = vmatprep.subr.mxu0 0.0
        %957 = vmatpush1.msra.mxu0 0.0
        %958 = vmatprep.subr.mxu0 0.0
        %959 = vmatpush1.msra.mxu0 0.0
        %960 = vmatprep.subr.mxu0 0.0
        %961 = vmatpush1.msra.mxu0 0.0
        %962 = vmatprep.subr.mxu0 0.0
        %963 = vmatpush1.msra.mxu0 0.0
        %964 = vmatprep.subr.mxu0 0.0
        %965 = vmatpush1.msra.mxu0 0.0
        %966 = vmatprep.subr.mxu0 0.0
        %967 = vmatpush1.msra.mxu0 0.0
        %968 = vmatprep.subr.mxu0 0.0
        %969 = vmatpush1.msra.mxu0 0.0
        %970 = vmatprep.mubr.f32.mxu0 0.0
        %971 = vmatmul.mubr.f32.gmra.mrb[0].mxu0 %v815
        %v972 = vpop.f32.mrb[0].mxu0
        %v973 = vadd.f32 %v904, %v972
        %v974 = vpop.f32.mrb[0].mxu0
        %975 = vmatprep.mubr.f32.mxu0 0.0
        %976 = vmatmul.mubr.f32.gmra.mrb[0].mxu0 %v818
        %v977 = vpop.f32.mrb[0].mxu0
        %v978 = vadd.f32 %v904, %v977
        %v979 = vpop.f32.mrb[0].mxu0
        %980 = vdwg.mxu0
        %v981 = vld [vmem:[%s735] sm:$0xff]
        %v982 = vld [vmem:[%s735 + $0x8] sm:$0xff]
        %v983 = vld [vmem:[%s735 + $0x10] sm:$0xff]
        %v984 = vld [vmem:[%s735 + $0x18] sm:$0xff]
        %v985 = vld [vmem:[%s747] sm:$0x1]
        %v987 = vlaneseq
        %v988 = vshrl.u32 %v987, 7
        %v989 = vsub.s32 0, %v988
        %v990 = vrot.slane %v985, %v989
        %992 = vmatprep.subr.mxu0 0.0
        %993 = vmatpush1.msra.mxu0 %v981
        %994 = vmatprep.subr.mxu0 0.0
        %995 = vmatpush1.msra.mxu0 %v982
        %996 = vmatprep.subr.mxu0 0.0
        %997 = vmatpush1.msra.mxu0 %v983
        %998 = vmatprep.subr.mxu0 0.0
        %999 = vmatpush1.msra.mxu0 %v984
        %1000 = vmatprep.subr.mxu0 0.0
        %1001 = vmatpush1.msra.mxu0 0.0
        %1002 = vmatprep.subr.mxu0 0.0
        %1003 = vmatpush1.msra.mxu0 0.0
        %1004 = vmatprep.subr.mxu0 0.0
        %1005 = vmatpush1.msra.mxu0 0.0
        %1006 = vmatprep.subr.mxu0 0.0
        %1007 = vmatpush1.msra.mxu0 0.0
        %1008 = vmatprep.subr.mxu0 0.0
        %1009 = vmatpush1.msra.mxu0 0.0
        %1010 = vmatprep.subr.mxu0 0.0
        %1011 = vmatpush1.msra.mxu0 0.0
        %1012 = vmatprep.subr.mxu0 0.0
        %1013 = vmatpush1.msra.mxu0 0.0
        %1014 = vmatprep.subr.mxu0 0.0
        %1015 = vmatpush1.msra.mxu0 0.0
        %1016 = vmatprep.subr.mxu0 0.0
        %1017 = vmatpush1.msra.mxu0 0.0
        %1018 = vmatprep.subr.mxu0 0.0
        %1019 = vmatpush1.msra.mxu0 0.0
        %1020 = vmatprep.subr.mxu0 0.0
        %1021 = vmatpush1.msra.mxu0 0.0
        %1022 = vmatprep.subr.mxu0 0.0
        %1023 = vmatpush1.msra.mxu0 0.0
        %1024 = vmatprep.subr.mxu0 0.0
        %1025 = vmatpush1.msra.mxu0 0.0
        %1026 = vmatprep.subr.mxu0 0.0
        %1027 = vmatpush1.msra.mxu0 0.0
        %1028 = vmatprep.subr.mxu0 0.0
        %1029 = vmatpush1.msra.mxu0 0.0
        %1030 = vmatprep.subr.mxu0 0.0
        %1031 = vmatpush1.msra.mxu0 0.0
        %1032 = vmatprep.subr.mxu0 0.0
        %1033 = vmatpush1.msra.mxu0 0.0
        %1034 = vmatprep.subr.mxu0 0.0
        %1035 = vmatpush1.msra.mxu0 0.0
        %1036 = vmatprep.subr.mxu0 0.0
        %1037 = vmatpush1.msra.mxu0 0.0
        %1038 = vmatprep.subr.mxu0 0.0
        %1039 = vmatpush1.msra.mxu0 0.0
        %1040 = vmatprep.subr.mxu0 0.0
        %1041 = vmatpush1.msra.mxu0 0.0
        %1042 = vmatprep.subr.mxu0 0.0
        %1043 = vmatpush1.msra.mxu0 0.0
        %1044 = vmatprep.subr.mxu0 0.0
        %1045 = vmatpush1.msra.mxu0 0.0
        %1046 = vmatprep.subr.mxu0 0.0
        %1047 = vmatpush1.msra.mxu0 0.0
        %1048 = vmatprep.subr.mxu0 0.0
        %1049 = vmatpush1.msra.mxu0 0.0
        %1050 = vmatprep.subr.mxu0 0.0
        %1051 = vmatpush1.msra.mxu0 0.0
        %1052 = vmatprep.subr.mxu0 0.0
        %1053 = vmatpush1.msra.mxu0 0.0
        %1054 = vmatprep.subr.mxu0 0.0
        %1055 = vmatpush1.msra.mxu0 0.0
        %1056 = vmatprep.mubr.f32.mxu0 0.0
        %1057 = vmatmul.mubr.f32.gmra.mrb[0].mxu0 %v815
        %v1058 = vpop.f32.mrb[0].mxu0
        %v1059 = vadd.f32 %v990, %v1058
        %v1060 = vpop.f32.mrb[0].mxu0
        %1061 = vmatprep.mubr.f32.mxu0 0.0
        %1062 = vmatmul.mubr.f32.gmra.mrb[0].mxu0 %v818
        %v1063 = vpop.f32.mrb[0].mxu0
        %v1064 = vadd.f32 %v990, %v1063
        %v1065 = vpop.f32.mrb[0].mxu0
        %1066 = vdwg.mxu0
        %vm1067 = vcmask 64512
        %v1069 = vsel %vm1067, %v887, 0
        %v1072 = vsel %vm1067, %v973, 0
        %1074 = vmatprep.subr.mxu0 0.0
        %1075 = vmatpush1.xpose.msra.mxu0 %v1072
        %1076 = vmatprep.subr.mxu0 0.0
        %1077 = vmatpush1.xpose.msra.mxu0 0.0
        %1078 = vmatprep.subr.mxu0 0.0
        %1079 = vmatpush1.xpose.msra.mxu0 0.0
        %1080 = vmatprep.subr.mxu0 0.0
        %1081 = vmatpush1.xpose.msra.mxu0 0.0
        %1082 = vmatprep.subr.mxu0 0.0
        %1083 = vmatpush1.xpose.msra.mxu0 0.0
        %1084 = vmatprep.subr.mxu0 0.0
        %1085 = vmatpush1.xpose.msra.mxu0 0.0
        %1086 = vmatprep.subr.mxu0 0.0
        %1087 = vmatpush1.xpose.msra.mxu0 0.0
        %1088 = vmatprep.subr.mxu0 0.0
        %1089 = vmatpush1.xpose.msra.mxu0 0.0
        %1090 = vmatprep.subr.mxu0 0.0
        %1091 = vmatpush1.xpose.msra.mxu0 0.0
        %1092 = vmatprep.subr.mxu0 0.0
        %1093 = vmatpush1.xpose.msra.mxu0 0.0
        %1094 = vmatprep.subr.mxu0 0.0
        %1095 = vmatpush1.xpose.msra.mxu0 0.0
        %1096 = vmatprep.subr.mxu0 0.0
        %1097 = vmatpush1.xpose.msra.mxu0 0.0
        %1098 = vmatprep.subr.mxu0 0.0
        %1099 = vmatpush1.xpose.msra.mxu0 0.0
        %1100 = vmatprep.subr.mxu0 0.0
        %1101 = vmatpush1.xpose.msra.mxu0 0.0
        %1102 = vmatprep.subr.mxu0 0.0
        %1103 = vmatpush1.xpose.msra.mxu0 0.0
        %1104 = vmatprep.subr.mxu0 0.0
        %1105 = vmatpush1.xpose.msra.mxu0 0.0
        %1106 = vmatprep.subr.mxu0 0.0
        %1107 = vmatpush1.xpose.msra.mxu0 0.0
        %1108 = vmatprep.subr.mxu0 0.0
        %1109 = vmatpush1.xpose.msra.mxu0 0.0
        %1110 = vmatprep.subr.mxu0 0.0
        %1111 = vmatpush1.xpose.msra.mxu0 0.0
        %1112 = vmatprep.subr.mxu0 0.0
        %1113 = vmatpush1.xpose.msra.mxu0 0.0
        %1114 = vmatprep.subr.mxu0 0.0
        %1115 = vmatpush1.xpose.msra.mxu0 0.0
        %1116 = vmatprep.subr.mxu0 0.0
        %1117 = vmatpush1.xpose.msra.mxu0 0.0
        %1118 = vmatprep.subr.mxu0 0.0
        %1119 = vmatpush1.xpose.msra.mxu0 0.0
        %1120 = vmatprep.subr.mxu0 0.0
        %1121 = vmatpush1.xpose.msra.mxu0 0.0
        %1122 = vmatprep.subr.mxu0 0.0
        %1123 = vmatpush1.xpose.msra.mxu0 0.0
        %1124 = vmatprep.subr.mxu0 0.0
        %1125 = vmatpush1.xpose.msra.mxu0 0.0
        %1126 = vmatprep.subr.mxu0 0.0
        %1127 = vmatpush1.xpose.msra.mxu0 0.0
        %1128 = vmatprep.subr.mxu0 0.0
        %1129 = vmatpush1.xpose.msra.mxu0 0.0
        %1130 = vmatprep.subr.mxu0 0.0
        %1131 = vmatpush1.xpose.msra.mxu0 0.0
        %1132 = vmatprep.subr.mxu0 0.0
        %1133 = vmatpush1.xpose.msra.mxu0 0.0
        %1134 = vmatprep.subr.mxu0 0.0
        %1135 = vmatpush1.xpose.msra.mxu0 0.0
        %1136 = vmatprep.subr.mxu0 0.0
        %1137 = vmatpush1.xpose.msra.mxu0 0.0
        %1138 = vmatprep.mubr.f32.mxu0 0.0
        %1139 = vmatmul.mubr.f32.gmra.mrb[0].mxu0 %v1069
        %v1140 = vpop.f32.mrb[0].mxu0
        %v1141 = vadd.f32 0.0, %v1140
        %v1142 = vpop.f32.mrb[0].mxu0
        %1143 = vdwg.mxu0
        %v1144 = vsel %vm1067, %v1141, -inf
        %1145 = vmax.xlane.f32.xlu0 %v1144
        %v1146 = vpop.xlane.xlu0 %1145
        %v1147 = vsub.f32 %v1141, %v1146
        %v1148 = vmul.f32 %v1147, 1.442695
        %v1149 = vpow.pop %v1148
        %v1150 = vsel %vm1067, %v1149, 0.0
        %1151 = vadd.xlane.f32.xlu0 %v1150
        %v1152 = vpop.xlane.xlu0 %1151
        %v1153 = vrcp.pop %v1152
        %v1154 = vmul.f32 %v1149, %v1153
        %v1156 = vsel %vm1067, %v1154, 0
        %1158 = vmatprep.subr.mxu0 0.0
        %1159 = vmatpush1.msra.mxu0 %v1059
        %1160 = vmatprep.subr.mxu0 0.0
        %1161 = vmatpush1.msra.mxu0 0.0
        %1162 = vmatprep.subr.mxu0 0.0
        %1163 = vmatpush1.msra.mxu0 0.0
        %1164 = vmatprep.subr.mxu0 0.0
        %1165 = vmatpush1.msra.mxu0 0.0
        %1166 = vmatprep.subr.mxu0 0.0
        %1167 = vmatpush1.msra.mxu0 0.0
        %1168 = vmatprep.subr.mxu0 0.0
        %1169 = vmatpush1.msra.mxu0 0.0
        %1170 = vmatprep.subr.mxu0 0.0
        %1171 = vmatpush1.msra.mxu0 0.0
        %1172 = vmatprep.subr.mxu0 0.0
        %1173 = vmatpush1.msra.mxu0 0.0
        %1174 = vmatprep.subr.mxu0 0.0
        %1175 = vmatpush1.msra.mxu0 0.0
        %1176 = vmatprep.subr.mxu0 0.0
        %1177 = vmatpush1.msra.mxu0 0.0
        %1178 = vmatprep.subr.mxu0 0.0
        %1179 = vmatpush1.msra.mxu0 0.0
        %1180 = vmatprep.subr.mxu0 0.0
        %1181 = vmatpush1.msra.mxu0 0.0
        %1182 = vmatprep.subr.mxu0 0.0
        %1183 = vmatpush1.msra.mxu0 0.0
        %1184 = vmatprep.subr.mxu0 0.0
        %1185 = vmatpush1.msra.mxu0 0.0
        %1186 = vmatprep.subr.mxu0 0.0
        %1187 = vmatpush1.msra.mxu0 0.0
        %1188 = vmatprep.subr.mxu0 0.0
        %1189 = vmatpush1.msra.mxu0 0.0
        %1190 = vmatprep.subr.mxu0 0.0
        %1191 = vmatpush1.msra.mxu0 0.0
        %1192 = vmatprep.subr.mxu0 0.0
        %1193 = vmatpush1.msra.mxu0 0.0
        %1194 = vmatprep.subr.mxu0 0.0
        %1195 = vmatpush1.msra.mxu0 0.0
        %1196 = vmatprep.subr.mxu0 0.0
        %1197 = vmatpush1.msra.mxu0 0.0
        %1198 = vmatprep.subr.mxu0 0.0
        %1199 = vmatpush1.msra.mxu0 0.0
        %1200 = vmatprep.subr.mxu0 0.0
        %1201 = vmatpush1.msra.mxu0 0.0
        %1202 = vmatprep.subr.mxu0 0.0
        %1203 = vmatpush1.msra.mxu0 0.0
        %1204 = vmatprep.subr.mxu0 0.0
        %1205 = vmatpush1.msra.mxu0 0.0
        %1206 = vmatprep.subr.mxu0 0.0
        %1207 = vmatpush1.msra.mxu0 0.0
        %1208 = vmatprep.subr.mxu0 0.0
        %1209 = vmatpush1.msra.mxu0 0.0
        %1210 = vmatprep.subr.mxu0 0.0
        %1211 = vmatpush1.msra.mxu0 0.0
        %1212 = vmatprep.subr.mxu0 0.0
        %1213 = vmatpush1.msra.mxu0 0.0
        %1214 = vmatprep.subr.mxu0 0.0
        %1215 = vmatpush1.msra.mxu0 0.0
        %1216 = vmatprep.subr.mxu0 0.0
        %1217 = vmatpush1.msra.mxu0 0.0
        %1218 = vmatprep.subr.mxu0 0.0
        %1219 = vmatpush1.msra.mxu0 0.0
        %1220 = vmatprep.subr.mxu0 0.0
        %1221 = vmatpush1.msra.mxu0 0.0
        %1222 = vmatprep.mubr.f32.mxu0 0.0
        %1223 = vmatmul.mubr.f32.gmra.mrb[0].mxu0 %v1156
        %v1224 = vpop.f32.mrb[0].mxu0
        %v1225 = vadd.f32 0.0, %v1224
        %v1226 = vpop.f32.mrb[0].mxu0
        %1227 = vdwg.mxu0
        %v1229 = vsel %vm1067, %v892, 0
        %v1232 = vsel %vm1067, %v978, 0
        %1234 = vmatprep.subr.mxu0 0.0
        %1235 = vmatpush1.xpose.msra.mxu0 %v1232
        %1236 = vmatprep.subr.mxu0 0.0
        %1237 = vmatpush1.xpose.msra.mxu0 0.0
        %1238 = vmatprep.subr.mxu0 0.0
        %1239 = vmatpush1.xpose.msra.mxu0 0.0
        %1240 = vmatprep.subr.mxu0 0.0
        %1241 = vmatpush1.xpose.msra.mxu0 0.0
        %1242 = vmatprep.subr.mxu0 0.0
        %1243 = vmatpush1.xpose.msra.mxu0 0.0
        %1244 = vmatprep.subr.mxu0 0.0
        %1245 = vmatpush1.xpose.msra.mxu0 0.0
        %1246 = vmatprep.subr.mxu0 0.0
        %1247 = vmatpush1.xpose.msra.mxu0 0.0
        %1248 = vmatprep.subr.mxu0 0.0
        %1249 = vmatpush1.xpose.msra.mxu0 0.0
        %1250 = vmatprep.subr.mxu0 0.0
        %1251 = vmatpush1.xpose.msra.mxu0 0.0
        %1252 = vmatprep.subr.mxu0 0.0
        %1253 = vmatpush1.xpose.msra.mxu0 0.0
        %1254 = vmatprep.subr.mxu0 0.0
        %1255 = vmatpush1.xpose.msra.mxu0 0.0
        %1256 = vmatprep.subr.mxu0 0.0
        %1257 = vmatpush1.xpose.msra.mxu0 0.0
        %1258 = vmatprep.subr.mxu0 0.0
        %1259 = vmatpush1.xpose.msra.mxu0 0.0
        %1260 = vmatprep.subr.mxu0 0.0
        %1261 = vmatpush1.xpose.msra.mxu0 0.0
        %1262 = vmatprep.subr.mxu0 0.0
        %1263 = vmatpush1.xpose.msra.mxu0 0.0
        %1264 = vmatprep.subr.mxu0 0.0
        %1265 = vmatpush1.xpose.msra.mxu0 0.0
        %1266 = vmatprep.subr.mxu0 0.0
        %1267 = vmatpush1.xpose.msra.mxu0 0.0
        %1268 = vmatprep.subr.mxu0 0.0
        %1269 = vmatpush1.xpose.msra.mxu0 0.0
        %1270 = vmatprep.subr.mxu0 0.0
        %1271 = vmatpush1.xpose.msra.mxu0 0.0
        %1272 = vmatprep.subr.mxu0 0.0
        %1273 = vmatpush1.xpose.msra.mxu0 0.0
        %1274 = vmatprep.subr.mxu0 0.0
        %1275 = vmatpush1.xpose.msra.mxu0 0.0
        %1276 = vmatprep.subr.mxu0 0.0
        %1277 = vmatpush1.xpose.msra.mxu0 0.0
        %1278 = vmatprep.subr.mxu0 0.0
        %1279 = vmatpush1.xpose.msra.mxu0 0.0
        %1280 = vmatprep.subr.mxu0 0.0
        %1281 = vmatpush1.xpose.msra.mxu0 0.0
        %1282 = vmatprep.subr.mxu0 0.0
        %1283 = vmatpush1.xpose.msra.mxu0 0.0
        %1284 = vmatprep.subr.mxu0 0.0
        %1285 = vmatpush1.xpose.msra.mxu0 0.0
        %1286 = vmatprep.subr.mxu0 0.0
        %1287 = vmatpush1.xpose.msra.mxu0 0.0
        %1288 = vmatprep.subr.mxu0 0.0
        %1289 = vmatpush1.xpose.msra.mxu0 0.0
        %1290 = vmatprep.subr.mxu0 0.0
        %1291 = vmatpush1.xpose.msra.mxu0 0.0
        %1292 = vmatprep.subr.mxu0 0.0
        %1293 = vmatpush1.xpose.msra.mxu0 0.0
        %1294 = vmatprep.subr.mxu0 0.0
        %1295 = vmatpush1.xpose.msra.mxu0 0.0
        %1296 = vmatprep.subr.mxu0 0.0
        %1297 = vmatpush1.xpose.msra.mxu0 0.0
        %1298 = vmatprep.mubr.f32.mxu0 0.0
        %1299 = vmatmul.mubr.f32.gmra.mrb[0].mxu0 %v1229
        %v1300 = vpop.f32.mrb[0].mxu0
        %v1301 = vadd.f32 0.0, %v1300
        %v1302 = vpop.f32.mrb[0].mxu0
        %1303 = vdwg.mxu0
        %v1304 = vsel %vm1067, %v1301, -inf
        %1305 = vmax.xlane.f32.xlu0 %v1304
        %v1306 = vpop.xlane.xlu0 %1305
        %v1307 = vsub.f32 %v1301, %v1306
        %v1308 = vmul.f32 %v1307, 1.442695
        %v1309 = vpow.pop %v1308
        %v1310 = vsel %vm1067, %v1309, 0.0
        %1311 = vadd.xlane.f32.xlu0 %v1310
        %v1312 = vpop.xlane.xlu0 %1311
        %v1313 = vrcp.pop %v1312
        %v1314 = vmul.f32 %v1309, %v1313
        %v1316 = vsel %vm1067, %v1314, 0
        %1318 = vmatprep.subr.mxu0 0.0
        %1319 = vmatpush1.msra.mxu0 %v1064
        %1320 = vmatprep.subr.mxu0 0.0
        %1321 = vmatpush1.msra.mxu0 0.0
        %1322 = vmatprep.subr.mxu0 0.0
        %1323 = vmatpush1.msra.mxu0 0.0
        %1324 = vmatprep.subr.mxu0 0.0
        %1325 = vmatpush1.msra.mxu0 0.0
        %1326 = vmatprep.subr.mxu0 0.0
        %1327 = vmatpush1.msra.mxu0 0.0
        %1328 = vmatprep.subr.mxu0 0.0
        %1329 = vmatpush1.msra.mxu0 0.0
        %1330 = vmatprep.subr.mxu0 0.0
        %1331 = vmatpush1.msra.mxu0 0.0
        %1332 = vmatprep.subr.mxu0 0.0
        %1333 = vmatpush1.msra.mxu0 0.0
        %1334 = vmatprep.subr.mxu0 0.0
        %1335 = vmatpush1.msra.mxu0 0.0
        %1336 = vmatprep.subr.mxu0 0.0
        %1337 = vmatpush1.msra.mxu0 0.0
        %1338 = vmatprep.subr.mxu0 0.0
        %1339 = vmatpush1.msra.mxu0 0.0
        %1340 = vmatprep.subr.mxu0 0.0
        %1341 = vmatpush1.msra.mxu0 0.0
        %1342 = vmatprep.subr.mxu0 0.0
        %1343 = vmatpush1.msra.mxu0 0.0
        %1344 = vmatprep.subr.mxu0 0.0
        %1345 = vmatpush1.msra.mxu0 0.0
        %1346 = vmatprep.subr.mxu0 0.0
        %1347 = vmatpush1.msra.mxu0 0.0
        %1348 = vmatprep.subr.mxu0 0.0
        %1349 = vmatpush1.msra.mxu0 0.0
        %1350 = vmatprep.subr.mxu0 0.0
        %1351 = vmatpush1.msra.mxu0 0.0
        %1352 = vmatprep.subr.mxu0 0.0
        %1353 = vmatpush1.msra.mxu0 0.0
        %1354 = vmatprep.subr.mxu0 0.0
        %1355 = vmatpush1.msra.mxu0 0.0
        %1356 = vmatprep.subr.mxu0 0.0
        %1357 = vmatpush1.msra.mxu0 0.0
        %1358 = vmatprep.subr.mxu0 0.0
        %1359 = vmatpush1.msra.mxu0 0.0
        %1360 = vmatprep.subr.mxu0 0.0
        %1361 = vmatpush1.msra.mxu0 0.0
        %1362 = vmatprep.subr.mxu0 0.0
        %1363 = vmatpush1.msra.mxu0 0.0
        %1364 = vmatprep.subr.mxu0 0.0
        %1365 = vmatpush1.msra.mxu0 0.0
        %1366 = vmatprep.subr.mxu0 0.0
        %1367 = vmatpush1.msra.mxu0 0.0
        %1368 = vmatprep.subr.mxu0 0.0
        %1369 = vmatpush1.msra.mxu0 0.0
        %1370 = vmatprep.subr.mxu0 0.0
        %1371 = vmatpush1.msra.mxu0 0.0
        %1372 = vmatprep.subr.mxu0 0.0
        %1373 = vmatpush1.msra.mxu0 0.0
        %1374 = vmatprep.subr.mxu0 0.0
        %1375 = vmatpush1.msra.mxu0 0.0
        %1376 = vmatprep.subr.mxu0 0.0
        %1377 = vmatpush1.msra.mxu0 0.0
        %1378 = vmatprep.subr.mxu0 0.0
        %1379 = vmatpush1.msra.mxu0 0.0
        %1380 = vmatprep.subr.mxu0 0.0
        %1381 = vmatpush1.msra.mxu0 0.0
        %1382 = vmatprep.mubr.f32.mxu0 0.0
        %1383 = vmatmul.mubr.f32.gmra.mrb[0].mxu0 %v1316
        %v1384 = vpop.f32.mrb[0].mxu0
        %v1385 = vadd.f32 0.0, %v1384
        %v1386 = vpop.f32.mrb[0].mxu0
        %1387 = vdwg.mxu0
        %v1388 = vld [vmem:[%s752] sm:$0xff]
        %v1390 = vsel %vm1067, %v1225, 0
        %v1393 = vsel %vm1067, %v1385, 0
        %1395 = vmatprep.subr.mxu0 0.0
        %1396 = vmatpush1.msra.mxu0 %v1388
        %1397 = vmatprep.subr.mxu0 0.0
        %1398 = vmatpush1.msra.mxu0 0.0
        %1399 = vmatprep.subr.mxu0 0.0
        %1400 = vmatpush1.msra.mxu0 0.0
        %1401 = vmatprep.subr.mxu0 0.0
        %1402 = vmatpush1.msra.mxu0 0.0
        %1403 = vmatprep.subr.mxu0 0.0
        %1404 = vmatpush1.msra.mxu0 0.0
        %1405 = vmatprep.subr.mxu0 0.0
        %1406 = vmatpush1.msra.mxu0 0.0
        %1407 = vmatprep.subr.mxu0 0.0
        %1408 = vmatpush1.msra.mxu0 0.0
        %1409 = vmatprep.subr.mxu0 0.0
        %1410 = vmatpush1.msra.mxu0 0.0
        %1411 = vmatprep.subr.mxu0 0.0
        %1412 = vmatpush1.msra.mxu0 0.0
        %1413 = vmatprep.subr.mxu0 0.0
        %1414 = vmatpush1.msra.mxu0 0.0
        %1415 = vmatprep.subr.mxu0 0.0
        %1416 = vmatpush1.msra.mxu0 0.0
        %1417 = vmatprep.subr.mxu0 0.0
        %1418 = vmatpush1.msra.mxu0 0.0
        %1419 = vmatprep.subr.mxu0 0.0
        %1420 = vmatpush1.msra.mxu0 0.0
        %1421 = vmatprep.subr.mxu0 0.0
        %1422 = vmatpush1.msra.mxu0 0.0
        %1423 = vmatprep.subr.mxu0 0.0
        %1424 = vmatpush1.msra.mxu0 0.0
        %1425 = vmatprep.subr.mxu0 0.0
        %1426 = vmatpush1.msra.mxu0 0.0
        %1427 = vmatprep.subr.mxu0 0.0
        %1428 = vmatpush1.msra.mxu0 0.0
        %1429 = vmatprep.subr.mxu0 0.0
        %1430 = vmatpush1.msra.mxu0 0.0
        %1431 = vmatprep.subr.mxu0 0.0
        %1432 = vmatpush1.msra.mxu0 0.0
        %1433 = vmatprep.subr.mxu0 0.0
        %1434 = vmatpush1.msra.mxu0 0.0
        %1435 = vmatprep.subr.mxu0 0.0
        %1436 = vmatpush1.msra.mxu0 0.0
        %1437 = vmatprep.subr.mxu0 0.0
        %1438 = vmatpush1.msra.mxu0 0.0
        %1439 = vmatprep.subr.mxu0 0.0
        %1440 = vmatpush1.msra.mxu0 0.0
        %1441 = vmatprep.subr.mxu0 0.0
        %1442 = vmatpush1.msra.mxu0 0.0
        %1443 = vmatprep.subr.mxu0 0.0
        %1444 = vmatpush1.msra.mxu0 0.0
        %1445 = vmatprep.subr.mxu0 0.0
        %1446 = vmatpush1.msra.mxu0 0.0
        %1447 = vmatprep.subr.mxu0 0.0
        %1448 = vmatpush1.msra.mxu0 0.0
        %1449 = vmatprep.subr.mxu0 0.0
        %1450 = vmatpush1.msra.mxu0 0.0
        %1451 = vmatprep.subr.mxu0 0.0
        %1452 = vmatpush1.msra.mxu0 0.0
        %1453 = vmatprep.subr.mxu0 0.0
        %1454 = vmatpush1.msra.mxu0 0.0
        %1455 = vmatprep.subr.mxu0 0.0
        %1456 = vmatpush1.msra.mxu0 0.0
        %1457 = vmatprep.subr.mxu0 0.0
        %1458 = vmatpush1.msra.mxu0 0.0
        %1459 = vmatprep.mubr.f32.mxu0 0.0
        %1460 = vmatmul.mubr.f32.gmra.mrb[0].mxu0 %v1390
        %v1461 = vpop.f32.mrb[0].mxu0
        %v1462 = vadd.f32 0.0, %v1461
        %v1463 = vpop.f32.mrb[0].mxu0
        %1464 = vmatprep.mubr.f32.mxu0 0.0
        %1465 = vmatmul.mubr.f32.gmra.mrb[0].mxu0 %v1393
        %v1466 = vpop.f32.mrb[0].mxu0
        %v1467 = vadd.f32 0.0, %v1466
        %v1468 = vpop.f32.mrb[0].mxu0
        %1469 = vdwg.mxu0
        %v1470 = vadd.f32 %v800, %v1462
        %v1471 = vadd.f32 %v800, %v1467
        %s1472 = scalar_lea.vmem %s725, 32
        %v1473 = vld [vmem:[%s1472] sm:$0xff]
        %v1474 = vld [vmem:[%s1472 + $0x8] sm:$0xff]
        %v1475 = vld [vmem:[%s1472 + $0x10] sm:$0xff]
        %v1476 = vld [vmem:[%s1472 + $0x18] sm:$0xff]
        %s1477 = scalar_lea.vmem %s739, 1
        %v1478 = vld [vmem:[%s1477] sm:$0x1]
        %v1480 = vlaneseq
        %v1481 = vshrl.u32 %v1480, 7
        %v1482 = vsub.s32 0, %v1481
        %v1483 = vrot.slane %v1478, %v1482
        %1485 = vmatprep.subr.mxu0 0.0
        %1486 = vmatpush1.msra.mxu0 %v1473
        %1487 = vmatprep.subr.mxu0 0.0
        %1488 = vmatpush1.msra.mxu0 %v1474
        %1489 = vmatprep.subr.mxu0 0.0
        %1490 = vmatpush1.msra.mxu0 %v1475
        %1491 = vmatprep.subr.mxu0 0.0
        %1492 = vmatpush1.msra.mxu0 %v1476
        %1493 = vmatprep.subr.mxu0 0.0
        %1494 = vmatpush1.msra.mxu0 0.0
        %1495 = vmatprep.subr.mxu0 0.0
        %1496 = vmatpush1.msra.mxu0 0.0
        %1497 = vmatprep.subr.mxu0 0.0
        %1498 = vmatpush1.msra.mxu0 0.0
        %1499 = vmatprep.subr.mxu0 0.0
        %1500 = vmatpush1.msra.mxu0 0.0
        %1501 = vmatprep.subr.mxu0 0.0
        %1502 = vmatpush1.msra.mxu0 0.0
        %1503 = vmatprep.subr.mxu0 0.0
        %1504 = vmatpush1.msra.mxu0 0.0
        %1505 = vmatprep.subr.mxu0 0.0
        %1506 = vmatpush1.msra.mxu0 0.0
        %1507 = vmatprep.subr.mxu0 0.0
        %1508 = vmatpush1.msra.mxu0 0.0
        %1509 = vmatprep.subr.mxu0 0.0
        %1510 = vmatpush1.msra.mxu0 0.0
        %1511 = vmatprep.subr.mxu0 0.0
        %1512 = vmatpush1.msra.mxu0 0.0
        %1513 = vmatprep.subr.mxu0 0.0
        %1514 = vmatpush1.msra.mxu0 0.0
        %1515 = vmatprep.subr.mxu0 0.0
        %1516 = vmatpush1.msra.mxu0 0.0
        %1517 = vmatprep.subr.mxu0 0.0
        %1518 = vmatpush1.msra.mxu0 0.0
        %1519 = vmatprep.subr.mxu0 0.0
        %1520 = vmatpush1.msra.mxu0 0.0
        %1521 = vmatprep.subr.mxu0 0.0
        %1522 = vmatpush1.msra.mxu0 0.0
        %1523 = vmatprep.subr.mxu0 0.0
        %1524 = vmatpush1.msra.mxu0 0.0
        %1525 = vmatprep.subr.mxu0 0.0
        %1526 = vmatpush1.msra.mxu0 0.0
        %1527 = vmatprep.subr.mxu0 0.0
        %1528 = vmatpush1.msra.mxu0 0.0
        %1529 = vmatprep.subr.mxu0 0.0
        %1530 = vmatpush1.msra.mxu0 0.0
        %1531 = vmatprep.subr.mxu0 0.0
        %1532 = vmatpush1.msra.mxu0 0.0
        %1533 = vmatprep.subr.mxu0 0.0
        %1534 = vmatpush1.msra.mxu0 0.0
        %1535 = vmatprep.subr.mxu0 0.0
        %1536 = vmatpush1.msra.mxu0 0.0
        %1537 = vmatprep.subr.mxu0 0.0
        %1538 = vmatpush1.msra.mxu0 0.0
        %1539 = vmatprep.subr.mxu0 0.0
        %1540 = vmatpush1.msra.mxu0 0.0
        %1541 = vmatprep.subr.mxu0 0.0
        %1542 = vmatpush1.msra.mxu0 0.0
        %1543 = vmatprep.subr.mxu0 0.0
        %1544 = vmatpush1.msra.mxu0 0.0
        %1545 = vmatprep.subr.mxu0 0.0
        %1546 = vmatpush1.msra.mxu0 0.0
        %1547 = vmatprep.subr.mxu0 0.0
        %1548 = vmatpush1.msra.mxu0 0.0
        %1549 = vmatprep.mubr.f32.mxu0 0.0
        %1550 = vmatmul.mubr.f32.gmra.mrb[0].mxu0 %v815
        %v1551 = vpop.f32.mrb[0].mxu0
        %v1552 = vadd.f32 %v1483, %v1551
        %v1553 = vpop.f32.mrb[0].mxu0
        %1554 = vmatprep.mubr.f32.mxu0 0.0
        %1555 = vmatmul.mubr.f32.gmra.mrb[0].mxu0 %v818
        %v1556 = vpop.f32.mrb[0].mxu0
        %v1557 = vadd.f32 %v1483, %v1556
        %v1558 = vpop.f32.mrb[0].mxu0
        %1559 = vdwg.mxu0
        %s1560 = scalar_lea.vmem %s730, 32
        %v1561 = vld [vmem:[%s1560] sm:$0xff]
        %v1562 = vld [vmem:[%s1560 + $0x8] sm:$0xff]
        %v1563 = vld [vmem:[%s1560 + $0x10] sm:$0xff]
        %v1564 = vld [vmem:[%s1560 + $0x18] sm:$0xff]
        %s1565 = scalar_lea.vmem %s743, 1
        %v1566 = vld [vmem:[%s1565] sm:$0x1]
        %v1568 = vlaneseq
        %v1569 = vshrl.u32 %v1568, 7
        %v1570 = vsub.s32 0, %v1569
        %v1571 = vrot.slane %v1566, %v1570
        %1573 = vmatprep.subr.mxu0 0.0
        %1574 = vmatpush1.msra.mxu0 %v1561
        %1575 = vmatprep.subr.mxu0 0.0
        %1576 = vmatpush1.msra.mxu0 %v1562
        %1577 = vmatprep.subr.mxu0 0.0
        %1578 = vmatpush1.msra.mxu0 %v1563
        %1579 = vmatprep.subr.mxu0 0.0
        %1580 = vmatpush1.msra.mxu0 %v1564
        %1581 = vmatprep.subr.mxu0 0.0
        %1582 = vmatpush1.msra.mxu0 0.0
        %1583 = vmatprep.subr.mxu0 0.0
        %1584 = vmatpush1.msra.mxu0 0.0
        %1585 = vmatprep.subr.mxu0 0.0
        %1586 = vmatpush1.msra.mxu0 0.0
        %1587 = vmatprep.subr.mxu0 0.0
        %1588 = vmatpush1.msra.mxu0 0.0
        %1589 = vmatprep.subr.mxu0 0.0
        %1590 = vmatpush1.msra.mxu0 0.0
        %1591 = vmatprep.subr.mxu0 0.0
        %1592 = vmatpush1.msra.mxu0 0.0
        %1593 = vmatprep.subr.mxu0 0.0
        %1594 = vmatpush1.msra.mxu0 0.0
        %1595 = vmatprep.subr.mxu0 0.0
        %1596 = vmatpush1.msra.mxu0 0.0
        %1597 = vmatprep.subr.mxu0 0.0
        %1598 = vmatpush1.msra.mxu0 0.0
        %1599 = vmatprep.subr.mxu0 0.0
        %1600 = vmatpush1.msra.mxu0 0.0
        %1601 = vmatprep.subr.mxu0 0.0
        %1602 = vmatpush1.msra.mxu0 0.0
        %1603 = vmatprep.subr.mxu0 0.0
        %1604 = vmatpush1.msra.mxu0 0.0
        %1605 = vmatprep.subr.mxu0 0.0
        %1606 = vmatpush1.msra.mxu0 0.0
        %1607 = vmatprep.subr.mxu0 0.0
        %1608 = vmatpush1.msra.mxu0 0.0
        %1609 = vmatprep.subr.mxu0 0.0
        %1610 = vmatpush1.msra.mxu0 0.0
        %1611 = vmatprep.subr.mxu0 0.0
        %1612 = vmatpush1.msra.mxu0 0.0
        %1613 = vmatprep.subr.mxu0 0.0
        %1614 = vmatpush1.msra.mxu0 0.0
        %1615 = vmatprep.subr.mxu0 0.0
        %1616 = vmatpush1.msra.mxu0 0.0
        %1617 = vmatprep.subr.mxu0 0.0
        %1618 = vmatpush1.msra.mxu0 0.0
        %1619 = vmatprep.subr.mxu0 0.0
        %1620 = vmatpush1.msra.mxu0 0.0
        %1621 = vmatprep.subr.mxu0 0.0
        %1622 = vmatpush1.msra.mxu0 0.0
        %1623 = vmatprep.subr.mxu0 0.0
        %1624 = vmatpush1.msra.mxu0 0.0
        %1625 = vmatprep.subr.mxu0 0.0
        %1626 = vmatpush1.msra.mxu0 0.0
        %1627 = vmatprep.subr.mxu0 0.0
        %1628 = vmatpush1.msra.mxu0 0.0
        %1629 = vmatprep.subr.mxu0 0.0
        %1630 = vmatpush1.msra.mxu0 0.0
        %1631 = vmatprep.subr.mxu0 0.0
        %1632 = vmatpush1.msra.mxu0 0.0
        %1633 = vmatprep.subr.mxu0 0.0
        %1634 = vmatpush1.msra.mxu0 0.0
        %1635 = vmatprep.subr.mxu0 0.0
        %1636 = vmatpush1.msra.mxu0 0.0
        %1637 = vmatprep.mubr.f32.mxu0 0.0
        %1638 = vmatmul.mubr.f32.gmra.mrb[0].mxu0 %v815
        %v1639 = vpop.f32.mrb[0].mxu0
        %v1640 = vadd.f32 %v1571, %v1639
        %v1641 = vpop.f32.mrb[0].mxu0
        %1642 = vmatprep.mubr.f32.mxu0 0.0
        %1643 = vmatmul.mubr.f32.gmra.mrb[0].mxu0 %v818
        %v1644 = vpop.f32.mrb[0].mxu0
        %v1645 = vadd.f32 %v1571, %v1644
        %v1646 = vpop.f32.mrb[0].mxu0
        %1647 = vdwg.mxu0
        %s1648 = scalar_lea.vmem %s735, 32
        %v1649 = vld [vmem:[%s1648] sm:$0xff]
        %v1650 = vld [vmem:[%s1648 + $0x8] sm:$0xff]
        %v1651 = vld [vmem:[%s1648 + $0x10] sm:$0xff]
        %v1652 = vld [vmem:[%s1648 + $0x18] sm:$0xff]
        %s1653 = scalar_lea.vmem %s747, 1
        %v1654 = vld [vmem:[%s1653] sm:$0x1]
        %v1656 = vlaneseq
        %v1657 = vshrl.u32 %v1656, 7
        %v1658 = vsub.s32 0, %v1657
        %v1659 = vrot.slane %v1654, %v1658
        %1661 = vmatprep.subr.mxu0 0.0
        %1662 = vmatpush1.msra.mxu0 %v1649
        %1663 = vmatprep.subr.mxu0 0.0
        %1664 = vmatpush1.msra.mxu0 %v1650
        %1665 = vmatprep.subr.mxu0 0.0
        %1666 = vmatpush1.msra.mxu0 %v1651
        %1667 = vmatprep.subr.mxu0 0.0
        %1668 = vmatpush1.msra.mxu0 %v1652
        %1669 = vmatprep.subr.mxu0 0.0
        %1670 = vmatpush1.msra.mxu0 0.0
        %1671 = vmatprep.subr.mxu0 0.0
        %1672 = vmatpush1.msra.mxu0 0.0
        %1673 = vmatprep.subr.mxu0 0.0
        %1674 = vmatpush1.msra.mxu0 0.0
        %1675 = vmatprep.subr.mxu0 0.0
        %1676 = vmatpush1.msra.mxu0 0.0
        %1677 = vmatprep.subr.mxu0 0.0
        %1678 = vmatpush1.msra.mxu0 0.0
        %1679 = vmatprep.subr.mxu0 0.0
        %1680 = vmatpush1.msra.mxu0 0.0
        %1681 = vmatprep.subr.mxu0 0.0
        %1682 = vmatpush1.msra.mxu0 0.0
        %1683 = vmatprep.subr.mxu0 0.0
        %1684 = vmatpush1.msra.mxu0 0.0
        %1685 = vmatprep.subr.mxu0 0.0
        %1686 = vmatpush1.msra.mxu0 0.0
        %1687 = vmatprep.subr.mxu0 0.0
        %1688 = vmatpush1.msra.mxu0 0.0
        %1689 = vmatprep.subr.mxu0 0.0
        %1690 = vmatpush1.msra.mxu0 0.0
        %1691 = vmatprep.subr.mxu0 0.0
        %1692 = vmatpush1.msra.mxu0 0.0
        %1693 = vmatprep.subr.mxu0 0.0
        %1694 = vmatpush1.msra.mxu0 0.0
        %1695 = vmatprep.subr.mxu0 0.0
        %1696 = vmatpush1.msra.mxu0 0.0
        %1697 = vmatprep.subr.mxu0 0.0
        %1698 = vmatpush1.msra.mxu0 0.0
        %1699 = vmatprep.subr.mxu0 0.0
        %1700 = vmatpush1.msra.mxu0 0.0
        %1701 = vmatprep.subr.mxu0 0.0
        %1702 = vmatpush1.msra.mxu0 0.0
        %1703 = vmatprep.subr.mxu0 0.0
        %1704 = vmatpush1.msra.mxu0 0.0
        %1705 = vmatprep.subr.mxu0 0.0
        %1706 = vmatpush1.msra.mxu0 0.0
        %1707 = vmatprep.subr.mxu0 0.0
        %1708 = vmatpush1.msra.mxu0 0.0
        %1709 = vmatprep.subr.mxu0 0.0
        %1710 = vmatpush1.msra.mxu0 0.0
        %1711 = vmatprep.subr.mxu0 0.0
        %1712 = vmatpush1.msra.mxu0 0.0
        %1713 = vmatprep.subr.mxu0 0.0
        %1714 = vmatpush1.msra.mxu0 0.0
        %1715 = vmatprep.subr.mxu0 0.0
        %1716 = vmatpush1.msra.mxu0 0.0
        %1717 = vmatprep.subr.mxu0 0.0
        %1718 = vmatpush1.msra.mxu0 0.0
        %1719 = vmatprep.subr.mxu0 0.0
        %1720 = vmatpush1.msra.mxu0 0.0
        %1721 = vmatprep.subr.mxu0 0.0
        %1722 = vmatpush1.msra.mxu0 0.0
        %1723 = vmatprep.subr.mxu0 0.0
        %1724 = vmatpush1.msra.mxu0 0.0
        %1725 = vmatprep.mubr.f32.mxu0 0.0
        %1726 = vmatmul.mubr.f32.gmra.mrb[0].mxu0 %v815
        %v1727 = vpop.f32.mrb[0].mxu0
        %v1728 = vadd.f32 %v1659, %v1727
        %v1729 = vpop.f32.mrb[0].mxu0
        %1730 = vmatprep.mubr.f32.mxu0 0.0
        %1731 = vmatmul.mubr.f32.gmra.mrb[0].mxu0 %v818
        %v1732 = vpop.f32.mrb[0].mxu0
        %v1733 = vadd.f32 %v1659, %v1732
        %v1734 = vpop.f32.mrb[0].mxu0
        %1735 = vdwg.mxu0
        %v1737 = vsel %vm1067, %v1552, 0
        %v1740 = vsel %vm1067, %v1640, 0
        %1742 = vmatprep.subr.mxu0 0.0
        %1743 = vmatpush1.xpose.msra.mxu0 %v1740
        %1744 = vmatprep.subr.mxu0 0.0
        %1745 = vmatpush1.xpose.msra.mxu0 0.0
        %1746 = vmatprep.subr.mxu0 0.0
        %1747 = vmatpush1.xpose.msra.mxu0 0.0
        %1748 = vmatprep.subr.mxu0 0.0
        %1749 = vmatpush1.xpose.msra.mxu0 0.0
        %1750 = vmatprep.subr.mxu0 0.0
        %1751 = vmatpush1.xpose.msra.mxu0 0.0
        %1752 = vmatprep.subr.mxu0 0.0
        %1753 = vmatpush1.xpose.msra.mxu0 0.0
        %1754 = vmatprep.subr.mxu0 0.0
        %1755 = vmatpush1.xpose.msra.mxu0 0.0
        %1756 = vmatprep.subr.mxu0 0.0
        %1757 = vmatpush1.xpose.msra.mxu0 0.0
        %1758 = vmatprep.subr.mxu0 0.0
        %1759 = vmatpush1.xpose.msra.mxu0 0.0
        %1760 = vmatprep.subr.mxu0 0.0
        %1761 = vmatpush1.xpose.msra.mxu0 0.0
        %1762 = vmatprep.subr.mxu0 0.0
        %1763 = vmatpush1.xpose.msra.mxu0 0.0
        %1764 = vmatprep.subr.mxu0 0.0
        %1765 = vmatpush1.xpose.msra.mxu0 0.0
        %1766 = vmatprep.subr.mxu0 0.0
        %1767 = vmatpush1.xpose.msra.mxu0 0.0
        %1768 = vmatprep.subr.mxu0 0.0
        %1769 = vmatpush1.xpose.msra.mxu0 0.0
        %1770 = vmatprep.subr.mxu0 0.0
        %1771 = vmatpush1.xpose.msra.mxu0 0.0
        %1772 = vmatprep.subr.mxu0 0.0
        %1773 = vmatpush1.xpose.msra.mxu0 0.0
        %1774 = vmatprep.subr.mxu0 0.0
        %1775 = vmatpush1.xpose.msra.mxu0 0.0
        %1776 = vmatprep.subr.mxu0 0.0
        %1777 = vmatpush1.xpose.msra.mxu0 0.0
        %1778 = vmatprep.subr.mxu0 0.0
        %1779 = vmatpush1.xpose.msra.mxu0 0.0
        %1780 = vmatprep.subr.mxu0 0.0
        %1781 = vmatpush1.xpose.msra.mxu0 0.0
        %1782 = vmatprep.subr.mxu0 0.0
        %1783 = vmatpush1.xpose.msra.mxu0 0.0
        %1784 = vmatprep.subr.mxu0 0.0
        %1785 = vmatpush1.xpose.msra.mxu0 0.0
        %1786 = vmatprep.subr.mxu0 0.0
        %1787 = vmatpush1.xpose.msra.mxu0 0.0
        %1788 = vmatprep.subr.mxu0 0.0
        %1789 = vmatpush1.xpose.msra.mxu0 0.0
        %1790 = vmatprep.subr.mxu0 0.0
        %1791 = vmatpush1.xpose.msra.mxu0 0.0
        %1792 = vmatprep.subr.mxu0 0.0
        %1793 = vmatpush1.xpose.msra.mxu0 0.0
        %1794 = vmatprep.subr.mxu0 0.0
        %1795 = vmatpush1.xpose.msra.mxu0 0.0
        %1796 = vmatprep.subr.mxu0 0.0
        %1797 = vmatpush1.xpose.msra.mxu0 0.0
        %1798 = vmatprep.subr.mxu0 0.0
        %1799 = vmatpush1.xpose.msra.mxu0 0.0
        %1800 = vmatprep.subr.mxu0 0.0
        %1801 = vmatpush1.xpose.msra.mxu0 0.0
        %1802 = vmatprep.subr.mxu0 0.0
        %1803 = vmatpush1.xpose.msra.mxu0 0.0
        %1804 = vmatprep.subr.mxu0 0.0
        %1805 = vmatpush1.xpose.msra.mxu0 0.0
        %1806 = vmatprep.mubr.f32.mxu0 0.0
        %1807 = vmatmul.mubr.f32.gmra.mrb[0].mxu0 %v1737
        %v1808 = vpop.f32.mrb[0].mxu0
        %v1809 = vadd.f32 0.0, %v1808
        %v1810 = vpop.f32.mrb[0].mxu0
        %1811 = vdwg.mxu0
        %v1812 = vsel %vm1067, %v1809, -inf
        %1813 = vmax.xlane.f32.xlu0 %v1812
        %v1814 = vpop.xlane.xlu0 %1813
        %v1815 = vsub.f32 %v1809, %v1814
        %v1816 = vmul.f32 %v1815, 1.442695
        %v1817 = vpow.pop %v1816
        %v1818 = vsel %vm1067, %v1817, 0.0
        %1819 = vadd.xlane.f32.xlu0 %v1818
        %v1820 = vpop.xlane.xlu0 %1819
        %v1821 = vrcp.pop %v1820
        %v1822 = vmul.f32 %v1817, %v1821
        %v1824 = vsel %vm1067, %v1822, 0
        %1826 = vmatprep.subr.mxu0 0.0
        %1827 = vmatpush1.msra.mxu0 %v1728
        %1828 = vmatprep.subr.mxu0 0.0
        %1829 = vmatpush1.msra.mxu0 0.0
        %1830 = vmatprep.subr.mxu0 0.0
        %1831 = vmatpush1.msra.mxu0 0.0
        %1832 = vmatprep.subr.mxu0 0.0
        %1833 = vmatpush1.msra.mxu0 0.0
        %1834 = vmatprep.subr.mxu0 0.0
        %1835 = vmatpush1.msra.mxu0 0.0
        %1836 = vmatprep.subr.mxu0 0.0
        %1837 = vmatpush1.msra.mxu0 0.0
        %1838 = vmatprep.subr.mxu0 0.0
        %1839 = vmatpush1.msra.mxu0 0.0
        %1840 = vmatprep.subr.mxu0 0.0
        %1841 = vmatpush1.msra.mxu0 0.0
        %1842 = vmatprep.subr.mxu0 0.0
        %1843 = vmatpush1.msra.mxu0 0.0
        %1844 = vmatprep.subr.mxu0 0.0
        %1845 = vmatpush1.msra.mxu0 0.0
        %1846 = vmatprep.subr.mxu0 0.0
        %1847 = vmatpush1.msra.mxu0 0.0
        %1848 = vmatprep.subr.mxu0 0.0
        %1849 = vmatpush1.msra.mxu0 0.0
        %1850 = vmatprep.subr.mxu0 0.0
        %1851 = vmatpush1.msra.mxu0 0.0
        %1852 = vmatprep.subr.mxu0 0.0
        %1853 = vmatpush1.msra.mxu0 0.0
        %1854 = vmatprep.subr.mxu0 0.0
        %1855 = vmatpush1.msra.mxu0 0.0
        %1856 = vmatprep.subr.mxu0 0.0
        %1857 = vmatpush1.msra.mxu0 0.0
        %1858 = vmatprep.subr.mxu0 0.0
        %1859 = vmatpush1.msra.mxu0 0.0
        %1860 = vmatprep.subr.mxu0 0.0
        %1861 = vmatpush1.msra.mxu0 0.0
        %1862 = vmatprep.subr.mxu0 0.0
        %1863 = vmatpush1.msra.mxu0 0.0
        %1864 = vmatprep.subr.mxu0 0.0
        %1865 = vmatpush1.msra.mxu0 0.0
        %1866 = vmatprep.subr.mxu0 0.0
        %1867 = vmatpush1.msra.mxu0 0.0
        %1868 = vmatprep.subr.mxu0 0.0
        %1869 = vmatpush1.msra.mxu0 0.0
        %1870 = vmatprep.subr.mxu0 0.0
        %1871 = vmatpush1.msra.mxu0 0.0
        %1872 = vmatprep.subr.mxu0 0.0
        %1873 = vmatpush1.msra.mxu0 0.0
        %1874 = vmatprep.subr.mxu0 0.0
        %1875 = vmatpush1.msra.mxu0 0.0
        %1876 = vmatprep.subr.mxu0 0.0
        %1877 = vmatpush1.msra.mxu0 0.0
        %1878 = vmatprep.subr.mxu0 0.0
        %1879 = vmatpush1.msra.mxu0 0.0
        %1880 = vmatprep.subr.mxu0 0.0
        %1881 = vmatpush1.msra.mxu0 0.0
        %1882 = vmatprep.subr.mxu0 0.0
        %1883 = vmatpush1.msra.mxu0 0.0
        %1884 = vmatprep.subr.mxu0 0.0
        %1885 = vmatpush1.msra.mxu0 0.0
        %1886 = vmatprep.subr.mxu0 0.0
        %1887 = vmatpush1.msra.mxu0 0.0
        %1888 = vmatprep.subr.mxu0 0.0
        %1889 = vmatpush1.msra.mxu0 0.0
        %1890 = vmatprep.mubr.f32.mxu0 0.0
        %1891 = vmatmul.mubr.f32.gmra.mrb[0].mxu0 %v1824
        %v1892 = vpop.f32.mrb[0].mxu0
        %v1893 = vadd.f32 0.0, %v1892
        %v1894 = vpop.f32.mrb[0].mxu0
        %1895 = vdwg.mxu0
        %v1897 = vsel %vm1067, %v1557, 0
        %v1900 = vsel %vm1067, %v1645, 0
        %1902 = vmatprep.subr.mxu0 0.0
        %1903 = vmatpush1.xpose.msra.mxu0 %v1900
        %1904 = vmatprep.subr.mxu0 0.0
        %1905 = vmatpush1.xpose.msra.mxu0 0.0
        %1906 = vmatprep.subr.mxu0 0.0
        %1907 = vmatpush1.xpose.msra.mxu0 0.0
        %1908 = vmatprep.subr.mxu0 0.0
        %1909 = vmatpush1.xpose.msra.mxu0 0.0
        %1910 = vmatprep.subr.mxu0 0.0
        %1911 = vmatpush1.xpose.msra.mxu0 0.0
        %1912 = vmatprep.subr.mxu0 0.0
        %1913 = vmatpush1.xpose.msra.mxu0 0.0
        %1914 = vmatprep.subr.mxu0 0.0
        %1915 = vmatpush1.xpose.msra.mxu0 0.0
        %1916 = vmatprep.subr.mxu0 0.0
        %1917 = vmatpush1.xpose.msra.mxu0 0.0
        %1918 = vmatprep.subr.mxu0 0.0
        %1919 = vmatpush1.xpose.msra.mxu0 0.0
        %1920 = vmatprep.subr.mxu0 0.0
        %1921 = vmatpush1.xpose.msra.mxu0 0.0
        %1922 = vmatprep.subr.mxu0 0.0
        %1923 = vmatpush1.xpose.msra.mxu0 0.0
        %1924 = vmatprep.subr.mxu0 0.0
        %1925 = vmatpush1.xpose.msra.mxu0 0.0
        %1926 = vmatprep.subr.mxu0 0.0
        %1927 = vmatpush1.xpose.msra.mxu0 0.0
        %1928 = vmatprep.subr.mxu0 0.0
        %1929 = vmatpush1.xpose.msra.mxu0 0.0
        %1930 = vmatprep.subr.mxu0 0.0
        %1931 = vmatpush1.xpose.msra.mxu0 0.0
        %1932 = vmatprep.subr.mxu0 0.0
        %1933 = vmatpush1.xpose.msra.mxu0 0.0
        %1934 = vmatprep.subr.mxu0 0.0
        %1935 = vmatpush1.xpose.msra.mxu0 0.0
        %1936 = vmatprep.subr.mxu0 0.0
        %1937 = vmatpush1.xpose.msra.mxu0 0.0
        %1938 = vmatprep.subr.mxu0 0.0
        %1939 = vmatpush1.xpose.msra.mxu0 0.0
        %1940 = vmatprep.subr.mxu0 0.0
        %1941 = vmatpush1.xpose.msra.mxu0 0.0
        %1942 = vmatprep.subr.mxu0 0.0
        %1943 = vmatpush1.xpose.msra.mxu0 0.0
        %1944 = vmatprep.subr.mxu0 0.0
        %1945 = vmatpush1.xpose.msra.mxu0 0.0
        %1946 = vmatprep.subr.mxu0 0.0
        %1947 = vmatpush1.xpose.msra.mxu0 0.0
        %1948 = vmatprep.subr.mxu0 0.0
        %1949 = vmatpush1.xpose.msra.mxu0 0.0
        %1950 = vmatprep.subr.mxu0 0.0
        %1951 = vmatpush1.xpose.msra.mxu0 0.0
        %1952 = vmatprep.subr.mxu0 0.0
        %1953 = vmatpush1.xpose.msra.mxu0 0.0
        %1954 = vmatprep.subr.mxu0 0.0
        %1955 = vmatpush1.xpose.msra.mxu0 0.0
        %1956 = vmatprep.subr.mxu0 0.0
        %1957 = vmatpush1.xpose.msra.mxu0 0.0
        %1958 = vmatprep.subr.mxu0 0.0
        %1959 = vmatpush1.xpose.msra.mxu0 0.0
        %1960 = vmatprep.subr.mxu0 0.0
        %1961 = vmatpush1.xpose.msra.mxu0 0.0
        %1962 = vmatprep.subr.mxu0 0.0
        %1963 = vmatpush1.xpose.msra.mxu0 0.0
        %1964 = vmatprep.subr.mxu0 0.0
        %1965 = vmatpush1.xpose.msra.mxu0 0.0
        %1966 = vmatprep.mubr.f32.mxu0 0.0
        %1967 = vmatmul.mubr.f32.gmra.mrb[0].mxu0 %v1897
        %v1968 = vpop.f32.mrb[0].mxu0
        %v1969 = vadd.f32 0.0, %v1968
        %v1970 = vpop.f32.mrb[0].mxu0
        %1971 = vdwg.mxu0
        %v1972 = vsel %vm1067, %v1969, -inf
        %1973 = vmax.xlane.f32.xlu0 %v1972
        %v1974 = vpop.xlane.xlu0 %1973
        %v1975 = vsub.f32 %v1969, %v1974
        %v1976 = vmul.f32 %v1975, 1.442695
        %v1977 = vpow.pop %v1976
        %v1978 = vsel %vm1067, %v1977, 0.0
        %1979 = vadd.xlane.f32.xlu0 %v1978
        %v1980 = vpop.xlane.xlu0 %1979
        %v1981 = vrcp.pop %v1980
        %v1982 = vmul.f32 %v1977, %v1981
        %v1984 = vsel %vm1067, %v1982, 0
        %1986 = vmatprep.subr.mxu0 0.0
        %1987 = vmatpush1.msra.mxu0 %v1733
        %1988 = vmatprep.subr.mxu0 0.0
        %1989 = vmatpush1.msra.mxu0 0.0
        %1990 = vmatprep.subr.mxu0 0.0
        %1991 = vmatpush1.msra.mxu0 0.0
        %1992 = vmatprep.subr.mxu0 0.0
        %1993 = vmatpush1.msra.mxu0 0.0
        %1994 = vmatprep.subr.mxu0 0.0
        %1995 = vmatpush1.msra.mxu0 0.0
        %1996 = vmatprep.subr.mxu0 0.0
        %1997 = vmatpush1.msra.mxu0 0.0
        %1998 = vmatprep.subr.mxu0 0.0
        %1999 = vmatpush1.msra.mxu0 0.0
        %2000 = vmatprep.subr.mxu0 0.0
        %2001 = vmatpush1.msra.mxu0 0.0
        %2002 = vmatprep.subr.mxu0 0.0
        %2003 = vmatpush1.msra.mxu0 0.0
        %2004 = vmatprep.subr.mxu0 0.0
        %2005 = vmatpush1.msra.mxu0 0.0
        %2006 = vmatprep.subr.mxu0 0.0
        %2007 = vmatpush1.msra.mxu0 0.0
        %2008 = vmatprep.subr.mxu0 0.0
        %2009 = vmatpush1.msra.mxu0 0.0
        %2010 = vmatprep.subr.mxu0 0.0
        %2011 = vmatpush1.msra.mxu0 0.0
        %2012 = vmatprep.subr.mxu0 0.0
        %2013 = vmatpush1.msra.mxu0 0.0
        %2014 = vmatprep.subr.mxu0 0.0
        %2015 = vmatpush1.msra.mxu0 0.0
        %2016 = vmatprep.subr.mxu0 0.0
        %2017 = vmatpush1.msra.mxu0 0.0
        %2018 = vmatprep.subr.mxu0 0.0
        %2019 = vmatpush1.msra.mxu0 0.0
        %2020 = vmatprep.subr.mxu0 0.0
        %2021 = vmatpush1.msra.mxu0 0.0
        %2022 = vmatprep.subr.mxu0 0.0
        %2023 = vmatpush1.msra.mxu0 0.0
        %2024 = vmatprep.subr.mxu0 0.0
        %2025 = vmatpush1.msra.mxu0 0.0
        %2026 = vmatprep.subr.mxu0 0.0
        %2027 = vmatpush1.msra.mxu0 0.0
        %2028 = vmatprep.subr.mxu0 0.0
        %2029 = vmatpush1.msra.mxu0 0.0
        %2030 = vmatprep.subr.mxu0 0.0
        %2031 = vmatpush1.msra.mxu0 0.0
        %2032 = vmatprep.subr.mxu0 0.0
        %2033 = vmatpush1.msra.mxu0 0.0
        %2034 = vmatprep.subr.mxu0 0.0
        %2035 = vmatpush1.msra.mxu0 0.0
        %2036 = vmatprep.subr.mxu0 0.0
        %2037 = vmatpush1.msra.mxu0 0.0
        %2038 = vmatprep.subr.mxu0 0.0
        %2039 = vmatpush1.msra.mxu0 0.0
        %2040 = vmatprep.subr.mxu0 0.0
        %2041 = vmatpush1.msra.mxu0 0.0
        %2042 = vmatprep.subr.mxu0 0.0
        %2043 = vmatpush1.msra.mxu0 0.0
        %2044 = vmatprep.subr.mxu0 0.0
        %2045 = vmatpush1.msra.mxu0 0.0
        %2046 = vmatprep.subr.mxu0 0.0
        %2047 = vmatpush1.msra.mxu0 0.0
        %2048 = vmatprep.subr.mxu0 0.0
        %2049 = vmatpush1.msra.mxu0 0.0
        %2050 = vmatprep.mubr.f32.mxu0 0.0
        %2051 = vmatmul.mubr.f32.gmra.mrb[0].mxu0 %v1984
        %v2052 = vpop.f32.mrb[0].mxu0
        %v2053 = vadd.f32 0.0, %v2052
        %v2054 = vpop.f32.mrb[0].mxu0
        %2055 = vdwg.mxu0
        %s2056 = scalar_lea.vmem %s752, 8
        %v2057 = vld [vmem:[%s2056] sm:$0xff]
        %v2059 = vsel %vm1067, %v1893, 0
        %v2062 = vsel %vm1067, %v2053, 0
        %2064 = vmatprep.subr.mxu0 0.0
        %2065 = vmatpush1.msra.mxu0 %v2057
        %2066 = vmatprep.subr.mxu0 0.0
        %2067 = vmatpush1.msra.mxu0 0.0
        %2068 = vmatprep.subr.mxu0 0.0
        %2069 = vmatpush1.msra.mxu0 0.0
        %2070 = vmatprep.subr.mxu0 0.0
        %2071 = vmatpush1.msra.mxu0 0.0
        %2072 = vmatprep.subr.mxu0 0.0
        %2073 = vmatpush1.msra.mxu0 0.0
        %2074 = vmatprep.subr.mxu0 0.0
        %2075 = vmatpush1.msra.mxu0 0.0
        %2076 = vmatprep.subr.mxu0 0.0
        %2077 = vmatpush1.msra.mxu0 0.0
        %2078 = vmatprep.subr.mxu0 0.0
        %2079 = vmatpush1.msra.mxu0 0.0
        %2080 = vmatprep.subr.mxu0 0.0
        %2081 = vmatpush1.msra.mxu0 0.0
        %2082 = vmatprep.subr.mxu0 0.0
        %2083 = vmatpush1.msra.mxu0 0.0
        %2084 = vmatprep.subr.mxu0 0.0
        %2085 = vmatpush1.msra.mxu0 0.0
        %2086 = vmatprep.subr.mxu0 0.0
        %2087 = vmatpush1.msra.mxu0 0.0
        %2088 = vmatprep.subr.mxu0 0.0
        %2089 = vmatpush1.msra.mxu0 0.0
        %2090 = vmatprep.subr.mxu0 0.0
        %2091 = vmatpush1.msra.mxu0 0.0
        %2092 = vmatprep.subr.mxu0 0.0
        %2093 = vmatpush1.msra.mxu0 0.0
        %2094 = vmatprep.subr.mxu0 0.0
        %2095 = vmatpush1.msra.mxu0 0.0
        %2096 = vmatprep.subr.mxu0 0.0
        %2097 = vmatpush1.msra.mxu0 0.0
        %2098 = vmatprep.subr.mxu0 0.0
        %2099 = vmatpush1.msra.mxu0 0.0
        %2100 = vmatprep.subr.mxu0 0.0
        %2101 = vmatpush1.msra.mxu0 0.0
        %2102 = vmatprep.subr.mxu0 0.0
        %2103 = vmatpush1.msra.mxu0 0.0
        %2104 = vmatprep.subr.mxu0 0.0
        %2105 = vmatpush1.msra.mxu0 0.0
        %2106 = vmatprep.subr.mxu0 0.0
        %2107 = vmatpush1.msra.mxu0 0.0
        %2108 = vmatprep.subr.mxu0 0.0
        %2109 = vmatpush1.msra.mxu0 0.0
        %2110 = vmatprep.subr.mxu0 0.0
        %2111 = vmatpush1.msra.mxu0 0.0
        %2112 = vmatprep.subr.mxu0 0.0
        %2113 = vmatpush1.msra.mxu0 0.0
        %2114 = vmatprep.subr.mxu0 0.0
        %2115 = vmatpush1.msra.mxu0 0.0
        %2116 = vmatprep.subr.mxu0 0.0
        %2117 = vmatpush1.msra.mxu0 0.0
        %2118 = vmatprep.subr.mxu0 0.0
        %2119 = vmatpush1.msra.mxu0 0.0
        %2120 = vmatprep.subr.mxu0 0.0
        %2121 = vmatpush1.msra.mxu0 0.0
        %2122 = vmatprep.subr.mxu0 0.0
        %2123 = vmatpush1.msra.mxu0 0.0
        %2124 = vmatprep.subr.mxu0 0.0
        %2125 = vmatpush1.msra.mxu0 0.0
        %2126 = vmatprep.subr.mxu0 0.0
        %2127 = vmatpush1.msra.mxu0 0.0
        %2128 = vmatprep.mubr.f32.mxu0 0.0
        %2129 = vmatmul.mubr.f32.gmra.mrb[0].mxu0 %v2059
        %v2130 = vpop.f32.mrb[0].mxu0
        %v2131 = vadd.f32 0.0, %v2130
        %v2132 = vpop.f32.mrb[0].mxu0
        %2133 = vmatprep.mubr.f32.mxu0 0.0
        %2134 = vmatmul.mubr.f32.gmra.mrb[0].mxu0 %v2062
        %v2135 = vpop.f32.mrb[0].mxu0
        %v2136 = vadd.f32 0.0, %v2135
        %v2137 = vpop.f32.mrb[0].mxu0
        %2138 = vdwg.mxu0
        %v2139 = vadd.f32 %v1470, %v2131
        %v2140 = vadd.f32 %v1471, %v2136
        %s2141 = scalar_lea.vmem %s725, 64
        %v2142 = vld [vmem:[%s2141] sm:$0xff]
        %v2143 = vld [vmem:[%s2141 + $0x8] sm:$0xff]
        %v2144 = vld [vmem:[%s2141 + $0x10] sm:$0xff]
        %v2145 = vld [vmem:[%s2141 + $0x18] sm:$0xff]
        %s2146 = scalar_lea.vmem %s739, 2
        %v2147 = vld [vmem:[%s2146] sm:$0x1]
        %v2149 = vlaneseq
        %v2150 = vshrl.u32 %v2149, 7
        %v2151 = vsub.s32 0, %v2150
        %v2152 = vrot.slane %v2147, %v2151
        %2154 = vmatprep.subr.mxu0 0.0
        %2155 = vmatpush1.msra.mxu0 %v2142
        %2156 = vmatprep.subr.mxu0 0.0
        %2157 = vmatpush1.msra.mxu0 %v2143
        %2158 = vmatprep.subr.mxu0 0.0
        %2159 = vmatpush1.msra.mxu0 %v2144
        %2160 = vmatprep.subr.mxu0 0.0
        %2161 = vmatpush1.msra.mxu0 %v2145
        %2162 = vmatprep.subr.mxu0 0.0
        %2163 = vmatpush1.msra.mxu0 0.0
        %2164 = vmatprep.subr.mxu0 0.0
        %2165 = vmatpush1.msra.mxu0 0.0
        %2166 = vmatprep.subr.mxu0 0.0
        %2167 = vmatpush1.msra.mxu0 0.0
        %2168 = vmatprep.subr.mxu0 0.0
        %2169 = vmatpush1.msra.mxu0 0.0
        %2170 = vmatprep.subr.mxu0 0.0
        %2171 = vmatpush1.msra.mxu0 0.0
        %2172 = vmatprep.subr.mxu0 0.0
        %2173 = vmatpush1.msra.mxu0 0.0
        %2174 = vmatprep.subr.mxu0 0.0
        %2175 = vmatpush1.msra.mxu0 0.0
        %2176 = vmatprep.subr.mxu0 0.0
        %2177 = vmatpush1.msra.mxu0 0.0
        %2178 = vmatprep.subr.mxu0 0.0
        %2179 = vmatpush1.msra.mxu0 0.0
        %2180 = vmatprep.subr.mxu0 0.0
        %2181 = vmatpush1.msra.mxu0 0.0
        %2182 = vmatprep.subr.mxu0 0.0
        %2183 = vmatpush1.msra.mxu0 0.0
        %2184 = vmatprep.subr.mxu0 0.0
        %2185 = vmatpush1.msra.mxu0 0.0
        %2186 = vmatprep.subr.mxu0 0.0
        %2187 = vmatpush1.msra.mxu0 0.0
        %2188 = vmatprep.subr.mxu0 0.0
        %2189 = vmatpush1.msra.mxu0 0.0
        %2190 = vmatprep.subr.mxu0 0.0
        %2191 = vmatpush1.msra.mxu0 0.0
        %2192 = vmatprep.subr.mxu0 0.0
        %2193 = vmatpush1.msra.mxu0 0.0
        %2194 = vmatprep.subr.mxu0 0.0
        %2195 = vmatpush1.msra.mxu0 0.0
        %2196 = vmatprep.subr.mxu0 0.0
        %2197 = vmatpush1.msra.mxu0 0.0
        %2198 = vmatprep.subr.mxu0 0.0
        %2199 = vmatpush1.msra.mxu0 0.0
        %2200 = vmatprep.subr.mxu0 0.0
        %2201 = vmatpush1.msra.mxu0 0.0
        %2202 = vmatprep.subr.mxu0 0.0
        %2203 = vmatpush1.msra.mxu0 0.0
        %2204 = vmatprep.subr.mxu0 0.0
        %2205 = vmatpush1.msra.mxu0 0.0
        %2206 = vmatprep.subr.mxu0 0.0
        %2207 = vmatpush1.msra.mxu0 0.0
        %2208 = vmatprep.subr.mxu0 0.0
        %2209 = vmatpush1.msra.mxu0 0.0
        %2210 = vmatprep.subr.mxu0 0.0
        %2211 = vmatpush1.msra.mxu0 0.0
        %2212 = vmatprep.subr.mxu0 0.0
        %2213 = vmatpush1.msra.mxu0 0.0
        %2214 = vmatprep.subr.mxu0 0.0
        %2215 = vmatpush1.msra.mxu0 0.0
        %2216 = vmatprep.subr.mxu0 0.0
        %2217 = vmatpush1.msra.mxu0 0.0
        %2218 = vmatprep.mubr.f32.mxu0 0.0
        %2219 = vmatmul.mubr.f32.gmra.mrb[0].mxu0 %v815
        %v2220 = vpop.f32.mrb[0].mxu0
        %v2221 = vadd.f32 %v2152, %v2220
        %v2222 = vpop.f32.mrb[0].mxu0
        %2223 = vmatprep.mubr.f32.mxu0 0.0
        %2224 = vmatmul.mubr.f32.gmra.mrb[0].mxu0 %v818
        %v2225 = vpop.f32.mrb[0].mxu0
        %v2226 = vadd.f32 %v2152, %v2225
        %v2227 = vpop.f32.mrb[0].mxu0
        %2228 = vdwg.mxu0
        %s2229 = scalar_lea.vmem %s730, 64
        %v2230 = vld [vmem:[%s2229] sm:$0xff]
        %v2231 = vld [vmem:[%s2229 + $0x8] sm:$0xff]
        %v2232 = vld [vmem:[%s2229 + $0x10] sm:$0xff]
        %v2233 = vld [vmem:[%s2229 + $0x18] sm:$0xff]
        %s2234 = scalar_lea.vmem %s743, 2
        %v2235 = vld [vmem:[%s2234] sm:$0x1]
        %v2237 = vlaneseq
        %v2238 = vshrl.u32 %v2237, 7
        %v2239 = vsub.s32 0, %v2238
        %v2240 = vrot.slane %v2235, %v2239
        %2242 = vmatprep.subr.mxu0 0.0
        %2243 = vmatpush1.msra.mxu0 %v2230
        %2244 = vmatprep.subr.mxu0 0.0
        %2245 = vmatpush1.msra.mxu0 %v2231
        %2246 = vmatprep.subr.mxu0 0.0
        %2247 = vmatpush1.msra.mxu0 %v2232
        %2248 = vmatprep.subr.mxu0 0.0
        %2249 = vmatpush1.msra.mxu0 %v2233
        %2250 = vmatprep.subr.mxu0 0.0
        %2251 = vmatpush1.msra.mxu0 0.0
        %2252 = vmatprep.subr.mxu0 0.0
        %2253 = vmatpush1.msra.mxu0 0.0
        %2254 = vmatprep.subr.mxu0 0.0
        %2255 = vmatpush1.msra.mxu0 0.0
        %2256 = vmatprep.subr.mxu0 0.0
        %2257 = vmatpush1.msra.mxu0 0.0
        %2258 = vmatprep.subr.mxu0 0.0
        %2259 = vmatpush1.msra.mxu0 0.0
        %2260 = vmatprep.subr.mxu0 0.0
        %2261 = vmatpush1.msra.mxu0 0.0
        %2262 = vmatprep.subr.mxu0 0.0
        %2263 = vmatpush1.msra.mxu0 0.0
        %2264 = vmatprep.subr.mxu0 0.0
        %2265 = vmatpush1.msra.mxu0 0.0
        %2266 = vmatprep.subr.mxu0 0.0
        %2267 = vmatpush1.msra.mxu0 0.0
        %2268 = vmatprep.subr.mxu0 0.0
        %2269 = vmatpush1.msra.mxu0 0.0
        %2270 = vmatprep.subr.mxu0 0.0
        %2271 = vmatpush1.msra.mxu0 0.0
        %2272 = vmatprep.subr.mxu0 0.0
        %2273 = vmatpush1.msra.mxu0 0.0
        %2274 = vmatprep.subr.mxu0 0.0
        %2275 = vmatpush1.msra.mxu0 0.0
        %2276 = vmatprep.subr.mxu0 0.0
        %2277 = vmatpush1.msra.mxu0 0.0
        %2278 = vmatprep.subr.mxu0 0.0
        %2279 = vmatpush1.msra.mxu0 0.0
        %2280 = vmatprep.subr.mxu0 0.0
        %2281 = vmatpush1.msra.mxu0 0.0
        %2282 = vmatprep.subr.mxu0 0.0
        %2283 = vmatpush1.msra.mxu0 0.0
        %2284 = vmatprep.subr.mxu0 0.0
        %2285 = vmatpush1.msra.mxu0 0.0
        %2286 = vmatprep.subr.mxu0 0.0
        %2287 = vmatpush1.msra.mxu0 0.0
        %2288 = vmatprep.subr.mxu0 0.0
        %2289 = vmatpush1.msra.mxu0 0.0
        %2290 = vmatprep.subr.mxu0 0.0
        %2291 = vmatpush1.msra.mxu0 0.0
        %2292 = vmatprep.subr.mxu0 0.0
        %2293 = vmatpush1.msra.mxu0 0.0
        %2294 = vmatprep.subr.mxu0 0.0
        %2295 = vmatpush1.msra.mxu0 0.0
        %2296 = vmatprep.subr.mxu0 0.0
        %2297 = vmatpush1.msra.mxu0 0.0
        %2298 = vmatprep.subr.mxu0 0.0
        %2299 = vmatpush1.msra.mxu0 0.0
        %2300 = vmatprep.subr.mxu0 0.0
        %2301 = vmatpush1.msra.mxu0 0.0
        %2302 = vmatprep.subr.mxu0 0.0
        %2303 = vmatpush1.msra.mxu0 0.0
        %2304 = vmatprep.subr.mxu0 0.0
        %2305 = vmatpush1.msra.mxu0 0.0
        %2306 = vmatprep.mubr.f32.mxu0 0.0
        %2307 = vmatmul.mubr.f32.gmra.mrb[0].mxu0 %v815
        %v2308 = vpop.f32.mrb[0].mxu0
        %v2309 = vadd.f32 %v2240, %v2308
        %v2310 = vpop.f32.mrb[0].mxu0
        %2311 = vmatprep.mubr.f32.mxu0 0.0
        %2312 = vmatmul.mubr.f32.gmra.mrb[0].mxu0 %v818
        %v2313 = vpop.f32.mrb[0].mxu0
        %v2314 = vadd.f32 %v2240, %v2313
        %v2315 = vpop.f32.mrb[0].mxu0
        %2316 = vdwg.mxu0
        %s2317 = scalar_lea.vmem %s735, 64
        %v2318 = vld [vmem:[%s2317] sm:$0xff]
        %v2319 = vld [vmem:[%s2317 + $0x8] sm:$0xff]
        %v2320 = vld [vmem:[%s2317 + $0x10] sm:$0xff]
        %v2321 = vld [vmem:[%s2317 + $0x18] sm:$0xff]
        %s2322 = scalar_lea.vmem %s747, 2
        %v2323 = vld [vmem:[%s2322] sm:$0x1]
        %v2325 = vlaneseq
        %v2326 = vshrl.u32 %v2325, 7
        %v2327 = vsub.s32 0, %v2326
        %v2328 = vrot.slane %v2323, %v2327
        %2330 = vmatprep.subr.mxu0 0.0
        %2331 = vmatpush1.msra.mxu0 %v2318
        %2332 = vmatprep.subr.mxu0 0.0
        %2333 = vmatpush1.msra.mxu0 %v2319
        %2334 = vmatprep.subr.mxu0 0.0
        %2335 = vmatpush1.msra.mxu0 %v2320
        %2336 = vmatprep.subr.mxu0 0.0
        %2337 = vmatpush1.msra.mxu0 %v2321
        %2338 = vmatprep.subr.mxu0 0.0
        %2339 = vmatpush1.msra.mxu0 0.0
        %2340 = vmatprep.subr.mxu0 0.0
        %2341 = vmatpush1.msra.mxu0 0.0
        %2342 = vmatprep.subr.mxu0 0.0
        %2343 = vmatpush1.msra.mxu0 0.0
        %2344 = vmatprep.subr.mxu0 0.0
        %2345 = vmatpush1.msra.mxu0 0.0
        %2346 = vmatprep.subr.mxu0 0.0
        %2347 = vmatpush1.msra.mxu0 0.0
        %2348 = vmatprep.subr.mxu0 0.0
        %2349 = vmatpush1.msra.mxu0 0.0
        %2350 = vmatprep.subr.mxu0 0.0
        %2351 = vmatpush1.msra.mxu0 0.0
        %2352 = vmatprep.subr.mxu0 0.0
        %2353 = vmatpush1.msra.mxu0 0.0
        %2354 = vmatprep.subr.mxu0 0.0
        %2355 = vmatpush1.msra.mxu0 0.0
        %2356 = vmatprep.subr.mxu0 0.0
        %2357 = vmatpush1.msra.mxu0 0.0
        %2358 = vmatprep.subr.mxu0 0.0
        %2359 = vmatpush1.msra.mxu0 0.0
        %2360 = vmatprep.subr.mxu0 0.0
        %2361 = vmatpush1.msra.mxu0 0.0
        %2362 = vmatprep.subr.mxu0 0.0
        %2363 = vmatpush1.msra.mxu0 0.0
        %2364 = vmatprep.subr.mxu0 0.0
        %2365 = vmatpush1.msra.mxu0 0.0
        %2366 = vmatprep.subr.mxu0 0.0
        %2367 = vmatpush1.msra.mxu0 0.0
        %2368 = vmatprep.subr.mxu0 0.0
        %2369 = vmatpush1.msra.mxu0 0.0
        %2370 = vmatprep.subr.mxu0 0.0
        %2371 = vmatpush1.msra.mxu0 0.0
        %2372 = vmatprep.subr.mxu0 0.0
        %2373 = vmatpush1.msra.mxu0 0.0
        %2374 = vmatprep.subr.mxu0 0.0
        %2375 = vmatpush1.msra.mxu0 0.0
        %2376 = vmatprep.subr.mxu0 0.0
        %2377 = vmatpush1.msra.mxu0 0.0
        %2378 = vmatprep.subr.mxu0 0.0
        %2379 = vmatpush1.msra.mxu0 0.0
        %2380 = vmatprep.subr.mxu0 0.0
        %2381 = vmatpush1.msra.mxu0 0.0
        %2382 = vmatprep.subr.mxu0 0.0
        %2383 = vmatpush1.msra.mxu0 0.0
        %2384 = vmatprep.subr.mxu0 0.0
        %2385 = vmatpush1.msra.mxu0 0.0
        %2386 = vmatprep.subr.mxu0 0.0
        %2387 = vmatpush1.msra.mxu0 0.0
        %2388 = vmatprep.subr.mxu0 0.0
        %2389 = vmatpush1.msra.mxu0 0.0
        %2390 = vmatprep.subr.mxu0 0.0
        %2391 = vmatpush1.msra.mxu0 0.0
        %2392 = vmatprep.subr.mxu0 0.0
        %2393 = vmatpush1.msra.mxu0 0.0
        %2394 = vmatprep.mubr.f32.mxu0 0.0
        %2395 = vmatmul.mubr.f32.gmra.mrb[0].mxu0 %v815
        %v2396 = vpop.f32.mrb[0].mxu0
        %v2397 = vadd.f32 %v2328, %v2396
        %v2398 = vpop.f32.mrb[0].mxu0
        %2399 = vmatprep.mubr.f32.mxu0 0.0
        %2400 = vmatmul.mubr.f32.gmra.mrb[0].mxu0 %v818
        %v2401 = vpop.f32.mrb[0].mxu0
        %v2402 = vadd.f32 %v2328, %v2401
        %v2403 = vpop.f32.mrb[0].mxu0
        %2404 = vdwg.mxu0
        %v2406 = vsel %vm1067, %v2221, 0
        %v2409 = vsel %vm1067, %v2309, 0
        %2411 = vmatprep.subr.mxu0 0.0
        %2412 = vmatpush1.xpose.msra.mxu0 %v2409
        %2413 = vmatprep.subr.mxu0 0.0
        %2414 = vmatpush1.xpose.msra.mxu0 0.0
        %2415 = vmatprep.subr.mxu0 0.0
        %2416 = vmatpush1.xpose.msra.mxu0 0.0
        %2417 = vmatprep.subr.mxu0 0.0
        %2418 = vmatpush1.xpose.msra.mxu0 0.0
        %2419 = vmatprep.subr.mxu0 0.0
        %2420 = vmatpush1.xpose.msra.mxu0 0.0
        %2421 = vmatprep.subr.mxu0 0.0
        %2422 = vmatpush1.xpose.msra.mxu0 0.0
        %2423 = vmatprep.subr.mxu0 0.0
        %2424 = vmatpush1.xpose.msra.mxu0 0.0
        %2425 = vmatprep.subr.mxu0 0.0
        %2426 = vmatpush1.xpose.msra.mxu0 0.0
        %2427 = vmatprep.subr.mxu0 0.0
        %2428 = vmatpush1.xpose.msra.mxu0 0.0
        %2429 = vmatprep.subr.mxu0 0.0
        %2430 = vmatpush1.xpose.msra.mxu0 0.0
        %2431 = vmatprep.subr.mxu0 0.0
        %2432 = vmatpush1.xpose.msra.mxu0 0.0
        %2433 = vmatprep.subr.mxu0 0.0
        %2434 = vmatpush1.xpose.msra.mxu0 0.0
        %2435 = vmatprep.subr.mxu0 0.0
        %2436 = vmatpush1.xpose.msra.mxu0 0.0
        %2437 = vmatprep.subr.mxu0 0.0
        %2438 = vmatpush1.xpose.msra.mxu0 0.0
        %2439 = vmatprep.subr.mxu0 0.0
        %2440 = vmatpush1.xpose.msra.mxu0 0.0
        %2441 = vmatprep.subr.mxu0 0.0
        %2442 = vmatpush1.xpose.msra.mxu0 0.0
        %2443 = vmatprep.subr.mxu0 0.0
        %2444 = vmatpush1.xpose.msra.mxu0 0.0
        %2445 = vmatprep.subr.mxu0 0.0
        %2446 = vmatpush1.xpose.msra.mxu0 0.0
        %2447 = vmatprep.subr.mxu0 0.0
        %2448 = vmatpush1.xpose.msra.mxu0 0.0
        %2449 = vmatprep.subr.mxu0 0.0
        %2450 = vmatpush1.xpose.msra.mxu0 0.0
        %2451 = vmatprep.subr.mxu0 0.0
        %2452 = vmatpush1.xpose.msra.mxu0 0.0
        %2453 = vmatprep.subr.mxu0 0.0
        %2454 = vmatpush1.xpose.msra.mxu0 0.0
        %2455 = vmatprep.subr.mxu0 0.0
        %2456 = vmatpush1.xpose.msra.mxu0 0.0
        %2457 = vmatprep.subr.mxu0 0.0
        %2458 = vmatpush1.xpose.msra.mxu0 0.0
        %2459 = vmatprep.subr.mxu0 0.0
        %2460 = vmatpush1.xpose.msra.mxu0 0.0
        %2461 = vmatprep.subr.mxu0 0.0
        %2462 = vmatpush1.xpose.msra.mxu0 0.0
        %2463 = vmatprep.subr.mxu0 0.0
        %2464 = vmatpush1.xpose.msra.mxu0 0.0
        %2465 = vmatprep.subr.mxu0 0.0
        %2466 = vmatpush1.xpose.msra.mxu0 0.0
        %2467 = vmatprep.subr.mxu0 0.0
        %2468 = vmatpush1.xpose.msra.mxu0 0.0
        %2469 = vmatprep.subr.mxu0 0.0
        %2470 = vmatpush1.xpose.msra.mxu0 0.0
        %2471 = vmatprep.subr.mxu0 0.0
        %2472 = vmatpush1.xpose.msra.mxu0 0.0
        %2473 = vmatprep.subr.mxu0 0.0
        %2474 = vmatpush1.xpose.msra.mxu0 0.0
        %2475 = vmatprep.mubr.f32.mxu0 0.0
        %2476 = vmatmul.mubr.f32.gmra.mrb[0].mxu0 %v2406
        %v2477 = vpop.f32.mrb[0].mxu0
        %v2478 = vadd.f32 0.0, %v2477
        %v2479 = vpop.f32.mrb[0].mxu0
        %2480 = vdwg.mxu0
        %v2481 = vsel %vm1067, %v2478, -inf
        %2482 = vmax.xlane.f32.xlu0 %v2481
        %v2483 = vpop.xlane.xlu0 %2482
        %v2484 = vsub.f32 %v2478, %v2483
        %v2485 = vmul.f32 %v2484, 1.442695
        %v2486 = vpow.pop %v2485
        %v2487 = vsel %vm1067, %v2486, 0.0
        %2488 = vadd.xlane.f32.xlu0 %v2487
        %v2489 = vpop.xlane.xlu0 %2488
        %v2490 = vrcp.pop %v2489
        %v2491 = vmul.f32 %v2486, %v2490
        %v2493 = vsel %vm1067, %v2491, 0
        %2495 = vmatprep.subr.mxu0 0.0
        %2496 = vmatpush1.msra.mxu0 %v2397
        %2497 = vmatprep.subr.mxu0 0.0
        %2498 = vmatpush1.msra.mxu0 0.0
        %2499 = vmatprep.subr.mxu0 0.0
        %2500 = vmatpush1.msra.mxu0 0.0
        %2501 = vmatprep.subr.mxu0 0.0
        %2502 = vmatpush1.msra.mxu0 0.0
        %2503 = vmatprep.subr.mxu0 0.0
        %2504 = vmatpush1.msra.mxu0 0.0
        %2505 = vmatprep.subr.mxu0 0.0
        %2506 = vmatpush1.msra.mxu0 0.0
        %2507 = vmatprep.subr.mxu0 0.0
        %2508 = vmatpush1.msra.mxu0 0.0
        %2509 = vmatprep.subr.mxu0 0.0
        %2510 = vmatpush1.msra.mxu0 0.0
        %2511 = vmatprep.subr.mxu0 0.0
        %2512 = vmatpush1.msra.mxu0 0.0
        %2513 = vmatprep.subr.mxu0 0.0
        %2514 = vmatpush1.msra.mxu0 0.0
        %2515 = vmatprep.subr.mxu0 0.0
        %2516 = vmatpush1.msra.mxu0 0.0
        %2517 = vmatprep.subr.mxu0 0.0
        %2518 = vmatpush1.msra.mxu0 0.0
        %2519 = vmatprep.subr.mxu0 0.0
        %2520 = vmatpush1.msra.mxu0 0.0
        %2521 = vmatprep.subr.mxu0 0.0
        %2522 = vmatpush1.msra.mxu0 0.0
        %2523 = vmatprep.subr.mxu0 0.0
        %2524 = vmatpush1.msra.mxu0 0.0
        %2525 = vmatprep.subr.mxu0 0.0
        %2526 = vmatpush1.msra.mxu0 0.0
        %2527 = vmatprep.subr.mxu0 0.0
        %2528 = vmatpush1.msra.mxu0 0.0
        %2529 = vmatprep.subr.mxu0 0.0
        %2530 = vmatpush1.msra.mxu0 0.0
        %2531 = vmatprep.subr.mxu0 0.0
        %2532 = vmatpush1.msra.mxu0 0.0
        %2533 = vmatprep.subr.mxu0 0.0
        %2534 = vmatpush1.msra.mxu0 0.0
        %2535 = vmatprep.subr.mxu0 0.0
        %2536 = vmatpush1.msra.mxu0 0.0
        %2537 = vmatprep.subr.mxu0 0.0
        %2538 = vmatpush1.msra.mxu0 0.0
        %2539 = vmatprep.subr.mxu0 0.0
        %2540 = vmatpush1.msra.mxu0 0.0
        %2541 = vmatprep.subr.mxu0 0.0
        %2542 = vmatpush1.msra.mxu0 0.0
        %2543 = vmatprep.subr.mxu0 0.0
        %2544 = vmatpush1.msra.mxu0 0.0
        %2545 = vmatprep.subr.mxu0 0.0
        %2546 = vmatpush1.msra.mxu0 0.0
        %2547 = vmatprep.subr.mxu0 0.0
        %2548 = vmatpush1.msra.mxu0 0.0
        %2549 = vmatprep.subr.mxu0 0.0
        %2550 = vmatpush1.msra.mxu0 0.0
        %2551 = vmatprep.subr.mxu0 0.0
        %2552 = vmatpush1.msra.mxu0 0.0
        %2553 = vmatprep.subr.mxu0 0.0
        %2554 = vmatpush1.msra.mxu0 0.0
        %2555 = vmatprep.subr.mxu0 0.0
        %2556 = vmatpush1.msra.mxu0 0.0
        %2557 = vmatprep.subr.mxu0 0.0
        %2558 = vmatpush1.msra.mxu0 0.0
        %2559 = vmatprep.mubr.f32.mxu0 0.0
        %2560 = vmatmul.mubr.f32.gmra.mrb[0].mxu0 %v2493
        %v2561 = vpop.f32.mrb[0].mxu0
        %v2562 = vadd.f32 0.0, %v2561
        %v2563 = vpop.f32.mrb[0].mxu0
        %2564 = vdwg.mxu0
        %v2566 = vsel %vm1067, %v2226, 0
        %v2569 = vsel %vm1067, %v2314, 0
        %2571 = vmatprep.subr.mxu0 0.0
        %2572 = vmatpush1.xpose.msra.mxu0 %v2569
        %2573 = vmatprep.subr.mxu0 0.0
        %2574 = vmatpush1.xpose.msra.mxu0 0.0
        %2575 = vmatprep.subr.mxu0 0.0
        %2576 = vmatpush1.xpose.msra.mxu0 0.0
        %2577 = vmatprep.subr.mxu0 0.0
        %2578 = vmatpush1.xpose.msra.mxu0 0.0
        %2579 = vmatprep.subr.mxu0 0.0
        %2580 = vmatpush1.xpose.msra.mxu0 0.0
        %2581 = vmatprep.subr.mxu0 0.0
        %2582 = vmatpush1.xpose.msra.mxu0 0.0
        %2583 = vmatprep.subr.mxu0 0.0
        %2584 = vmatpush1.xpose.msra.mxu0 0.0
        %2585 = vmatprep.subr.mxu0 0.0
        %2586 = vmatpush1.xpose.msra.mxu0 0.0
        %2587 = vmatprep.subr.mxu0 0.0
        %2588 = vmatpush1.xpose.msra.mxu0 0.0
        %2589 = vmatprep.subr.mxu0 0.0
        %2590 = vmatpush1.xpose.msra.mxu0 0.0
        %2591 = vmatprep.subr.mxu0 0.0
        %2592 = vmatpush1.xpose.msra.mxu0 0.0
        %2593 = vmatprep.subr.mxu0 0.0
        %2594 = vmatpush1.xpose.msra.mxu0 0.0
        %2595 = vmatprep.subr.mxu0 0.0
        %2596 = vmatpush1.xpose.msra.mxu0 0.0
        %2597 = vmatprep.subr.mxu0 0.0
        %2598 = vmatpush1.xpose.msra.mxu0 0.0
        %2599 = vmatprep.subr.mxu0 0.0
        %2600 = vmatpush1.xpose.msra.mxu0 0.0
        %2601 = vmatprep.subr.mxu0 0.0
        %2602 = vmatpush1.xpose.msra.mxu0 0.0
        %2603 = vmatprep.subr.mxu0 0.0
        %2604 = vmatpush1.xpose.msra.mxu0 0.0
        %2605 = vmatprep.subr.mxu0 0.0
        %2606 = vmatpush1.xpose.msra.mxu0 0.0
        %2607 = vmatprep.subr.mxu0 0.0
        %2608 = vmatpush1.xpose.msra.mxu0 0.0
        %2609 = vmatprep.subr.mxu0 0.0
        %2610 = vmatpush1.xpose.msra.mxu0 0.0
        %2611 = vmatprep.subr.mxu0 0.0
        %2612 = vmatpush1.xpose.msra.mxu0 0.0
        %2613 = vmatprep.subr.mxu0 0.0
        %2614 = vmatpush1.xpose.msra.mxu0 0.0
        %2615 = vmatprep.subr.mxu0 0.0
        %2616 = vmatpush1.xpose.msra.mxu0 0.0
        %2617 = vmatprep.subr.mxu0 0.0
        %2618 = vmatpush1.xpose.msra.mxu0 0.0
        %2619 = vmatprep.subr.mxu0 0.0
        %2620 = vmatpush1.xpose.msra.mxu0 0.0
        %2621 = vmatprep.subr.mxu0 0.0
        %2622 = vmatpush1.xpose.msra.mxu0 0.0
        %2623 = vmatprep.subr.mxu0 0.0
        %2624 = vmatpush1.xpose.msra.mxu0 0.0
        %2625 = vmatprep.subr.mxu0 0.0
        %2626 = vmatpush1.xpose.msra.mxu0 0.0
        %2627 = vmatprep.subr.mxu0 0.0
        %2628 = vmatpush1.xpose.msra.mxu0 0.0
        %2629 = vmatprep.subr.mxu0 0.0
        %2630 = vmatpush1.xpose.msra.mxu0 0.0
        %2631 = vmatprep.subr.mxu0 0.0
        %2632 = vmatpush1.xpose.msra.mxu0 0.0
        %2633 = vmatprep.subr.mxu0 0.0
        %2634 = vmatpush1.xpose.msra.mxu0 0.0
        %2635 = vmatprep.mubr.f32.mxu0 0.0
        %2636 = vmatmul.mubr.f32.gmra.mrb[0].mxu0 %v2566
        %v2637 = vpop.f32.mrb[0].mxu0
        %v2638 = vadd.f32 0.0, %v2637
        %v2639 = vpop.f32.mrb[0].mxu0
        %2640 = vdwg.mxu0
        %v2641 = vsel %vm1067, %v2638, -inf
        %2642 = vmax.xlane.f32.xlu0 %v2641
        %v2643 = vpop.xlane.xlu0 %2642
        %v2644 = vsub.f32 %v2638, %v2643
        %v2645 = vmul.f32 %v2644, 1.442695
        %v2646 = vpow.pop %v2645
        %v2647 = vsel %vm1067, %v2646, 0.0
        %2648 = vadd.xlane.f32.xlu0 %v2647
        %v2649 = vpop.xlane.xlu0 %2648
        %v2650 = vrcp.pop %v2649
        %v2651 = vmul.f32 %v2646, %v2650
        %v2653 = vsel %vm1067, %v2651, 0
        %2655 = vmatprep.subr.mxu0 0.0
        %2656 = vmatpush1.msra.mxu0 %v2402
        %2657 = vmatprep.subr.mxu0 0.0
        %2658 = vmatpush1.msra.mxu0 0.0
        %2659 = vmatprep.subr.mxu0 0.0
        %2660 = vmatpush1.msra.mxu0 0.0
        %2661 = vmatprep.subr.mxu0 0.0
        %2662 = vmatpush1.msra.mxu0 0.0
        %2663 = vmatprep.subr.mxu0 0.0
        %2664 = vmatpush1.msra.mxu0 0.0
        %2665 = vmatprep.subr.mxu0 0.0
        %2666 = vmatpush1.msra.mxu0 0.0
        %2667 = vmatprep.subr.mxu0 0.0
        %2668 = vmatpush1.msra.mxu0 0.0
        %2669 = vmatprep.subr.mxu0 0.0
        %2670 = vmatpush1.msra.mxu0 0.0
        %2671 = vmatprep.subr.mxu0 0.0
        %2672 = vmatpush1.msra.mxu0 0.0
        %2673 = vmatprep.subr.mxu0 0.0
        %2674 = vmatpush1.msra.mxu0 0.0
        %2675 = vmatprep.subr.mxu0 0.0
        %2676 = vmatpush1.msra.mxu0 0.0
        %2677 = vmatprep.subr.mxu0 0.0
        %2678 = vmatpush1.msra.mxu0 0.0
        %2679 = vmatprep.subr.mxu0 0.0
        %2680 = vmatpush1.msra.mxu0 0.0
        %2681 = vmatprep.subr.mxu0 0.0
        %2682 = vmatpush1.msra.mxu0 0.0
        %2683 = vmatprep.subr.mxu0 0.0
        %2684 = vmatpush1.msra.mxu0 0.0
        %2685 = vmatprep.subr.mxu0 0.0
        %2686 = vmatpush1.msra.mxu0 0.0
        %2687 = vmatprep.subr.mxu0 0.0
        %2688 = vmatpush1.msra.mxu0 0.0
        %2689 = vmatprep.subr.mxu0 0.0
        %2690 = vmatpush1.msra.mxu0 0.0
        %2691 = vmatprep.subr.mxu0 0.0
        %2692 = vmatpush1.msra.mxu0 0.0
        %2693 = vmatprep.subr.mxu0 0.0
        %2694 = vmatpush1.msra.mxu0 0.0
        %2695 = vmatprep.subr.mxu0 0.0
        %2696 = vmatpush1.msra.mxu0 0.0
        %2697 = vmatprep.subr.mxu0 0.0
        %2698 = vmatpush1.msra.mxu0 0.0
        %2699 = vmatprep.subr.mxu0 0.0
        %2700 = vmatpush1.msra.mxu0 0.0
        %2701 = vmatprep.subr.mxu0 0.0
        %2702 = vmatpush1.msra.mxu0 0.0
        %2703 = vmatprep.subr.mxu0 0.0
        %2704 = vmatpush1.msra.mxu0 0.0
        %2705 = vmatprep.subr.mxu0 0.0
        %2706 = vmatpush1.msra.mxu0 0.0
        %2707 = vmatprep.subr.mxu0 0.0
        %2708 = vmatpush1.msra.mxu0 0.0
        %2709 = vmatprep.subr.mxu0 0.0
        %2710 = vmatpush1.msra.mxu0 0.0
        %2711 = vmatprep.subr.mxu0 0.0
        %2712 = vmatpush1.msra.mxu0 0.0
        %2713 = vmatprep.subr.mxu0 0.0
        %2714 = vmatpush1.msra.mxu0 0.0
        %2715 = vmatprep.subr.mxu0 0.0
        %2716 = vmatpush1.msra.mxu0 0.0
        %2717 = vmatprep.subr.mxu0 0.0
        %2718 = vmatpush1.msra.mxu0 0.0
        %2719 = vmatprep.mubr.f32.mxu0 0.0
        %2720 = vmatmul.mubr.f32.gmra.mrb[0].mxu0 %v2653
        %v2721 = vpop.f32.mrb[0].mxu0
        %v2722 = vadd.f32 0.0, %v2721
        %v2723 = vpop.f32.mrb[0].mxu0
        %2724 = vdwg.mxu0
        %s2725 = scalar_lea.vmem %s752, 16
        %v2726 = vld [vmem:[%s2725] sm:$0xff]
        %v2728 = vsel %vm1067, %v2562, 0
        %v2731 = vsel %vm1067, %v2722, 0
        %2733 = vmatprep.subr.mxu0 0.0
        %2734 = vmatpush1.msra.mxu0 %v2726
        %2735 = vmatprep.subr.mxu0 0.0
        %2736 = vmatpush1.msra.mxu0 0.0
        %2737 = vmatprep.subr.mxu0 0.0
        %2738 = vmatpush1.msra.mxu0 0.0
        %2739 = vmatprep.subr.mxu0 0.0
        %2740 = vmatpush1.msra.mxu0 0.0
        %2741 = vmatprep.subr.mxu0 0.0
        %2742 = vmatpush1.msra.mxu0 0.0
        %2743 = vmatprep.subr.mxu0 0.0
        %2744 = vmatpush1.msra.mxu0 0.0
        %2745 = vmatprep.subr.mxu0 0.0
        %2746 = vmatpush1.msra.mxu0 0.0
        %2747 = vmatprep.subr.mxu0 0.0
        %2748 = vmatpush1.msra.mxu0 0.0
        %2749 = vmatprep.subr.mxu0 0.0
        %2750 = vmatpush1.msra.mxu0 0.0
        %2751 = vmatprep.subr.mxu0 0.0
        %2752 = vmatpush1.msra.mxu0 0.0
        %2753 = vmatprep.subr.mxu0 0.0
        %2754 = vmatpush1.msra.mxu0 0.0
        %2755 = vmatprep.subr.mxu0 0.0
        %2756 = vmatpush1.msra.mxu0 0.0
        %2757 = vmatprep.subr.mxu0 0.0
        %2758 = vmatpush1.msra.mxu0 0.0
        %2759 = vmatprep.subr.mxu0 0.0
        %2760 = vmatpush1.msra.mxu0 0.0
        %2761 = vmatprep.subr.mxu0 0.0
        %2762 = vmatpush1.msra.mxu0 0.0
        %2763 = vmatprep.subr.mxu0 0.0
        %2764 = vmatpush1.msra.mxu0 0.0
        %2765 = vmatprep.subr.mxu0 0.0
        %2766 = vmatpush1.msra.mxu0 0.0
        %2767 = vmatprep.subr.mxu0 0.0
        %2768 = vmatpush1.msra.mxu0 0.0
        %2769 = vmatprep.subr.mxu0 0.0
        %2770 = vmatpush1.msra.mxu0 0.0
        %2771 = vmatprep.subr.mxu0 0.0
        %2772 = vmatpush1.msra.mxu0 0.0
        %2773 = vmatprep.subr.mxu0 0.0
        %2774 = vmatpush1.msra.mxu0 0.0
        %2775 = vmatprep.subr.mxu0 0.0
        %2776 = vmatpush1.msra.mxu0 0.0
        %2777 = vmatprep.subr.mxu0 0.0
        %2778 = vmatpush1.msra.mxu0 0.0
        %2779 = vmatprep.subr.mxu0 0.0
        %2780 = vmatpush1.msra.mxu0 0.0
        %2781 = vmatprep.subr.mxu0 0.0
        %2782 = vmatpush1.msra.mxu0 0.0
        %2783 = vmatprep.subr.mxu0 0.0
        %2784 = vmatpush1.msra.mxu0 0.0
        %2785 = vmatprep.subr.mxu0 0.0
        %2786 = vmatpush1.msra.mxu0 0.0
        %2787 = vmatprep.subr.mxu0 0.0
        %2788 = vmatpush1.msra.mxu0 0.0
        %2789 = vmatprep.subr.mxu0 0.0
        %2790 = vmatpush1.msra.mxu0 0.0
        %2791 = vmatprep.subr.mxu0 0.0
        %2792 = vmatpush1.msra.mxu0 0.0
        %2793 = vmatprep.subr.mxu0 0.0
        %2794 = vmatpush1.msra.mxu0 0.0
        %2795 = vmatprep.subr.mxu0 0.0
        %2796 = vmatpush1.msra.mxu0 0.0
        %2797 = vmatprep.mubr.f32.mxu0 0.0
        %2798 = vmatmul.mubr.f32.gmra.mrb[0].mxu0 %v2728
        %v2799 = vpop.f32.mrb[0].mxu0
        %v2800 = vadd.f32 0.0, %v2799
        %v2801 = vpop.f32.mrb[0].mxu0
        %2802 = vmatprep.mubr.f32.mxu0 0.0
        %2803 = vmatmul.mubr.f32.gmra.mrb[0].mxu0 %v2731
        %v2804 = vpop.f32.mrb[0].mxu0
        %v2805 = vadd.f32 0.0, %v2804
        %v2806 = vpop.f32.mrb[0].mxu0
        %2807 = vdwg.mxu0
        %v2808 = vadd.f32 %v2139, %v2800
        %v2809 = vadd.f32 %v2140, %v2805
        %s2810 = scalar_lea.vmem %s725, 96
        %v2811 = vld [vmem:[%s2810] sm:$0xff]
        %v2812 = vld [vmem:[%s2810 + $0x8] sm:$0xff]
        %v2813 = vld [vmem:[%s2810 + $0x10] sm:$0xff]
        %v2814 = vld [vmem:[%s2810 + $0x18] sm:$0xff]
        %s2815 = scalar_lea.vmem %s739, 3
        %v2816 = vld [vmem:[%s2815] sm:$0x1]
        %v2818 = vlaneseq
        %v2819 = vshrl.u32 %v2818, 7
        %v2820 = vsub.s32 0, %v2819
        %v2821 = vrot.slane %v2816, %v2820
        %2823 = vmatprep.subr.mxu0 0.0
        %2824 = vmatpush1.msra.mxu0 %v2811
        %2825 = vmatprep.subr.mxu0 0.0
        %2826 = vmatpush1.msra.mxu0 %v2812
        %2827 = vmatprep.subr.mxu0 0.0
        %2828 = vmatpush1.msra.mxu0 %v2813
        %2829 = vmatprep.subr.mxu0 0.0
        %2830 = vmatpush1.msra.mxu0 %v2814
        %2831 = vmatprep.subr.mxu0 0.0
        %2832 = vmatpush1.msra.mxu0 0.0
        %2833 = vmatprep.subr.mxu0 0.0
        %2834 = vmatpush1.msra.mxu0 0.0
        %2835 = vmatprep.subr.mxu0 0.0
        %2836 = vmatpush1.msra.mxu0 0.0
        %2837 = vmatprep.subr.mxu0 0.0
        %2838 = vmatpush1.msra.mxu0 0.0
        %2839 = vmatprep.subr.mxu0 0.0
        %2840 = vmatpush1.msra.mxu0 0.0
        %2841 = vmatprep.subr.mxu0 0.0
        %2842 = vmatpush1.msra.mxu0 0.0
        %2843 = vmatprep.subr.mxu0 0.0
        %2844 = vmatpush1.msra.mxu0 0.0
        %2845 = vmatprep.subr.mxu0 0.0
        %2846 = vmatpush1.msra.mxu0 0.0
        %2847 = vmatprep.subr.mxu0 0.0
        %2848 = vmatpush1.msra.mxu0 0.0
        %2849 = vmatprep.subr.mxu0 0.0
        %2850 = vmatpush1.msra.mxu0 0.0
        %2851 = vmatprep.subr.mxu0 0.0
        %2852 = vmatpush1.msra.mxu0 0.0
        %2853 = vmatprep.subr.mxu0 0.0
        %2854 = vmatpush1.msra.mxu0 0.0
        %2855 = vmatprep.subr.mxu0 0.0
        %2856 = vmatpush1.msra.mxu0 0.0
        %2857 = vmatprep.subr.mxu0 0.0
        %2858 = vmatpush1.msra.mxu0 0.0
        %2859 = vmatprep.subr.mxu0 0.0
        %2860 = vmatpush1.msra.mxu0 0.0
        %2861 = vmatprep.subr.mxu0 0.0
        %2862 = vmatpush1.msra.mxu0 0.0
        %2863 = vmatprep.subr.mxu0 0.0
        %2864 = vmatpush1.msra.mxu0 0.0
        %2865 = vmatprep.subr.mxu0 0.0
        %2866 = vmatpush1.msra.mxu0 0.0
        %2867 = vmatprep.subr.mxu0 0.0
        %2868 = vmatpush1.msra.mxu0 0.0
        %2869 = vmatprep.subr.mxu0 0.0
        %2870 = vmatpush1.msra.mxu0 0.0
        %2871 = vmatprep.subr.mxu0 0.0
        %2872 = vmatpush1.msra.mxu0 0.0
        %2873 = vmatprep.subr.mxu0 0.0
        %2874 = vmatpush1.msra.mxu0 0.0
        %2875 = vmatprep.subr.mxu0 0.0
        %2876 = vmatpush1.msra.mxu0 0.0
        %2877 = vmatprep.subr.mxu0 0.0
        %2878 = vmatpush1.msra.mxu0 0.0
        %2879 = vmatprep.subr.mxu0 0.0
        %2880 = vmatpush1.msra.mxu0 0.0
        %2881 = vmatprep.subr.mxu0 0.0
        %2882 = vmatpush1.msra.mxu0 0.0
        %2883 = vmatprep.subr.mxu0 0.0
        %2884 = vmatpush1.msra.mxu0 0.0
        %2885 = vmatprep.subr.mxu0 0.0
        %2886 = vmatpush1.msra.mxu0 0.0
        %2887 = vmatprep.mubr.f32.mxu0 0.0
        %2888 = vmatmul.mubr.f32.gmra.mrb[0].mxu0 %v815
        %v2889 = vpop.f32.mrb[0].mxu0
        %v2890 = vadd.f32 %v2821, %v2889
        %v2891 = vpop.f32.mrb[0].mxu0
        %2892 = vmatprep.mubr.f32.mxu0 0.0
        %2893 = vmatmul.mubr.f32.gmra.mrb[0].mxu0 %v818
        %v2894 = vpop.f32.mrb[0].mxu0
        %v2895 = vadd.f32 %v2821, %v2894
        %v2896 = vpop.f32.mrb[0].mxu0
        %2897 = vdwg.mxu0
        %s2898 = scalar_lea.vmem %s730, 96
        %v2899 = vld [vmem:[%s2898] sm:$0xff]
        %v2900 = vld [vmem:[%s2898 + $0x8] sm:$0xff]
        %v2901 = vld [vmem:[%s2898 + $0x10] sm:$0xff]
        %v2902 = vld [vmem:[%s2898 + $0x18] sm:$0xff]
        %s2903 = scalar_lea.vmem %s743, 3
        %v2904 = vld [vmem:[%s2903] sm:$0x1]
        %v2906 = vlaneseq
        %v2907 = vshrl.u32 %v2906, 7
        %v2908 = vsub.s32 0, %v2907
        %v2909 = vrot.slane %v2904, %v2908
        %2911 = vmatprep.subr.mxu0 0.0
        %2912 = vmatpush1.msra.mxu0 %v2899
        %2913 = vmatprep.subr.mxu0 0.0
        %2914 = vmatpush1.msra.mxu0 %v2900
        %2915 = vmatprep.subr.mxu0 0.0
        %2916 = vmatpush1.msra.mxu0 %v2901
        %2917 = vmatprep.subr.mxu0 0.0
        %2918 = vmatpush1.msra.mxu0 %v2902
        %2919 = vmatprep.subr.mxu0 0.0
        %2920 = vmatpush1.msra.mxu0 0.0
        %2921 = vmatprep.subr.mxu0 0.0
        %2922 = vmatpush1.msra.mxu0 0.0
        %2923 = vmatprep.subr.mxu0 0.0
        %2924 = vmatpush1.msra.mxu0 0.0
        %2925 = vmatprep.subr.mxu0 0.0
        %2926 = vmatpush1.msra.mxu0 0.0
        %2927 = vmatprep.subr.mxu0 0.0
        %2928 = vmatpush1.msra.mxu0 0.0
        %2929 = vmatprep.subr.mxu0 0.0
        %2930 = vmatpush1.msra.mxu0 0.0
        %2931 = vmatprep.subr.mxu0 0.0
        %2932 = vmatpush1.msra.mxu0 0.0
        %2933 = vmatprep.subr.mxu0 0.0
        %2934 = vmatpush1.msra.mxu0 0.0
        %2935 = vmatprep.subr.mxu0 0.0
        %2936 = vmatpush1.msra.mxu0 0.0
        %2937 = vmatprep.subr.mxu0 0.0
        %2938 = vmatpush1.msra.mxu0 0.0
        %2939 = vmatprep.subr.mxu0 0.0
        %2940 = vmatpush1.msra.mxu0 0.0
        %2941 = vmatprep.subr.mxu0 0.0
        %2942 = vmatpush1.msra.mxu0 0.0
        %2943 = vmatprep.subr.mxu0 0.0
        %2944 = vmatpush1.msra.mxu0 0.0
        %2945 = vmatprep.subr.mxu0 0.0
        %2946 = vmatpush1.msra.mxu0 0.0
        %2947 = vmatprep.subr.mxu0 0.0
        %2948 = vmatpush1.msra.mxu0 0.0
        %2949 = vmatprep.subr.mxu0 0.0
        %2950 = vmatpush1.msra.mxu0 0.0
        %2951 = vmatprep.subr.mxu0 0.0
        %2952 = vmatpush1.msra.mxu0 0.0
        %2953 = vmatprep.subr.mxu0 0.0
        %2954 = vmatpush1.msra.mxu0 0.0
        %2955 = vmatprep.subr.mxu0 0.0
        %2956 = vmatpush1.msra.mxu0 0.0
        %2957 = vmatprep.subr.mxu0 0.0
        %2958 = vmatpush1.msra.mxu0 0.0
        %2959 = vmatprep.subr.mxu0 0.0
        %2960 = vmatpush1.msra.mxu0 0.0
        %2961 = vmatprep.subr.mxu0 0.0
        %2962 = vmatpush1.msra.mxu0 0.0
        %2963 = vmatprep.subr.mxu0 0.0
        %2964 = vmatpush1.msra.mxu0 0.0
        %2965 = vmatprep.subr.mxu0 0.0
        %2966 = vmatpush1.msra.mxu0 0.0
        %2967 = vmatprep.subr.mxu0 0.0
        %2968 = vmatpush1.msra.mxu0 0.0
        %2969 = vmatprep.subr.mxu0 0.0
        %2970 = vmatpush1.msra.mxu0 0.0
        %2971 = vmatprep.subr.mxu0 0.0
        %2972 = vmatpush1.msra.mxu0 0.0
        %2973 = vmatprep.subr.mxu0 0.0
        %2974 = vmatpush1.msra.mxu0 0.0
        %2975 = vmatprep.mubr.f32.mxu0 0.0
        %2976 = vmatmul.mubr.f32.gmra.mrb[0].mxu0 %v815
        %v2977 = vpop.f32.mrb[0].mxu0
        %v2978 = vadd.f32 %v2909, %v2977
        %v2979 = vpop.f32.mrb[0].mxu0
        %2980 = vmatprep.mubr.f32.mxu0 0.0
        %2981 = vmatmul.mubr.f32.gmra.mrb[0].mxu0 %v818
        %v2982 = vpop.f32.mrb[0].mxu0
        %v2983 = vadd.f32 %v2909, %v2982
        %v2984 = vpop.f32.mrb[0].mxu0
        %2985 = vdwg.mxu0
        %s2986 = scalar_lea.vmem %s735, 96
        %v2987 = vld [vmem:[%s2986] sm:$0xff]
        %v2988 = vld [vmem:[%s2986 + $0x8] sm:$0xff]
        %v2989 = vld [vmem:[%s2986 + $0x10] sm:$0xff]
        %v2990 = vld [vmem:[%s2986 + $0x18] sm:$0xff]
        %s2991 = scalar_lea.vmem %s747, 3
        %v2992 = vld [vmem:[%s2991] sm:$0x1]
        %v2994 = vlaneseq
        %v2995 = vshrl.u32 %v2994, 7
        %v2996 = vsub.s32 0, %v2995
        %v2997 = vrot.slane %v2992, %v2996
        %2999 = vmatprep.subr.mxu0 0.0
        %3000 = vmatpush1.msra.mxu0 %v2987
        %3001 = vmatprep.subr.mxu0 0.0
        %3002 = vmatpush1.msra.mxu0 %v2988
        %3003 = vmatprep.subr.mxu0 0.0
        %3004 = vmatpush1.msra.mxu0 %v2989
        %3005 = vmatprep.subr.mxu0 0.0
        %3006 = vmatpush1.msra.mxu0 %v2990
        %3007 = vmatprep.subr.mxu0 0.0
        %3008 = vmatpush1.msra.mxu0 0.0
        %3009 = vmatprep.subr.mxu0 0.0
        %3010 = vmatpush1.msra.mxu0 0.0
        %3011 = vmatprep.subr.mxu0 0.0
        %3012 = vmatpush1.msra.mxu0 0.0
        %3013 = vmatprep.subr.mxu0 0.0
        %3014 = vmatpush1.msra.mxu0 0.0
        %3015 = vmatprep.subr.mxu0 0.0
        %3016 = vmatpush1.msra.mxu0 0.0
        %3017 = vmatprep.subr.mxu0 0.0
        %3018 = vmatpush1.msra.mxu0 0.0
        %3019 = vmatprep.subr.mxu0 0.0
        %3020 = vmatpush1.msra.mxu0 0.0
        %3021 = vmatprep.subr.mxu0 0.0
        %3022 = vmatpush1.msra.mxu0 0.0
        %3023 = vmatprep.subr.mxu0 0.0
        %3024 = vmatpush1.msra.mxu0 0.0
        %3025 = vmatprep.subr.mxu0 0.0
        %3026 = vmatpush1.msra.mxu0 0.0
        %3027 = vmatprep.subr.mxu0 0.0
        %3028 = vmatpush1.msra.mxu0 0.0
        %3029 = vmatprep.subr.mxu0 0.0
        %3030 = vmatpush1.msra.mxu0 0.0
        %3031 = vmatprep.subr.mxu0 0.0
        %3032 = vmatpush1.msra.mxu0 0.0
        %3033 = vmatprep.subr.mxu0 0.0
        %3034 = vmatpush1.msra.mxu0 0.0
        %3035 = vmatprep.subr.mxu0 0.0
        %3036 = vmatpush1.msra.mxu0 0.0
        %3037 = vmatprep.subr.mxu0 0.0
        %3038 = vmatpush1.msra.mxu0 0.0
        %3039 = vmatprep.subr.mxu0 0.0
        %3040 = vmatpush1.msra.mxu0 0.0
        %3041 = vmatprep.subr.mxu0 0.0
        %3042 = vmatpush1.msra.mxu0 0.0
        %3043 = vmatprep.subr.mxu0 0.0
        %3044 = vmatpush1.msra.mxu0 0.0
        %3045 = vmatprep.subr.mxu0 0.0
        %3046 = vmatpush1.msra.mxu0 0.0
        %3047 = vmatprep.subr.mxu0 0.0
        %3048 = vmatpush1.msra.mxu0 0.0
        %3049 = vmatprep.subr.mxu0 0.0
        %3050 = vmatpush1.msra.mxu0 0.0
        %3051 = vmatprep.subr.mxu0 0.0
        %3052 = vmatpush1.msra.mxu0 0.0
        %3053 = vmatprep.subr.mxu0 0.0
        %3054 = vmatpush1.msra.mxu0 0.0
        %3055 = vmatprep.subr.mxu0 0.0
        %3056 = vmatpush1.msra.mxu0 0.0
        %3057 = vmatprep.subr.mxu0 0.0
        %3058 = vmatpush1.msra.mxu0 0.0
        %3059 = vmatprep.subr.mxu0 0.0
        %3060 = vmatpush1.msra.mxu0 0.0
        %3061 = vmatprep.subr.mxu0 0.0
        %3062 = vmatpush1.msra.mxu0 0.0
        %3063 = vmatprep.mubr.f32.mxu0 0.0
        %3064 = vmatmul.mubr.f32.gmra.mrb[0].mxu0 %v815
        %v3065 = vpop.f32.mrb[0].mxu0
        %v3066 = vadd.f32 %v2997, %v3065
        %v3067 = vpop.f32.mrb[0].mxu0
        %3068 = vmatprep.mubr.f32.mxu0 0.0
        %3069 = vmatmul.mubr.f32.gmra.mrb[0].mxu0 %v818
        %v3070 = vpop.f32.mrb[0].mxu0
        %v3071 = vadd.f32 %v2997, %v3070
        %v3072 = vpop.f32.mrb[0].mxu0
        %3073 = vdwg.mxu0
        %v3075 = vsel %vm1067, %v2890, 0
        %v3078 = vsel %vm1067, %v2978, 0
        %3080 = vmatprep.subr.mxu0 0.0
        %3081 = vmatpush1.xpose.msra.mxu0 %v3078
        %3082 = vmatprep.subr.mxu0 0.0
        %3083 = vmatpush1.xpose.msra.mxu0 0.0
        %3084 = vmatprep.subr.mxu0 0.0
        %3085 = vmatpush1.xpose.msra.mxu0 0.0
        %3086 = vmatprep.subr.mxu0 0.0
        %3087 = vmatpush1.xpose.msra.mxu0 0.0
        %3088 = vmatprep.subr.mxu0 0.0
        %3089 = vmatpush1.xpose.msra.mxu0 0.0
        %3090 = vmatprep.subr.mxu0 0.0
        %3091 = vmatpush1.xpose.msra.mxu0 0.0
        %3092 = vmatprep.subr.mxu0 0.0
        %3093 = vmatpush1.xpose.msra.mxu0 0.0
        %3094 = vmatprep.subr.mxu0 0.0
        %3095 = vmatpush1.xpose.msra.mxu0 0.0
        %3096 = vmatprep.subr.mxu0 0.0
        %3097 = vmatpush1.xpose.msra.mxu0 0.0
        %3098 = vmatprep.subr.mxu0 0.0
        %3099 = vmatpush1.xpose.msra.mxu0 0.0
        %3100 = vmatprep.subr.mxu0 0.0
        %3101 = vmatpush1.xpose.msra.mxu0 0.0
        %3102 = vmatprep.subr.mxu0 0.0
        %3103 = vmatpush1.xpose.msra.mxu0 0.0
        %3104 = vmatprep.subr.mxu0 0.0
        %3105 = vmatpush1.xpose.msra.mxu0 0.0
        %3106 = vmatprep.subr.mxu0 0.0
        %3107 = vmatpush1.xpose.msra.mxu0 0.0
        %3108 = vmatprep.subr.mxu0 0.0
        %3109 = vmatpush1.xpose.msra.mxu0 0.0
        %3110 = vmatprep.subr.mxu0 0.0
        %3111 = vmatpush1.xpose.msra.mxu0 0.0
        %3112 = vmatprep.subr.mxu0 0.0
        %3113 = vmatpush1.xpose.msra.mxu0 0.0
        %3114 = vmatprep.subr.mxu0 0.0
        %3115 = vmatpush1.xpose.msra.mxu0 0.0
        %3116 = vmatprep.subr.mxu0 0.0
        %3117 = vmatpush1.xpose.msra.mxu0 0.0
        %3118 = vmatprep.subr.mxu0 0.0
        %3119 = vmatpush1.xpose.msra.mxu0 0.0
        %3120 = vmatprep.subr.mxu0 0.0
        %3121 = vmatpush1.xpose.msra.mxu0 0.0
        %3122 = vmatprep.subr.mxu0 0.0
        %3123 = vmatpush1.xpose.msra.mxu0 0.0
        %3124 = vmatprep.subr.mxu0 0.0
        %3125 = vmatpush1.xpose.msra.mxu0 0.0
        %3126 = vmatprep.subr.mxu0 0.0
        %3127 = vmatpush1.xpose.msra.mxu0 0.0
        %3128 = vmatprep.subr.mxu0 0.0
        %3129 = vmatpush1.xpose.msra.mxu0 0.0
        %3130 = vmatprep.subr.mxu0 0.0
        %3131 = vmatpush1.xpose.msra.mxu0 0.0
        %3132 = vmatprep.subr.mxu0 0.0
        %3133 = vmatpush1.xpose.msra.mxu0 0.0
        %3134 = vmatprep.subr.mxu0 0.0
        %3135 = vmatpush1.xpose.msra.mxu0 0.0
        %3136 = vmatprep.subr.mxu0 0.0
        %3137 = vmatpush1.xpose.msra.mxu0 0.0
        %3138 = vmatprep.subr.mxu0 0.0
        %3139 = vmatpush1.xpose.msra.mxu0 0.0
        %3140 = vmatprep.subr.mxu0 0.0
        %3141 = vmatpush1.xpose.msra.mxu0 0.0
        %3142 = vmatprep.subr.mxu0 0.0
        %3143 = vmatpush1.xpose.msra.mxu0 0.0
        %3144 = vmatprep.mubr.f32.mxu0 0.0
        %3145 = vmatmul.mubr.f32.gmra.mrb[0].mxu0 %v3075
        %v3146 = vpop.f32.mrb[0].mxu0
        %v3147 = vadd.f32 0.0, %v3146
        %v3148 = vpop.f32.mrb[0].mxu0
        %3149 = vdwg.mxu0
        %v3150 = vsel %vm1067, %v3147, -inf
        %3151 = vmax.xlane.f32.xlu0 %v3150
        %v3152 = vpop.xlane.xlu0 %3151
        %v3153 = vsub.f32 %v3147, %v3152
        %v3154 = vmul.f32 %v3153, 1.442695
        %v3155 = vpow.pop %v3154
        %v3156 = vsel %vm1067, %v3155, 0.0
        %3157 = vadd.xlane.f32.xlu0 %v3156
        %v3158 = vpop.xlane.xlu0 %3157
        %v3159 = vrcp.pop %v3158
        %v3160 = vmul.f32 %v3155, %v3159
        %v3162 = vsel %vm1067, %v3160, 0
        %3164 = vmatprep.subr.mxu0 0.0
        %3165 = vmatpush1.msra.mxu0 %v3066
        %3166 = vmatprep.subr.mxu0 0.0
        %3167 = vmatpush1.msra.mxu0 0.0
        %3168 = vmatprep.subr.mxu0 0.0
        %3169 = vmatpush1.msra.mxu0 0.0
        %3170 = vmatprep.subr.mxu0 0.0
        %3171 = vmatpush1.msra.mxu0 0.0
        %3172 = vmatprep.subr.mxu0 0.0
        %3173 = vmatpush1.msra.mxu0 0.0
        %3174 = vmatprep.subr.mxu0 0.0
        %3175 = vmatpush1.msra.mxu0 0.0
        %3176 = vmatprep.subr.mxu0 0.0
        %3177 = vmatpush1.msra.mxu0 0.0
        %3178 = vmatprep.subr.mxu0 0.0
        %3179 = vmatpush1.msra.mxu0 0.0
        %3180 = vmatprep.subr.mxu0 0.0
        %3181 = vmatpush1.msra.mxu0 0.0
        %3182 = vmatprep.subr.mxu0 0.0
        %3183 = vmatpush1.msra.mxu0 0.0
        %3184 = vmatprep.subr.mxu0 0.0
        %3185 = vmatpush1.msra.mxu0 0.0
        %3186 = vmatprep.subr.mxu0 0.0
        %3187 = vmatpush1.msra.mxu0 0.0
        %3188 = vmatprep.subr.mxu0 0.0
        %3189 = vmatpush1.msra.mxu0 0.0
        %3190 = vmatprep.subr.mxu0 0.0
        %3191 = vmatpush1.msra.mxu0 0.0
        %3192 = vmatprep.subr.mxu0 0.0
        %3193 = vmatpush1.msra.mxu0 0.0
        %3194 = vmatprep.subr.mxu0 0.0
        %3195 = vmatpush1.msra.mxu0 0.0
        %3196 = vmatprep.subr.mxu0 0.0
        %3197 = vmatpush1.msra.mxu0 0.0
        %3198 = vmatprep.subr.mxu0 0.0
        %3199 = vmatpush1.msra.mxu0 0.0
        %3200 = vmatprep.subr.mxu0 0.0
        %3201 = vmatpush1.msra.mxu0 0.0
        %3202 = vmatprep.subr.mxu0 0.0
        %3203 = vmatpush1.msra.mxu0 0.0
        %3204 = vmatprep.subr.mxu0 0.0
        %3205 = vmatpush1.msra.mxu0 0.0
        %3206 = vmatprep.subr.mxu0 0.0
        %3207 = vmatpush1.msra.mxu0 0.0
        %3208 = vmatprep.subr.mxu0 0.0
        %3209 = vmatpush1.msra.mxu0 0.0
        %3210 = vmatprep.subr.mxu0 0.0
        %3211 = vmatpush1.msra.mxu0 0.0
        %3212 = vmatprep.subr.mxu0 0.0
        %3213 = vmatpush1.msra.mxu0 0.0
        %3214 = vmatprep.subr.mxu0 0.0
        %3215 = vmatpush1.msra.mxu0 0.0
        %3216 = vmatprep.subr.mxu0 0.0
        %3217 = vmatpush1.msra.mxu0 0.0
        %3218 = vmatprep.subr.mxu0 0.0
        %3219 = vmatpush1.msra.mxu0 0.0
        %3220 = vmatprep.subr.mxu0 0.0
        %3221 = vmatpush1.msra.mxu0 0.0
        %3222 = vmatprep.subr.mxu0 0.0
        %3223 = vmatpush1.msra.mxu0 0.0
        %3224 = vmatprep.subr.mxu0 0.0
        %3225 = vmatpush1.msra.mxu0 0.0
        %3226 = vmatprep.subr.mxu0 0.0
        %3227 = vmatpush1.msra.mxu0 0.0
        %3228 = vmatprep.mubr.f32.mxu0 0.0
        %3229 = vmatmul.mubr.f32.gmra.mrb[0].mxu0 %v3162
        %v3230 = vpop.f32.mrb[0].mxu0
        %v3231 = vadd.f32 0.0, %v3230
        %v3232 = vpop.f32.mrb[0].mxu0
        %3233 = vdwg.mxu0
        %v3235 = vsel %vm1067, %v2895, 0
        %v3238 = vsel %vm1067, %v2983, 0
        %3240 = vmatprep.subr.mxu0 0.0
        %3241 = vmatpush1.xpose.msra.mxu0 %v3238
        %3242 = vmatprep.subr.mxu0 0.0
        %3243 = vmatpush1.xpose.msra.mxu0 0.0
        %3244 = vmatprep.subr.mxu0 0.0
        %3245 = vmatpush1.xpose.msra.mxu0 0.0
        %3246 = vmatprep.subr.mxu0 0.0
        %3247 = vmatpush1.xpose.msra.mxu0 0.0
        %3248 = vmatprep.subr.mxu0 0.0
        %3249 = vmatpush1.xpose.msra.mxu0 0.0
        %3250 = vmatprep.subr.mxu0 0.0
        %3251 = vmatpush1.xpose.msra.mxu0 0.0
        %3252 = vmatprep.subr.mxu0 0.0
        %3253 = vmatpush1.xpose.msra.mxu0 0.0
        %3254 = vmatprep.subr.mxu0 0.0
        %3255 = vmatpush1.xpose.msra.mxu0 0.0
        %3256 = vmatprep.subr.mxu0 0.0
        %3257 = vmatpush1.xpose.msra.mxu0 0.0
        %3258 = vmatprep.subr.mxu0 0.0
        %3259 = vmatpush1.xpose.msra.mxu0 0.0
        %3260 = vmatprep.subr.mxu0 0.0
        %3261 = vmatpush1.xpose.msra.mxu0 0.0
        %3262 = vmatprep.subr.mxu0 0.0
        %3263 = vmatpush1.xpose.msra.mxu0 0.0
        %3264 = vmatprep.subr.mxu0 0.0
        %3265 = vmatpush1.xpose.msra.mxu0 0.0
        %3266 = vmatprep.subr.mxu0 0.0
        %3267 = vmatpush1.xpose.msra.mxu0 0.0
        %3268 = vmatprep.subr.mxu0 0.0
        %3269 = vmatpush1.xpose.msra.mxu0 0.0
        %3270 = vmatprep.subr.mxu0 0.0
        %3271 = vmatpush1.xpose.msra.mxu0 0.0
        %3272 = vmatprep.subr.mxu0 0.0
        %3273 = vmatpush1.xpose.msra.mxu0 0.0
        %3274 = vmatprep.subr.mxu0 0.0
        %3275 = vmatpush1.xpose.msra.mxu0 0.0
        %3276 = vmatprep.subr.mxu0 0.0
        %3277 = vmatpush1.xpose.msra.mxu0 0.0
        %3278 = vmatprep.subr.mxu0 0.0
        %3279 = vmatpush1.xpose.msra.mxu0 0.0
        %3280 = vmatprep.subr.mxu0 0.0
        %3281 = vmatpush1.xpose.msra.mxu0 0.0
        %3282 = vmatprep.subr.mxu0 0.0
        %3283 = vmatpush1.xpose.msra.mxu0 0.0
        %3284 = vmatprep.subr.mxu0 0.0
        %3285 = vmatpush1.xpose.msra.mxu0 0.0
        %3286 = vmatprep.subr.mxu0 0.0
        %3287 = vmatpush1.xpose.msra.mxu0 0.0
        %3288 = vmatprep.subr.mxu0 0.0
        %3289 = vmatpush1.xpose.msra.mxu0 0.0
        %3290 = vmatprep.subr.mxu0 0.0
        %3291 = vmatpush1.xpose.msra.mxu0 0.0
        %3292 = vmatprep.subr.mxu0 0.0
        %3293 = vmatpush1.xpose.msra.mxu0 0.0
        %3294 = vmatprep.subr.mxu0 0.0
        %3295 = vmatpush1.xpose.msra.mxu0 0.0
        %3296 = vmatprep.subr.mxu0 0.0
        %3297 = vmatpush1.xpose.msra.mxu0 0.0
        %3298 = vmatprep.subr.mxu0 0.0
        %3299 = vmatpush1.xpose.msra.mxu0 0.0
        %3300 = vmatprep.subr.mxu0 0.0
        %3301 = vmatpush1.xpose.msra.mxu0 0.0
        %3302 = vmatprep.subr.mxu0 0.0
        %3303 = vmatpush1.xpose.msra.mxu0 0.0
        %3304 = vmatprep.mubr.f32.mxu0 0.0
        %3305 = vmatmul.mubr.f32.gmra.mrb[0].mxu0 %v3235
        %v3306 = vpop.f32.mrb[0].mxu0
        %v3307 = vadd.f32 0.0, %v3306
        %v3308 = vpop.f32.mrb[0].mxu0
        %3309 = vdwg.mxu0
        %v3310 = vsel %vm1067, %v3307, -inf
        %3311 = vmax.xlane.f32.xlu0 %v3310
        %v3312 = vpop.xlane.xlu0 %3311
        %v3313 = vsub.f32 %v3307, %v3312
        %v3314 = vmul.f32 %v3313, 1.442695
        %v3315 = vpow.pop %v3314
        %v3316 = vsel %vm1067, %v3315, 0.0
        %3317 = vadd.xlane.f32.xlu0 %v3316
        %v3318 = vpop.xlane.xlu0 %3317
        %v3319 = vrcp.pop %v3318
        %v3320 = vmul.f32 %v3315, %v3319
        %v3322 = vsel %vm1067, %v3320, 0
        %3324 = vmatprep.subr.mxu0 0.0
        %3325 = vmatpush1.msra.mxu0 %v3071
        %3326 = vmatprep.subr.mxu0 0.0
        %3327 = vmatpush1.msra.mxu0 0.0
        %3328 = vmatprep.subr.mxu0 0.0
        %3329 = vmatpush1.msra.mxu0 0.0
        %3330 = vmatprep.subr.mxu0 0.0
        %3331 = vmatpush1.msra.mxu0 0.0
        %3332 = vmatprep.subr.mxu0 0.0
        %3333 = vmatpush1.msra.mxu0 0.0
        %3334 = vmatprep.subr.mxu0 0.0
        %3335 = vmatpush1.msra.mxu0 0.0
        %3336 = vmatprep.subr.mxu0 0.0
        %3337 = vmatpush1.msra.mxu0 0.0
        %3338 = vmatprep.subr.mxu0 0.0
        %3339 = vmatpush1.msra.mxu0 0.0
        %3340 = vmatprep.subr.mxu0 0.0
        %3341 = vmatpush1.msra.mxu0 0.0
        %3342 = vmatprep.subr.mxu0 0.0
        %3343 = vmatpush1.msra.mxu0 0.0
        %3344 = vmatprep.subr.mxu0 0.0
        %3345 = vmatpush1.msra.mxu0 0.0
        %3346 = vmatprep.subr.mxu0 0.0
        %3347 = vmatpush1.msra.mxu0 0.0
        %3348 = vmatprep.subr.mxu0 0.0
        %3349 = vmatpush1.msra.mxu0 0.0
        %3350 = vmatprep.subr.mxu0 0.0
        %3351 = vmatpush1.msra.mxu0 0.0
        %3352 = vmatprep.subr.mxu0 0.0
        %3353 = vmatpush1.msra.mxu0 0.0
        %3354 = vmatprep.subr.mxu0 0.0
        %3355 = vmatpush1.msra.mxu0 0.0
        %3356 = vmatprep.subr.mxu0 0.0
        %3357 = vmatpush1.msra.mxu0 0.0
        %3358 = vmatprep.subr.mxu0 0.0
        %3359 = vmatpush1.msra.mxu0 0.0
        %3360 = vmatprep.subr.mxu0 0.0
        %3361 = vmatpush1.msra.mxu0 0.0
        %3362 = vmatprep.subr.mxu0 0.0
        %3363 = vmatpush1.msra.mxu0 0.0
        %3364 = vmatprep.subr.mxu0 0.0
        %3365 = vmatpush1.msra.mxu0 0.0
        %3366 = vmatprep.subr.mxu0 0.0
        %3367 = vmatpush1.msra.mxu0 0.0
        %3368 = vmatprep.subr.mxu0 0.0
        %3369 = vmatpush1.msra.mxu0 0.0
        %3370 = vmatprep.subr.mxu0 0.0
        %3371 = vmatpush1.msra.mxu0 0.0
        %3372 = vmatprep.subr.mxu0 0.0
        %3373 = vmatpush1.msra.mxu0 0.0
        %3374 = vmatprep.subr.mxu0 0.0
        %3375 = vmatpush1.msra.mxu0 0.0
        %3376 = vmatprep.subr.mxu0 0.0
        %3377 = vmatpush1.msra.mxu0 0.0
        %3378 = vmatprep.subr.mxu0 0.0
        %3379 = vmatpush1.msra.mxu0 0.0
        %3380 = vmatprep.subr.mxu0 0.0
        %3381 = vmatpush1.msra.mxu0 0.0
        %3382 = vmatprep.subr.mxu0 0.0
        %3383 = vmatpush1.msra.mxu0 0.0
        %3384 = vmatprep.subr.mxu0 0.0
        %3385 = vmatpush1.msra.mxu0 0.0
        %3386 = vmatprep.subr.mxu0 0.0
        %3387 = vmatpush1.msra.mxu0 0.0
        %3388 = vmatprep.mubr.f32.mxu0 0.0
        %3389 = vmatmul.mubr.f32.gmra.mrb[0].mxu0 %v3322
        %v3390 = vpop.f32.mrb[0].mxu0
        %v3391 = vadd.f32 0.0, %v3390
        %v3392 = vpop.f32.mrb[0].mxu0
        %3393 = vdwg.mxu0
        %s3394 = scalar_lea.vmem %s752, 24
        %v3395 = vld [vmem:[%s3394] sm:$0xff]
        %v3397 = vsel %vm1067, %v3231, 0
        %v3400 = vsel %vm1067, %v3391, 0
        %3402 = vmatprep.subr.mxu0 0.0
        %3403 = vmatpush1.msra.mxu0 %v3395
        %3404 = vmatprep.subr.mxu0 0.0
        %3405 = vmatpush1.msra.mxu0 0.0
        %3406 = vmatprep.subr.mxu0 0.0
        %3407 = vmatpush1.msra.mxu0 0.0
        %3408 = vmatprep.subr.mxu0 0.0
        %3409 = vmatpush1.msra.mxu0 0.0
        %3410 = vmatprep.subr.mxu0 0.0
        %3411 = vmatpush1.msra.mxu0 0.0
        %3412 = vmatprep.subr.mxu0 0.0
        %3413 = vmatpush1.msra.mxu0 0.0
        %3414 = vmatprep.subr.mxu0 0.0
        %3415 = vmatpush1.msra.mxu0 0.0
        %3416 = vmatprep.subr.mxu0 0.0
        %3417 = vmatpush1.msra.mxu0 0.0
        %3418 = vmatprep.subr.mxu0 0.0
        %3419 = vmatpush1.msra.mxu0 0.0
        %3420 = vmatprep.subr.mxu0 0.0
        %3421 = vmatpush1.msra.mxu0 0.0
        %3422 = vmatprep.subr.mxu0 0.0
        %3423 = vmatpush1.msra.mxu0 0.0
        %3424 = vmatprep.subr.mxu0 0.0
        %3425 = vmatpush1.msra.mxu0 0.0
        %3426 = vmatprep.subr.mxu0 0.0
        %3427 = vmatpush1.msra.mxu0 0.0
        %3428 = vmatprep.subr.mxu0 0.0
        %3429 = vmatpush1.msra.mxu0 0.0
        %3430 = vmatprep.subr.mxu0 0.0
        %3431 = vmatpush1.msra.mxu0 0.0
        %3432 = vmatprep.subr.mxu0 0.0
        %3433 = vmatpush1.msra.mxu0 0.0
        %3434 = vmatprep.subr.mxu0 0.0
        %3435 = vmatpush1.msra.mxu0 0.0
        %3436 = vmatprep.subr.mxu0 0.0
        %3437 = vmatpush1.msra.mxu0 0.0
        %3438 = vmatprep.subr.mxu0 0.0
        %3439 = vmatpush1.msra.mxu0 0.0
        %3440 = vmatprep.subr.mxu0 0.0
        %3441 = vmatpush1.msra.mxu0 0.0
        %3442 = vmatprep.subr.mxu0 0.0
        %3443 = vmatpush1.msra.mxu0 0.0
        %3444 = vmatprep.subr.mxu0 0.0
        %3445 = vmatpush1.msra.mxu0 0.0
        %3446 = vmatprep.subr.mxu0 0.0
        %3447 = vmatpush1.msra.mxu0 0.0
        %3448 = vmatprep.subr.mxu0 0.0
        %3449 = vmatpush1.msra.mxu0 0.0
        %3450 = vmatprep.subr.mxu0 0.0
        %3451 = vmatpush1.msra.mxu0 0.0
        %3452 = vmatprep.subr.mxu0 0.0
        %3453 = vmatpush1.msra.mxu0 0.0
        %3454 = vmatprep.subr.mxu0 0.0
        %3455 = vmatpush1.msra.mxu0 0.0
        %3456 = vmatprep.subr.mxu0 0.0
        %3457 = vmatpush1.msra.mxu0 0.0
        %3458 = vmatprep.subr.mxu0 0.0
        %3459 = vmatpush1.msra.mxu0 0.0
        %3460 = vmatprep.subr.mxu0 0.0
        %3461 = vmatpush1.msra.mxu0 0.0
        %3462 = vmatprep.subr.mxu0 0.0
        %3463 = vmatpush1.msra.mxu0 0.0
        %3464 = vmatprep.subr.mxu0 0.0
        %3465 = vmatpush1.msra.mxu0 0.0
        %3466 = vmatprep.mubr.f32.mxu0 0.0
        %3467 = vmatmul.mubr.f32.gmra.mrb[0].mxu0 %v3397
        %v3468 = vpop.f32.mrb[0].mxu0
        %v3469 = vadd.f32 0.0, %v3468
        %v3470 = vpop.f32.mrb[0].mxu0
        %3471 = vmatprep.mubr.f32.mxu0 0.0
        %3472 = vmatmul.mubr.f32.gmra.mrb[0].mxu0 %v3400
        %v3473 = vpop.f32.mrb[0].mxu0
        %v3474 = vadd.f32 0.0, %v3473
        %v3475 = vpop.f32.mrb[0].mxu0
        %3476 = vdwg.mxu0
        %v3477 = vadd.f32 %v2808, %v3469
        %v3478 = vadd.f32 %v2809, %v3474
        %v3479 = vadd.f32 %v793, %v3477
        %v3480 = vadd.f32 %v794, %v3478
        %v3481 = vld [vmem:[%s758] sm:$0x1]
        %v3482 = vld [vmem:[%s761] sm:$0x1]
        %v3483 = vsel %vm813, %v3479, 0.0
        %3484 = vadd.xlane.f32.xlu0 %v3483
        %v3485 = vpop.xlane.xlu0 %3484
        %v3486 = vsel %vm813, %v3480, 0.0
        %3487 = vadd.xlane.f32.xlu0 %v3486
        %v3488 = vpop.xlane.xlu0 %3487
        %v3489 = vrcp.pop 32.0
        %v3490 = vmul.f32 %v3485, %v3489
        %v3491 = vmul.f32 %v3488, %v3489
        %v3492 = vsub.f32 %v3479, %v3490
        %v3493 = vsub.f32 %v3480, %v3491
        %v3494 = vmul.f32 %v3492, %v3492
        %v3495 = vmul.f32 %v3493, %v3493
        %v3496 = vsel %vm813, %v3494, 0.0
        %3497 = vadd.xlane.f32.xlu0 %v3496
        %v3498 = vpop.xlane.xlu0 %3497
        %v3499 = vsel %vm813, %v3495, 0.0
        %3500 = vadd.xlane.f32.xlu0 %v3499
        %v3501 = vpop.xlane.xlu0 %3500
        %v3502 = vmul.f32 %v3498, %v3489
        %v3503 = vmul.f32 %v3501, %v3489
        %v3504 = vadd.f32 %v3502, 1e-05
        %v3505 = vadd.f32 %v3503, 1e-05
        %v3506 = vrsqrt.pop %v3504
        %v3507 = vrsqrt.pop %v3505
        %v3508 = vmul.f32 %v3492, %v3506
        %v3509 = vmul.f32 %v3493, %v3507
        %v3511 = vlaneseq
        %v3512 = vshrl.u32 %v3511, 7
        %v3513 = vsub.s32 0, %v3512
        %v3514 = vrot.slane %v3481, %v3513
        %v3516 = vmul.f32 %v3508, %v3514
        %v3517 = vmul.f32 %v3509, %v3514
        %v3519 = vlaneseq
        %v3520 = vshrl.u32 %v3519, 7
        %v3521 = vsub.s32 0, %v3520
        %v3522 = vrot.slane %v3482, %v3521
        %v3524 = vadd.f32 %v3516, %v3522
        %v3525 = vadd.f32 %v3517, %v3522
        %v3526 = vld [vmem:[%s772] sm:$0xff]
        %v3527 = vld [vmem:[%s772 + $0x8] sm:$0xff]
        %v3528 = vld [vmem:[%s772 + $0x10] sm:$0xff]
        %v3529 = vld [vmem:[%s772 + $0x18] sm:$0xff]
        %v3530 = vld [vmem:[%s775] sm:$0x1]
        %v3532 = vlaneseq
        %v3533 = vshrl.u32 %v3532, 7
        %v3534 = vsub.s32 0, %v3533
        %v3535 = vrot.slane %v3530, %v3534
        %v3538 = vsel %vm813, %v3524, 0
        %v3541 = vsel %vm813, %v3525, 0
        %3543 = vmatprep.subr.mxu0 0.0
        %3544 = vmatpush1.msra.mxu0 %v3526
        %3545 = vmatprep.subr.mxu0 0.0
        %3546 = vmatpush1.msra.mxu0 %v3527
        %3547 = vmatprep.subr.mxu0 0.0
        %3548 = vmatpush1.msra.mxu0 %v3528
        %3549 = vmatprep.subr.mxu0 0.0
        %3550 = vmatpush1.msra.mxu0 %v3529
        %3551 = vmatprep.subr.mxu0 0.0
        %3552 = vmatpush1.msra.mxu0 0.0
        %3553 = vmatprep.subr.mxu0 0.0
        %3554 = vmatpush1.msra.mxu0 0.0
        %3555 = vmatprep.subr.mxu0 0.0
        %3556 = vmatpush1.msra.mxu0 0.0
        %3557 = vmatprep.subr.mxu0 0.0
        %3558 = vmatpush1.msra.mxu0 0.0
        %3559 = vmatprep.subr.mxu0 0.0
        %3560 = vmatpush1.msra.mxu0 0.0
        %3561 = vmatprep.subr.mxu0 0.0
        %3562 = vmatpush1.msra.mxu0 0.0
        %3563 = vmatprep.subr.mxu0 0.0
        %3564 = vmatpush1.msra.mxu0 0.0
        %3565 = vmatprep.subr.mxu0 0.0
        %3566 = vmatpush1.msra.mxu0 0.0
        %3567 = vmatprep.subr.mxu0 0.0
        %3568 = vmatpush1.msra.mxu0 0.0
        %3569 = vmatprep.subr.mxu0 0.0
        %3570 = vmatpush1.msra.mxu0 0.0
        %3571 = vmatprep.subr.mxu0 0.0
        %3572 = vmatpush1.msra.mxu0 0.0
        %3573 = vmatprep.subr.mxu0 0.0
        %3574 = vmatpush1.msra.mxu0 0.0
        %3575 = vmatprep.subr.mxu0 0.0
        %3576 = vmatpush1.msra.mxu0 0.0
        %3577 = vmatprep.subr.mxu0 0.0
        %3578 = vmatpush1.msra.mxu0 0.0
        %3579 = vmatprep.subr.mxu0 0.0
        %3580 = vmatpush1.msra.mxu0 0.0
        %3581 = vmatprep.subr.mxu0 0.0
        %3582 = vmatpush1.msra.mxu0 0.0
        %3583 = vmatprep.subr.mxu0 0.0
        %3584 = vmatpush1.msra.mxu0 0.0
        %3585 = vmatprep.subr.mxu0 0.0
        %3586 = vmatpush1.msra.mxu0 0.0
        %3587 = vmatprep.subr.mxu0 0.0
        %3588 = vmatpush1.msra.mxu0 0.0
        %3589 = vmatprep.subr.mxu0 0.0
        %3590 = vmatpush1.msra.mxu0 0.0
        %3591 = vmatprep.subr.mxu0 0.0
        %3592 = vmatpush1.msra.mxu0 0.0
        %3593 = vmatprep.subr.mxu0 0.0
        %3594 = vmatpush1.msra.mxu0 0.0
        %3595 = vmatprep.subr.mxu0 0.0
        %3596 = vmatpush1.msra.mxu0 0.0
        %3597 = vmatprep.subr.mxu0 0.0
        %3598 = vmatpush1.msra.mxu0 0.0
        %3599 = vmatprep.subr.mxu0 0.0
        %3600 = vmatpush1.msra.mxu0 0.0
        %3601 = vmatprep.subr.mxu0 0.0
        %3602 = vmatpush1.msra.mxu0 0.0
        %3603 = vmatprep.subr.mxu0 0.0
        %3604 = vmatpush1.msra.mxu0 0.0
        %3605 = vmatprep.subr.mxu0 0.0
        %3606 = vmatpush1.msra.mxu0 0.0
        %3607 = vmatprep.mubr.f32.mxu0 0.0
        %3608 = vmatmul.mubr.f32.gmra.mrb[0].mxu0 %v3538
        %v3609 = vpop.f32.mrb[0].mxu0
        %v3610 = vadd.f32 %v3535, %v3609
        %v3611 = vpop.f32.mrb[0].mxu0
        %3612 = vmatprep.mubr.f32.mxu0 0.0
        %3613 = vmatmul.mubr.f32.gmra.mrb[0].mxu0 %v3541
        %v3614 = vpop.f32.mrb[0].mxu0
        %v3615 = vadd.f32 %v3535, %v3614
        %v3616 = vpop.f32.mrb[0].mxu0
        %3617 = vdwg.mxu0
        %v3618 = vmax.f32 %v3610, 0.0
        %v3619 = vmax.f32 %v3615, 0.0
        %v3620 = vld [vmem:[%s780] sm:$0xff]
        %v3621 = vld [vmem:[%s780 + $0x8] sm:$0xff]
        %v3622 = vld [vmem:[%s780 + $0x10] sm:$0xff]
        %v3623 = vld [vmem:[%s780 + $0x18] sm:$0xff]
        %v3624 = vld [vmem:[%s780 + $0x20] sm:$0xff]
        %v3625 = vld [vmem:[%s780 + $0x28] sm:$0xff]
        %v3626 = vld [vmem:[%s780 + $0x30] sm:$0xff]
        %v3627 = vld [vmem:[%s780 + $0x38] sm:$0xff]
        %v3628 = vld [vmem:[%s783] sm:$0x1]
        %v3630 = vlaneseq
        %v3631 = vshrl.u32 %v3630, 7
        %v3632 = vsub.s32 0, %v3631
        %v3633 = vrot.slane %v3628, %v3632
        %vm3635 = vcmask 523264
        %v3637 = vsel %vm3635, %v3618, 0
        %v3640 = vsel %vm3635, %v3619, 0
        %3642 = vmatprep.subr.mxu0 0.0
        %3643 = vmatpush1.msra.mxu0 %v3620
        %3644 = vmatprep.subr.mxu0 0.0
        %3645 = vmatpush1.msra.mxu0 %v3621
        %3646 = vmatprep.subr.mxu0 0.0
        %3647 = vmatpush1.msra.mxu0 %v3622
        %3648 = vmatprep.subr.mxu0 0.0
        %3649 = vmatpush1.msra.mxu0 %v3623
        %3650 = vmatprep.subr.mxu0 0.0
        %3651 = vmatpush1.msra.mxu0 %v3624
        %3652 = vmatprep.subr.mxu0 0.0
        %3653 = vmatpush1.msra.mxu0 %v3625
        %3654 = vmatprep.subr.mxu0 0.0
        %3655 = vmatpush1.msra.mxu0 %v3626
        %3656 = vmatprep.subr.mxu0 0.0
        %3657 = vmatpush1.msra.mxu0 %v3627
        %3658 = vmatprep.subr.mxu0 0.0
        %3659 = vmatpush1.msra.mxu0 0.0
        %3660 = vmatprep.subr.mxu0 0.0
        %3661 = vmatpush1.msra.mxu0 0.0
        %3662 = vmatprep.subr.mxu0 0.0
        %3663 = vmatpush1.msra.mxu0 0.0
        %3664 = vmatprep.subr.mxu0 0.0
        %3665 = vmatpush1.msra.mxu0 0.0
        %3666 = vmatprep.subr.mxu0 0.0
        %3667 = vmatpush1.msra.mxu0 0.0
        %3668 = vmatprep.subr.mxu0 0.0
        %3669 = vmatpush1.msra.mxu0 0.0
        %3670 = vmatprep.subr.mxu0 0.0
        %3671 = vmatpush1.msra.mxu0 0.0
        %3672 = vmatprep.subr.mxu0 0.0
        %3673 = vmatpush1.msra.mxu0 0.0
        %3674 = vmatprep.subr.mxu0 0.0
        %3675 = vmatpush1.msra.mxu0 0.0
        %3676 = vmatprep.subr.mxu0 0.0
        %3677 = vmatpush1.msra.mxu0 0.0
        %3678 = vmatprep.subr.mxu0 0.0
        %3679 = vmatpush1.msra.mxu0 0.0
        %3680 = vmatprep.subr.mxu0 0.0
        %3681 = vmatpush1.msra.mxu0 0.0
        %3682 = vmatprep.subr.mxu0 0.0
        %3683 = vmatpush1.msra.mxu0 0.0
        %3684 = vmatprep.subr.mxu0 0.0
        %3685 = vmatpush1.msra.mxu0 0.0
        %3686 = vmatprep.subr.mxu0 0.0
        %3687 = vmatpush1.msra.mxu0 0.0
        %3688 = vmatprep.subr.mxu0 0.0
        %3689 = vmatpush1.msra.mxu0 0.0
        %3690 = vmatprep.subr.mxu0 0.0
        %3691 = vmatpush1.msra.mxu0 0.0
        %3692 = vmatprep.subr.mxu0 0.0
        %3693 = vmatpush1.msra.mxu0 0.0
        %3694 = vmatprep.subr.mxu0 0.0
        %3695 = vmatpush1.msra.mxu0 0.0
        %3696 = vmatprep.subr.mxu0 0.0
        %3697 = vmatpush1.msra.mxu0 0.0
        %3698 = vmatprep.subr.mxu0 0.0
        %3699 = vmatpush1.msra.mxu0 0.0
        %3700 = vmatprep.subr.mxu0 0.0
        %3701 = vmatpush1.msra.mxu0 0.0
        %3702 = vmatprep.subr.mxu0 0.0
        %3703 = vmatpush1.msra.mxu0 0.0
        %3704 = vmatprep.subr.mxu0 0.0
        %3705 = vmatpush1.msra.mxu0 0.0
        %3706 = vmatprep.mubr.f32.mxu0 0.0
        %3707 = vmatmul.mubr.f32.gmra.mrb[0].mxu0 %v3637
        %v3708 = vpop.f32.mrb[0].mxu0
        %v3709 = vadd.f32 %v3633, %v3708
        %v3710 = vpop.f32.mrb[0].mxu0
        %3711 = vmatprep.mubr.f32.mxu0 0.0
        %3712 = vmatmul.mubr.f32.gmra.mrb[0].mxu0 %v3640
        %v3713 = vpop.f32.mrb[0].mxu0
        %v3714 = vadd.f32 %v3633, %v3713
        %v3715 = vpop.f32.mrb[0].mxu0
        %3716 = vdwg.mxu0
        %v3717 = vadd.f32 %v3524, %v3709
        %v3718 = vadd.f32 %v3525, %v3714
        %v3719 = vld [vmem:[%s764] sm:$0x1]
        %v3720 = vld [vmem:[%s767] sm:$0x1]
        %v3721 = vsel %vm813, %v3717, 0.0
        %3722 = vadd.xlane.f32.xlu0 %v3721
        %v3723 = vpop.xlane.xlu0 %3722
        %v3724 = vsel %vm813, %v3718, 0.0
        %3725 = vadd.xlane.f32.xlu0 %v3724
        %v3726 = vpop.xlane.xlu0 %3725
        %v3727 = vmul.f32 %v3723, %v3489
        %v3728 = vmul.f32 %v3726, %v3489
        %v3729 = vsub.f32 %v3717, %v3727
        %v3730 = vsub.f32 %v3718, %v3728
        %v3731 = vmul.f32 %v3729, %v3729
        %v3732 = vmul.f32 %v3730, %v3730
        %v3733 = vsel %vm813, %v3731, 0.0
        %3734 = vadd.xlane.f32.xlu0 %v3733
        %v3735 = vpop.xlane.xlu0 %3734
        %v3736 = vsel %vm813, %v3732, 0.0
        %3737 = vadd.xlane.f32.xlu0 %v3736
        %v3738 = vpop.xlane.xlu0 %3737
        %v3739 = vmul.f32 %v3735, %v3489
        %v3740 = vmul.f32 %v3738, %v3489
        %v3741 = vadd.f32 %v3739, 1e-05
        %v3742 = vadd.f32 %v3740, 1e-05
        %v3743 = vrsqrt.pop %v3741
        %v3744 = vrsqrt.pop %v3742
        %v3745 = vmul.f32 %v3729, %v3743
        %v3746 = vmul.f32 %v3730, %v3744
        %v3748 = vlaneseq
        %v3749 = vshrl.u32 %v3748, 7
        %v3750 = vsub.s32 0, %v3749
        %v3751 = vrot.slane %v3719, %v3750
        %v3753 = vmul.f32 %v3745, %v3751
        %v3754 = vmul.f32 %v3746, %v3751
        %v3756 = vlaneseq
        %v3757 = vshrl.u32 %v3756, 7
        %v3758 = vsub.s32 0, %v3757
        %v3759 = vrot.slane %v3720, %v3758
        %v3761 = vadd.f32 %v3753, %v3759
        %v3762 = vadd.f32 %v3754, %v3759
        %3763 = vst.msk [vmem:[#allocation2] sm:$0xff] %vm813, %v3761
        %3764 = vst.msk [vmem:[#allocation2 + $0x8] sm:$0xff] %vm813, %v3762
        %p3765 = scmp.eq.s32.totalorder %s29, 1
        // Predicated region
        $region93: #{tpu_custom_call.1} parent=87 // pred_check
          %p3766 = pneg %p3765
        $region94: #{tpu_custom_call.1} parent=87 // pred_check_branch
          %3768 = sbr.rel (%p3766) target = $region96
        $region95: #{tpu_custom_call.1} parent=87 // pred_region
          %3769 = vst.msk [vmem:[#allocation3] sm:$0xff] %vm813, %v3761
          %3770 = vst.msk [vmem:[#allocation3 + $0x8] sm:$0xff] %vm813, %v3762
        $region96: #{tpu_custom_call.1} parent=87 // pred_fallthru
          _
        // Predicated region
        $region97: #{tpu_custom_call.1} parent=87 // pred_check
          %p3771 = pneg %p479
        $region98: #{tpu_custom_call.1} parent=87 // pred_check_branch
          %3773 = sbr.rel (%p3771) target = $region100
        $region99: #{tpu_custom_call.1} parent=87 // pred_region
          %s3775 = ssub.s32 256, 256
          %3776 = vsyncadd [#allocation4], %s3775
          %s3777 = sshll.u32 [#allocation3], 4
          %s3778 = int_to_ptr.vmem [resolvable:$true] %s3777
          %3783 = dma.vmem_to_hbm [thread:$0]  %s3778, 256, %s17, [#allocation4], 128, 128, 8
        $region100: #{tpu_custom_call.1} parent=87 // pred_fallthru
          _
        // Predicated region
        $region101: #{tpu_custom_call.1} parent=87 // pred_check
          %p3784 = pneg %p479
        $region102: #{tpu_custom_call.1} parent=87 // pred_check_branch
          %3786 = sbr.rel (%p3784) target = $region104
        $region103: #{tpu_custom_call.1} parent=87 // pred_region
          %3787 = dma.done [#allocation4], 256
        $region104: #{tpu_custom_call.1} parent=87 // pred_fallthru
          _
      $region88: #{tpu_custom_call.1} parent=5 // pred_fallthru
        _
      %p3788 = scmp.le.s32.totalorder 2, %s24
      // Predicated region
      $region105: #{tpu_custom_call.1} parent=5 // pred_check
        %p3789 = pneg %p3788
      $region106: #{tpu_custom_call.1} parent=5 // pred_check_branch
        %3791 = sbr.rel (%p3789) target = $region108
      $region107: #{tpu_custom_call.1} parent=5 // pred_region
        %s3792 = ssub.s32 %s24, 2
      $region108: #{tpu_custom_call.1} parent=5 // pred_fallthru
        _
    $region6: #{tpu_custom_call.1} parent=1 // loop_footer
      %s28 = sadd.s32 1, %s24
    $region7: #{tpu_custom_call.1} parent=1 // loop_footer_branch
      %23 = sbr.rel target = $region3
    $region8: #{tpu_custom_call.1} parent=1 // loop_exit
      _
    %3793 = vsyncpa [#allocation4], 1
    %s3794 = scalar_lea.sflag [#allocation4], 1
    %3795 = vsyncpa %s3794, 1

</llo_original>
